<compile_context>
chip_gen: v7x
topology: tpu7x:2x2x1
jax: 0.10.0
libtpu: 0.0.40
codegen_flags: <defaults>
</compile_context>

<pallas_src>
import functools

import numpy as np
import jax
import jax.numpy as jnp
from jax.experimental import pallas as pl
from jax.experimental.pallas import tpu as pltpu


# --------------------------- fused Fusion kernel ---------------------------

def _fusion_kernel(*refs, NB, H, W, C, has_prev, upsample, compute_dtype):
    idx = 0
    x_ref = refs[idx]; idx += 1                       # (NB, H, W, C) f32
    prev_ref = None
    if has_prev:
        prev_ref = refs[idx]; idx += 1                # (NB, H, W, C) f32
    w_ref = refs[idx]; idx += 1                       # (4, 9C, C) compute_dtype
    b_ref = refs[idx]; idx += 1                       # (4, C) f32
    up_ref = None
    if upsample:
        up_ref = refs[idx]; idx += 1                  # (2H*2W, H*W) f32
    out_ref = refs[idx]

    x = x_ref[...]
    b_all = b_ref[...]

    def pad_hw(a):
        # zero pad H and W by 1 on each side, entirely in VMEM
        zw = jnp.zeros((NB, H, 1, C), jnp.float32)
        a = jnp.concatenate([zw, a, zw], axis=2)              # (NB, H, W+2, C)
        zh = jnp.zeros((NB, 1, W + 2, C), jnp.float32)
        return jnp.concatenate([zh, a, zh], axis=1)           # (NB, H+2, W+2, C)

    def conv3x3(a, i):
        """relu -> 3x3 conv (pad=1, bias) with weight slot i, as one big-K matmul."""
        a = jnp.maximum(a, 0.0)
        ap = pad_hw(a)
        # im2col: concat the 9 taps along channels -> (NB*H*W, 9C), one MXU matmul
        cols = [ap[:, dy:dy + H, dx:dx + W, :] for dy in range(3) for dx in range(3)]
        slab = jnp.concatenate(cols, axis=-1).reshape(NB * H * W, 9 * C)
        y = jnp.dot(slab.astype(compute_dtype), w_ref[i],
                    preferred_element_type=jnp.float32)
        y = y + b_all[i:i + 1, :]
        return y.reshape(NB, H, W, C)

    # ResidualConvUnit 1, with previous_stage folded into the residual add
    s1 = conv3x3(conv3x3(x, 0), 1) + x
    if has_prev:
        s1 = s1 + prev_ref[...]
    # ResidualConvUnit 2
    s2 = conv3x3(conv3x3(s1, 2), 3) + s1

    if upsample:
        Bm = up_ref[...]                                      # (2H*2W, H*W) f32
        for i in range(NB):
            up = jnp.dot(Bm, s2[i].reshape(H * W, C),
                         preferred_element_type=jnp.float32)
            out_ref[i] = up.reshape(2 * H, 2 * W, C).astype(out_ref.dtype)
    else:
        out_ref[...] = s2.astype(out_ref.dtype)


# ------------------------ bilinear (align_corners) ops ------------------------

def _interp_matrix(in_size, out_size):
    """Row-stochastic matrix implementing 1-D linear interp, align_corners=True."""
    A = np.zeros((out_size, in_size), np.float32)
    scale = 0.0 if out_size == 1 else (in_size - 1) / (out_size - 1)
    for i in range(out_size):
        s = i * scale
        i0 = min(int(np.floor(s)), in_size - 1)
        i1 = min(i0 + 1, in_size - 1)
        f = s - i0
        A[i, i0] += 1.0 - f
        A[i, i1] += f
    return A


# ------------------------------- public wrapper -------------------------------

def fusion_forward(params, x_nchw, previous_stage=None, *,
                   compute_dtype=jnp.bfloat16, images_per_block=1):
    x = jnp.transpose(x_nchw, (0, 2, 3, 1)).astype(jnp.float32)   # NCHW -> NHWC (glue)
    N, H, W, C = x.shape
    NB = images_per_block
    assert N % NB == 0, "images_per_block must divide batch"
    has_prev = previous_stage is not None
    prev = (jnp.transpose(previous_stage, (0, 2, 3, 1)).astype(jnp.float32)
            if has_prev else None)   # previous_stage=None means zeros: adding zero is a no-op

    def flat(p, k):
        return params[p][k].reshape(9 * C, C)       # HWIO (3,3,C,C) -> (9C, C)
    w_all = jnp.stack([flat("rcu1", "w1"), flat("rcu1", "w2"),
                       flat("rcu2", "w1"), flat("rcu2", "w2")]).astype(compute_dtype)
    b_all = jnp.stack([params["rcu1"]["b1"], params["rcu1"]["b2"],
                       params["rcu2"]["b1"], params["rcu2"]["b2"]]).astype(jnp.float32)

    upsample = (W != 192)    # PyTorch checks NCHW shape[-1], i.e. the width
    Hout, Wout = ((2 * H, 2 * W) if upsample else (H, W))

    args = [x]
    in_specs = [pl.BlockSpec((NB, H, W, C), lambda n: (n, 0, 0, 0))]
    if has_prev:
        args.append(prev)
        in_specs.append(pl.BlockSpec((NB, H, W, C), lambda n: (n, 0, 0, 0)))
    args += [w_all, b_all]
    in_specs += [pl.BlockSpec((4, 9 * C, C), lambda n: (0, 0, 0)),
                 pl.BlockSpec((4, C), lambda n: (0, 0))]
    if upsample:
        Bm = jnp.asarray(np.kron(_interp_matrix(H, 2 * H), _interp_matrix(W, 2 * W)))
        args.append(Bm)
        in_specs.append(pl.BlockSpec((4 * H * W, H * W), lambda n: (0, 0)))

    kernel = functools.partial(_fusion_kernel, NB=NB, H=H, W=W, C=C,
                               has_prev=has_prev, upsample=upsample,
                               compute_dtype=compute_dtype)
    out_nhwc = pl.pallas_call(
        kernel,
        out_shape=jax.ShapeDtypeStruct((N, Hout, Wout, C), jnp.float32),
        grid=(N // NB,),
        in_specs=in_specs,
        out_specs=pl.BlockSpec((NB, Hout, Wout, C), lambda n: (n, 0, 0, 0)),
        compiler_params=pltpu.CompilerParams(dimension_semantics=("parallel",)),
    )(*args)
    return jnp.transpose(out_nhwc, (0, 3, 1, 2))                  # NHWC -> NCHW (glue)


def init_params(key, features):
    ks = jax.random.split(key, 8)
    std = 1.0 / np.sqrt(9 * features)

    def conv_p(kw, kb):
        w = std * jax.random.normal(kw, (3, 3, features, features), jnp.float32)
        b = 0.5 * jax.random.normal(kb, (features,), jnp.float32)
        return w, b

    w1a, b1a = conv_p(ks[0], ks[1])
    w1b, b1b = conv_p(ks[2], ks[3])
    w2a, b2a = conv_p(ks[4], ks[5])
    w2b, b2b = conv_p(ks[6], ks[7])
    return {"rcu1": {"w1": w1a, "b1": b1a, "w2": w1b, "b2": b1b},
            "rcu2": {"w1": w2a, "b1": b2a, "w2": w2b, "b2": b2b}}


# ----------------------------- plain-JAX reference -----------------------------

def _ref_conv3x3(x, w, b):
    y = jax.lax.conv_general_dilated(
        x, w, window_strides=(1, 1), padding="SAME",
        dimension_numbers=("NHWC", "HWIO", "NHWC"),
        precision=jax.lax.Precision.HIGHEST)
    return y + b


def _ref_rcu(x, p):
    out = jnp.maximum(x, 0.0)
    out = _ref_conv3x3(out, p["w1"], p["b1"])
    out = jnp.maximum(out, 0.0)
    out = _ref_conv3x3(out, p["w2"], p["b2"])
    return out + x


def _ref_fusion(params, x_nchw, previous_stage=None):
    x = jnp.transpose(x_nchw, (0, 2, 3, 1)).astype(jnp.float32)
    prev = (jnp.zeros_like(x) if previous_stage is None
            else jnp.transpose(previous_stage, (0, 2, 3, 1)).astype(jnp.float32))
    s1 = _ref_rcu(x, params["rcu1"]) + prev
    s2 = _ref_rcu(s1, params["rcu2"])
    if s2.shape[2] != 192:
        _, H, W, _ = s2.shape
        A_h = jnp.asarray(_interp_matrix(H, 2 * H))
        A_w = jnp.asarray(_interp_matrix(W, 2 * W))
        s2 = jnp.einsum("ih,jw,nhwc->nijc", A_h, A_w, s2,
                        precision=jax.lax.Precision.HIGHEST)
    return jnp.transpose(s2, (0, 3, 1, 2))


# ------------------------------------- main -------------------------------------

if __name__ == "__main__":
    key = jax.random.PRNGKey(0)
    kp, kx, kprev = jax.random.split(key, 3)

    features = 128          # resample_dim
    N, H, W = 2, 8, 8       # W != 192 so the upsample branch runs

    params = init_params(kp, features)
    x = jax.random.normal(kx, (N, features, H, W), jnp.float32)      # NCHW like PyTorch
    prev = jax.random.normal(kprev, (N, features, H, W), jnp.float32)

    ref = _ref_fusion(params, x, prev)

    # Fast path: bf16 MXU matmuls (f32 accumulation + f32 residual path)
    out = jax.block_until_ready(fusion_forward(params, x, prev))
    assert out.shape == (N, features, 2 * H, 2 * W), out.shape
    err = float(jnp.max(jnp.abs(out - ref)))
    assert err < 1e-1, f"bf16 path max abs err vs reference: {err}"

    # Full f32 path, whole batch per grid step (M = N*H*W): matches tightly
    out32 = jax.block_until_ready(
        fusion_forward(params, x, prev, compute_dtype=jnp.float32, images_per_block=N))
    err32 = float(jnp.max(jnp.abs(out32 - ref)))
    assert err32 < 5e-2, f"f32 path max abs err vs reference: {err32}"

    # previous_stage=None (zeros) path
    out_none = jax.block_until_ready(fusion_forward(params, x, None))
    ref_none = _ref_fusion(params, x, None)
    err_none = float(jnp.max(jnp.abs(out_none - ref_none)))
    assert err_none < 1e-1, f"prev=None path max abs err: {err_none}"

    print("KERNEL_OK")
</pallas_src>

<mosaic_0001>
module attributes {stable_mosaic.version = 11 : i64} {
  func.func @_fusion_kernel(%arg0: i32, %arg1: memref<1x8x8x128xf32, #tpu.memory_space<vmem>>, %arg2: memref<1x8x8x128xf32, #tpu.memory_space<vmem>>, %arg3: memref<4x1152x128xbf16, #tpu.memory_space<vmem>>, %arg4: memref<4x128xf32, #tpu.memory_space<vmem>>, %arg5: memref<256x64xf32, #tpu.memory_space<vmem>>, %arg6: memref<1x16x16x128xf32, #tpu.memory_space<vmem>>) attributes {dimension_semantics = [#tpu.dimension_semantics<parallel>], iteration_bounds = array<i64: 2>, scalar_prefetch = 0 : i64, scratch_operands = 0 : i64, tpu.core_type = #tpu.core_type<tc>, window_params = [{transform_indices = @transform_0, window_bounds = array<i64: 1, 8, 8, 128>}, {transform_indices = @transform_1, window_bounds = array<i64: 1, 8, 8, 128>}, {pipeline_mode = #tpu.pipeline_mode<synchronous>, transform_indices = @transform_2, window_bounds = array<i64: 4, 1152, 128>}, {pipeline_mode = #tpu.pipeline_mode<synchronous>, transform_indices = @transform_3, window_bounds = array<i64: 4, 128>}, {pipeline_mode = #tpu.pipeline_mode<synchronous>, transform_indices = @transform_4, window_bounds = array<i64: 256, 64>}, {transform_indices = @transform_5, window_bounds = array<i64: 1, 16, 16, 128>}]} {
    %c0 = arith.constant 0 : index
    %c0_0 = arith.constant 0 : index
    %c0_1 = arith.constant 0 : index
    %c0_2 = arith.constant 0 : index
    %0 = vector.load %arg1[%c0, %c0_0, %c0_1, %c0_2] : memref<1x8x8x128xf32, #tpu.memory_space<vmem>>, vector<1x8x8x128xf32>
    %c0_3 = arith.constant 0 : index
    %c0_4 = arith.constant 0 : index
    %1 = vector.load %arg4[%c0_3, %c0_4] : memref<4x128xf32, #tpu.memory_space<vmem>>, vector<4x128xf32>
    %cst = arith.constant 0.000000e+00 : f32
    %2 = vector.broadcast %cst : f32 to vector<1x8x8x128xf32>
    %3 = arith.maximumf %0, %2 : vector<1x8x8x128xf32>
    %cst_5 = arith.constant 0.000000e+00 : f32
    %4 = vector.broadcast %cst_5 : f32 to vector<1x8x1x128xf32>
    %5 = tpu.concatenate %4, %3, %4 in 2 : vector<1x8x1x128xf32>, vector<1x8x8x128xf32>, vector<1x8x1x128xf32> -> vector<1x8x10x128xf32>
    %cst_6 = arith.constant 0.000000e+00 : f32
    %6 = vector.broadcast %cst_6 : f32 to vector<1x1x10x128xf32>
    %7 = tpu.concatenate %6, %5, %6 in 1 : vector<1x1x10x128xf32>, vector<1x8x10x128xf32>, vector<1x1x10x128xf32> -> vector<1x10x10x128xf32>
    %8 = vector.extract_strided_slice %7 {offsets = [0, 0, 0, 0], sizes = [1, 8, 8, 128], strides = [1, 1, 1, 1]} : vector<1x10x10x128xf32> to vector<1x8x8x128xf32>
    %9 = vector.extract_strided_slice %7 {offsets = [0, 0, 1, 0], sizes = [1, 8, 8, 128], strides = [1, 1, 1, 1]} : vector<1x10x10x128xf32> to vector<1x8x8x128xf32>
    %10 = vector.extract_strided_slice %7 {offsets = [0, 0, 2, 0], sizes = [1, 8, 8, 128], strides = [1, 1, 1, 1]} : vector<1x10x10x128xf32> to vector<1x8x8x128xf32>
    %11 = vector.extract_strided_slice %7 {offsets = [0, 1, 0, 0], sizes = [1, 8, 8, 128], strides = [1, 1, 1, 1]} : vector<1x10x10x128xf32> to vector<1x8x8x128xf32>
    %12 = vector.extract_strided_slice %7 {offsets = [0, 1, 1, 0], sizes = [1, 8, 8, 128], strides = [1, 1, 1, 1]} : vector<1x10x10x128xf32> to vector<1x8x8x128xf32>
    %13 = vector.extract_strided_slice %7 {offsets = [0, 1, 2, 0], sizes = [1, 8, 8, 128], strides = [1, 1, 1, 1]} : vector<1x10x10x128xf32> to vector<1x8x8x128xf32>
    %14 = vector.extract_strided_slice %7 {offsets = [0, 2, 0, 0], sizes = [1, 8, 8, 128], strides = [1, 1, 1, 1]} : vector<1x10x10x128xf32> to vector<1x8x8x128xf32>
    %15 = vector.extract_strided_slice %7 {offsets = [0, 2, 1, 0], sizes = [1, 8, 8, 128], strides = [1, 1, 1, 1]} : vector<1x10x10x128xf32> to vector<1x8x8x128xf32>
    %16 = vector.extract_strided_slice %7 {offsets = [0, 2, 2, 0], sizes = [1, 8, 8, 128], strides = [1, 1, 1, 1]} : vector<1x10x10x128xf32> to vector<1x8x8x128xf32>
    %17 = tpu.concatenate %8, %9, %10, %11, %12, %13, %14, %15, %16 in 3 : vector<1x8x8x128xf32>, vector<1x8x8x128xf32>, vector<1x8x8x128xf32>, vector<1x8x8x128xf32>, vector<1x8x8x128xf32>, vector<1x8x8x128xf32>, vector<1x8x8x128xf32>, vector<1x8x8x128xf32>, vector<1x8x8x128xf32> -> vector<1x8x8x1152xf32>
    %18 = vector.shape_cast %17 : vector<1x8x8x1152xf32> to vector<64x1152xf32>
    %19 = arith.truncf %18 : vector<64x1152xf32> to vector<64x1152xbf16>
    %c0_7 = arith.constant 0 : index
    %c0_8 = arith.constant 0 : index
    %c0_9 = arith.constant 0 : index
    %20 = vector.load %arg3[%c0_7, %c0_8, %c0_9] : memref<4x1152x128xbf16, #tpu.memory_space<vmem>>, vector<1x1152x128xbf16>
    %21 = vector.shape_cast %20 : vector<1x1152x128xbf16> to vector<1152x128xbf16>
    %cst_10 = arith.constant dense<0.000000e+00> : vector<64x128xf32>
    %22 = tpu.matmul %19, %21, %cst_10 {dimension_numbers = #tpu.dot_dimension_numbers<[1], [0], [0], [1], [0, 0, 1, 1], [], []>} : vector<64x1152xbf16>, vector<1152x128xbf16>, vector<64x128xf32> -> vector<64x128xf32>
    %23 = vector.extract_strided_slice %1 {offsets = [0, 0], sizes = [1, 128], strides = [1, 1]} : vector<4x128xf32> to vector<1x128xf32>
    %24 = vector.broadcast %23 : vector<1x128xf32> to vector<64x128xf32>
    %25 = arith.addf %22, %24 : vector<64x128xf32>
    %26 = vector.shape_cast %25 : vector<64x128xf32> to vector<1x8x8x128xf32>
    %cst_11 = arith.constant 0.000000e+00 : f32
    %27 = vector.broadcast %cst_11 : f32 to vector<1x8x8x128xf32>
    %28 = arith.maximumf %26, %27 : vector<1x8x8x128xf32>
    %cst_12 = arith.constant 0.000000e+00 : f32
    %29 = vector.broadcast %cst_12 : f32 to vector<1x8x1x128xf32>
    %30 = tpu.concatenate %29, %28, %29 in 2 : vector<1x8x1x128xf32>, vector<1x8x8x128xf32>, vector<1x8x1x128xf32> -> vector<1x8x10x128xf32>
    %cst_13 = arith.constant 0.000000e+00 : f32
    %31 = vector.broadcast %cst_13 : f32 to vector<1x1x10x128xf32>
    %32 = tpu.concatenate %31, %30, %31 in 1 : vector<1x1x10x128xf32>, vector<1x8x10x128xf32>, vector<1x1x10x128xf32> -> vector<1x10x10x128xf32>
    %33 = vector.extract_strided_slice %32 {offsets = [0, 0, 0, 0], sizes = [1, 8, 8, 128], strides = [1, 1, 1, 1]} : vector<1x10x10x128xf32> to vector<1x8x8x128xf32>
    %34 = vector.extract_strided_slice %32 {offsets = [0, 0, 1, 0], sizes = [1, 8, 8, 128], strides = [1, 1, 1, 1]} : vector<1x10x10x128xf32> to vector<1x8x8x128xf32>
    %35 = vector.extract_strided_slice %32 {offsets = [0, 0, 2, 0], sizes = [1, 8, 8, 128], strides = [1, 1, 1, 1]} : vector<1x10x10x128xf32> to vector<1x8x8x128xf32>
    %36 = vector.extract_strided_slice %32 {offsets = [0, 1, 0, 0], sizes = [1, 8, 8, 128], strides = [1, 1, 1, 1]} : vector<1x10x10x128xf32> to vector<1x8x8x128xf32>
    %37 = vector.extract_strided_slice %32 {offsets = [0, 1, 1, 0], sizes = [1, 8, 8, 128], strides = [1, 1, 1, 1]} : vector<1x10x10x128xf32> to vector<1x8x8x128xf32>
    %38 = vector.extract_strided_slice %32 {offsets = [0, 1, 2, 0], sizes = [1, 8, 8, 128], strides = [1, 1, 1, 1]} : vector<1x10x10x128xf32> to vector<1x8x8x128xf32>
    %39 = vector.extract_strided_slice %32 {offsets = [0, 2, 0, 0], sizes = [1, 8, 8, 128], strides = [1, 1, 1, 1]} : vector<1x10x10x128xf32> to vector<1x8x8x128xf32>
    %40 = vector.extract_strided_slice %32 {offsets = [0, 2, 1, 0], sizes = [1, 8, 8, 128], strides = [1, 1, 1, 1]} : vector<1x10x10x128xf32> to vector<1x8x8x128xf32>
    %41 = vector.extract_strided_slice %32 {offsets = [0, 2, 2, 0], sizes = [1, 8, 8, 128], strides = [1, 1, 1, 1]} : vector<1x10x10x128xf32> to vector<1x8x8x128xf32>
    %42 = tpu.concatenate %33, %34, %35, %36, %37, %38, %39, %40, %41 in 3 : vector<1x8x8x128xf32>, vector<1x8x8x128xf32>, vector<1x8x8x128xf32>, vector<1x8x8x128xf32>, vector<1x8x8x128xf32>, vector<1x8x8x128xf32>, vector<1x8x8x128xf32>, vector<1x8x8x128xf32>, vector<1x8x8x128xf32> -> vector<1x8x8x1152xf32>
    %43 = vector.shape_cast %42 : vector<1x8x8x1152xf32> to vector<64x1152xf32>
    %44 = arith.truncf %43 : vector<64x1152xf32> to vector<64x1152xbf16>
    %c1 = arith.constant 1 : index
    %c0_14 = arith.constant 0 : index
    %c0_15 = arith.constant 0 : index
    %45 = vector.load %arg3[%c1, %c0_14, %c0_15] : memref<4x1152x128xbf16, #tpu.memory_space<vmem>>, vector<1x1152x128xbf16>
    %46 = vector.shape_cast %45 : vector<1x1152x128xbf16> to vector<1152x128xbf16>
    %cst_16 = arith.constant dense<0.000000e+00> : vector<64x128xf32>
    %47 = tpu.matmul %44, %46, %cst_16 {dimension_numbers = #tpu.dot_dimension_numbers<[1], [0], [0], [1], [0, 0, 1, 1], [], []>} : vector<64x1152xbf16>, vector<1152x128xbf16>, vector<64x128xf32> -> vector<64x128xf32>
    %48 = vector.extract_strided_slice %1 {offsets = [1, 0], sizes = [1, 128], strides = [1, 1]} : vector<4x128xf32> to vector<1x128xf32>
    %49 = vector.broadcast %48 : vector<1x128xf32> to vector<64x128xf32>
    %50 = arith.addf %47, %49 : vector<64x128xf32>
    %51 = vector.shape_cast %50 : vector<64x128xf32> to vector<1x8x8x128xf32>
    %52 = arith.addf %51, %0 : vector<1x8x8x128xf32>
    %c0_17 = arith.constant 0 : index
    %c0_18 = arith.constant 0 : index
    %c0_19 = arith.constant 0 : index
    %c0_20 = arith.constant 0 : index
    %53 = vector.load %arg2[%c0_17, %c0_18, %c0_19, %c0_20] : memref<1x8x8x128xf32, #tpu.memory_space<vmem>>, vector<1x8x8x128xf32>
    %54 = arith.addf %52, %53 : vector<1x8x8x128xf32>
    %cst_21 = arith.constant 0.000000e+00 : f32
    %55 = vector.broadcast %cst_21 : f32 to vector<1x8x8x128xf32>
    %56 = arith.maximumf %54, %55 : vector<1x8x8x128xf32>
    %cst_22 = arith.constant 0.000000e+00 : f32
    %57 = vector.broadcast %cst_22 : f32 to vector<1x8x1x128xf32>
    %58 = tpu.concatenate %57, %56, %57 in 2 : vector<1x8x1x128xf32>, vector<1x8x8x128xf32>, vector<1x8x1x128xf32> -> vector<1x8x10x128xf32>
    %cst_23 = arith.constant 0.000000e+00 : f32
    %59 = vector.broadcast %cst_23 : f32 to vector<1x1x10x128xf32>
    %60 = tpu.concatenate %59, %58, %59 in 1 : vector<1x1x10x128xf32>, vector<1x8x10x128xf32>, vector<1x1x10x128xf32> -> vector<1x10x10x128xf32>
    %61 = vector.extract_strided_slice %60 {offsets = [0, 0, 0, 0], sizes = [1, 8, 8, 128], strides = [1, 1, 1, 1]} : vector<1x10x10x128xf32> to vector<1x8x8x128xf32>
    %62 = vector.extract_strided_slice %60 {offsets = [0, 0, 1, 0], sizes = [1, 8, 8, 128], strides = [1, 1, 1, 1]} : vector<1x10x10x128xf32> to vector<1x8x8x128xf32>
    %63 = vector.extract_strided_slice %60 {offsets = [0, 0, 2, 0], sizes = [1, 8, 8, 128], strides = [1, 1, 1, 1]} : vector<1x10x10x128xf32> to vector<1x8x8x128xf32>
    %64 = vector.extract_strided_slice %60 {offsets = [0, 1, 0, 0], sizes = [1, 8, 8, 128], strides = [1, 1, 1, 1]} : vector<1x10x10x128xf32> to vector<1x8x8x128xf32>
    %65 = vector.extract_strided_slice %60 {offsets = [0, 1, 1, 0], sizes = [1, 8, 8, 128], strides = [1, 1, 1, 1]} : vector<1x10x10x128xf32> to vector<1x8x8x128xf32>
    %66 = vector.extract_strided_slice %60 {offsets = [0, 1, 2, 0], sizes = [1, 8, 8, 128], strides = [1, 1, 1, 1]} : vector<1x10x10x128xf32> to vector<1x8x8x128xf32>
    %67 = vector.extract_strided_slice %60 {offsets = [0, 2, 0, 0], sizes = [1, 8, 8, 128], strides = [1, 1, 1, 1]} : vector<1x10x10x128xf32> to vector<1x8x8x128xf32>
    %68 = vector.extract_strided_slice %60 {offsets = [0, 2, 1, 0], sizes = [1, 8, 8, 128], strides = [1, 1, 1, 1]} : vector<1x10x10x128xf32> to vector<1x8x8x128xf32>
    %69 = vector.extract_strided_slice %60 {offsets = [0, 2, 2, 0], sizes = [1, 8, 8, 128], strides = [1, 1, 1, 1]} : vector<1x10x10x128xf32> to vector<1x8x8x128xf32>
    %70 = tpu.concatenate %61, %62, %63, %64, %65, %66, %67, %68, %69 in 3 : vector<1x8x8x128xf32>, vector<1x8x8x128xf32>, vector<1x8x8x128xf32>, vector<1x8x8x128xf32>, vector<1x8x8x128xf32>, vector<1x8x8x128xf32>, vector<1x8x8x128xf32>, vector<1x8x8x128xf32>, vector<1x8x8x128xf32> -> vector<1x8x8x1152xf32>
    %71 = vector.shape_cast %70 : vector<1x8x8x1152xf32> to vector<64x1152xf32>
    %72 = arith.truncf %71 : vector<64x1152xf32> to vector<64x1152xbf16>
    %c2 = arith.constant 2 : index
    %c0_24 = arith.constant 0 : index
    %c0_25 = arith.constant 0 : index
    %73 = vector.load %arg3[%c2, %c0_24, %c0_25] : memref<4x1152x128xbf16, #tpu.memory_space<vmem>>, vector<1x1152x128xbf16>
    %74 = vector.shape_cast %73 : vector<1x1152x128xbf16> to vector<1152x128xbf16>
    %cst_26 = arith.constant dense<0.000000e+00> : vector<64x128xf32>
    %75 = tpu.matmul %72, %74, %cst_26 {dimension_numbers = #tpu.dot_dimension_numbers<[1], [0], [0], [1], [0, 0, 1, 1], [], []>} : vector<64x1152xbf16>, vector<1152x128xbf16>, vector<64x128xf32> -> vector<64x128xf32>
    %76 = vector.extract_strided_slice %1 {offsets = [2, 0], sizes = [1, 128], strides = [1, 1]} : vector<4x128xf32> to vector<1x128xf32>
    %77 = vector.broadcast %76 : vector<1x128xf32> to vector<64x128xf32>
    %78 = arith.addf %75, %77 : vector<64x128xf32>
    %79 = vector.shape_cast %78 : vector<64x128xf32> to vector<1x8x8x128xf32>
    %cst_27 = arith.constant 0.000000e+00 : f32
    %80 = vector.broadcast %cst_27 : f32 to vector<1x8x8x128xf32>
    %81 = arith.maximumf %79, %80 : vector<1x8x8x128xf32>
    %cst_28 = arith.constant 0.000000e+00 : f32
    %82 = vector.broadcast %cst_28 : f32 to vector<1x8x1x128xf32>
    %83 = tpu.concatenate %82, %81, %82 in 2 : vector<1x8x1x128xf32>, vector<1x8x8x128xf32>, vector<1x8x1x128xf32> -> vector<1x8x10x128xf32>
    %cst_29 = arith.constant 0.000000e+00 : f32
    %84 = vector.broadcast %cst_29 : f32 to vector<1x1x10x128xf32>
    %85 = tpu.concatenate %84, %83, %84 in 1 : vector<1x1x10x128xf32>, vector<1x8x10x128xf32>, vector<1x1x10x128xf32> -> vector<1x10x10x128xf32>
    %86 = vector.extract_strided_slice %85 {offsets = [0, 0, 0, 0], sizes = [1, 8, 8, 128], strides = [1, 1, 1, 1]} : vector<1x10x10x128xf32> to vector<1x8x8x128xf32>
    %87 = vector.extract_strided_slice %85 {offsets = [0, 0, 1, 0], sizes = [1, 8, 8, 128], strides = [1, 1, 1, 1]} : vector<1x10x10x128xf32> to vector<1x8x8x128xf32>
    %88 = vector.extract_strided_slice %85 {offsets = [0, 0, 2, 0], sizes = [1, 8, 8, 128], strides = [1, 1, 1, 1]} : vector<1x10x10x128xf32> to vector<1x8x8x128xf32>
    %89 = vector.extract_strided_slice %85 {offsets = [0, 1, 0, 0], sizes = [1, 8, 8, 128], strides = [1, 1, 1, 1]} : vector<1x10x10x128xf32> to vector<1x8x8x128xf32>
    %90 = vector.extract_strided_slice %85 {offsets = [0, 1, 1, 0], sizes = [1, 8, 8, 128], strides = [1, 1, 1, 1]} : vector<1x10x10x128xf32> to vector<1x8x8x128xf32>
    %91 = vector.extract_strided_slice %85 {offsets = [0, 1, 2, 0], sizes = [1, 8, 8, 128], strides = [1, 1, 1, 1]} : vector<1x10x10x128xf32> to vector<1x8x8x128xf32>
    %92 = vector.extract_strided_slice %85 {offsets = [0, 2, 0, 0], sizes = [1, 8, 8, 128], strides = [1, 1, 1, 1]} : vector<1x10x10x128xf32> to vector<1x8x8x128xf32>
    %93 = vector.extract_strided_slice %85 {offsets = [0, 2, 1, 0], sizes = [1, 8, 8, 128], strides = [1, 1, 1, 1]} : vector<1x10x10x128xf32> to vector<1x8x8x128xf32>
    %94 = vector.extract_strided_slice %85 {offsets = [0, 2, 2, 0], sizes = [1, 8, 8, 128], strides = [1, 1, 1, 1]} : vector<1x10x10x128xf32> to vector<1x8x8x128xf32>
    %95 = tpu.concatenate %86, %87, %88, %89, %90, %91, %92, %93, %94 in 3 : vector<1x8x8x128xf32>, vector<1x8x8x128xf32>, vector<1x8x8x128xf32>, vector<1x8x8x128xf32>, vector<1x8x8x128xf32>, vector<1x8x8x128xf32>, vector<1x8x8x128xf32>, vector<1x8x8x128xf32>, vector<1x8x8x128xf32> -> vector<1x8x8x1152xf32>
    %96 = vector.shape_cast %95 : vector<1x8x8x1152xf32> to vector<64x1152xf32>
    %97 = arith.truncf %96 : vector<64x1152xf32> to vector<64x1152xbf16>
    %c3 = arith.constant 3 : index
    %c0_30 = arith.constant 0 : index
    %c0_31 = arith.constant 0 : index
    %98 = vector.load %arg3[%c3, %c0_30, %c0_31] : memref<4x1152x128xbf16, #tpu.memory_space<vmem>>, vector<1x1152x128xbf16>
    %99 = vector.shape_cast %98 : vector<1x1152x128xbf16> to vector<1152x128xbf16>
    %cst_32 = arith.constant dense<0.000000e+00> : vector<64x128xf32>
    %100 = tpu.matmul %97, %99, %cst_32 {dimension_numbers = #tpu.dot_dimension_numbers<[1], [0], [0], [1], [0, 0, 1, 1], [], []>} : vector<64x1152xbf16>, vector<1152x128xbf16>, vector<64x128xf32> -> vector<64x128xf32>
    %101 = vector.extract_strided_slice %1 {offsets = [3, 0], sizes = [1, 128], strides = [1, 1]} : vector<4x128xf32> to vector<1x128xf32>
    %102 = vector.broadcast %101 : vector<1x128xf32> to vector<64x128xf32>
    %103 = arith.addf %100, %102 : vector<64x128xf32>
    %104 = vector.shape_cast %103 : vector<64x128xf32> to vector<1x8x8x128xf32>
    %105 = arith.addf %104, %54 : vector<1x8x8x128xf32>
    %c0_33 = arith.constant 0 : index
    %c0_34 = arith.constant 0 : index
    %106 = vector.load %arg5[%c0_33, %c0_34] : memref<256x64xf32, #tpu.memory_space<vmem>>, vector<256x64xf32>
    %107 = vector.shape_cast %105 : vector<1x8x8x128xf32> to vector<8x8x128xf32>
    %108 = vector.shape_cast %107 : vector<8x8x128xf32> to vector<64x128xf32>
    %cst_35 = arith.constant dense<0.000000e+00> : vector<256x128xf32>
    %109 = tpu.matmul %106, %108, %cst_35 {dimension_numbers = #tpu.dot_dimension_numbers<[1], [0], [0], [1], [0, 0, 1, 1], [], []>} : vector<256x64xf32>, vector<64x128xf32>, vector<256x128xf32> -> vector<256x128xf32>
    %110 = vector.shape_cast %109 : vector<256x128xf32> to vector<16x16x128xf32>
    %c0_36 = arith.constant 0 : index
    %c0_37 = arith.constant 0 : index
    %c0_38 = arith.constant 0 : index
    %c0_39 = arith.constant 0 : index
    %111 = vector.load %arg6[%c0_36, %c0_37, %c0_38, %c0_39] : memref<1x16x16x128xf32, #tpu.memory_space<vmem>>, vector<1x16x16x128xf32>
    %112 = vector.shape_cast %111 : vector<1x16x16x128xf32> to vector<16x16x128xf32>
    %113 = vector.shape_cast %110 : vector<16x16x128xf32> to vector<1x16x16x128xf32>
    tpu.vector_store %arg6[%c0_36, %c0_37, %c0_38, %c0_39], %113 {strides = array<i32>} : memref<1x16x16x128xf32, #tpu.memory_space<vmem>>, vector<1x16x16x128xf32>,
    return
  }
  func.func @transform_0(%arg0: i32) -> (i32, i32, i32, i32) {
    %c0_i32 = arith.constant 0 : i32
    %c0_i32_0 = arith.constant 0 : i32
    %c0_i32_1 = arith.constant 0 : i32
    %c0_i32_2 = arith.constant 0 : i32
    return %arg0, %c0_i32, %c0_i32_0, %c0_i32_1 : i32, i32, i32, i32
  }
  func.func @transform_1(%arg0: i32) -> (i32, i32, i32, i32) {
    %c0_i32 = arith.constant 0 : i32
    %c0_i32_0 = arith.constant 0 : i32
    %c0_i32_1 = arith.constant 0 : i32
    %c0_i32_2 = arith.constant 0 : i32
    return %arg0, %c0_i32, %c0_i32_0, %c0_i32_1 : i32, i32, i32, i32
  }
  func.func @transform_2(%arg0: i32) -> (i32, i32, i32) {
    %c0_i32 = arith.constant 0 : i32
    %c0_i32_0 = arith.constant 0 : i32
    %c0_i32_1 = arith.constant 0 : i32
    %c0_i32_2 = arith.constant 0 : i32
    return %c0_i32, %c0_i32_0, %c0_i32_1 : i32, i32, i32
  }
  func.func @transform_3(%arg0: i32) -> (i32, i32) {
    %c0_i32 = arith.constant 0 : i32
    %c0_i32_0 = arith.constant 0 : i32
    %c0_i32_1 = arith.constant 0 : i32
    return %c0_i32, %c0_i32_0 : i32, i32
  }
  func.func @transform_4(%arg0: i32) -> (i32, i32) {
    %c0_i32 = arith.constant 0 : i32
    %c0_i32_0 = arith.constant 0 : i32
    %c0_i32_1 = arith.constant 0 : i32
    return %c0_i32, %c0_i32_0 : i32, i32
  }
  func.func @transform_5(%arg0: i32) -> (i32, i32, i32, i32) {
    %c0_i32 = arith.constant 0 : i32
    %c0_i32_0 = arith.constant 0 : i32
    %c0_i32_1 = arith.constant 0 : i32
    %c0_i32_2 = arith.constant 0 : i32
    return %arg0, %c0_i32, %c0_i32_0, %c0_i32_1 : i32, i32, i32, i32
  }
}

</mosaic_0001>

<llo_original>
// kernel: tpu_custom_call.1
$region0: #{tpu_custom_call.1}
  #allocation0 [shape = 'u32[]', space=smem, size = 0x4, offset = 0x4, fixed_abs, tag = 'smem constant byte address 0x4 - core index']
  #allocation1 [shape = 'u32[144,128]{1,0:T(1,128)}', space=vmem, size = 0x12000, scoped, tag = 'internal scratch']
  %s0 = inlined_call_operand.hbm [shape: f32[2,8,8,128], index: 0, kind: input, shape index: {}]
  %s1 = inlined_call_operand.hbm [shape: f32[2,8,8,128], index: 1, kind: input, shape index: {}]
  %s2 = inlined_call_operand.hbm [shape: bf16[4,1152,128], index: 2, kind: input, shape index: {}]
  %s3 = inlined_call_operand.hbm [shape: f32[4,128], index: 3, kind: input, shape index: {}]
  %s4 = inlined_call_operand.vmem [shape: f32[256,64], index: 4, kind: input, shape index: {}]
  %s5 = inlined_call_operand.hbm [shape: f32[2,16,16,128], index: 5, kind: output, shape index: {}]
  %s6 = sld [smem:[#allocation0]]
  $region69: #{tpu_custom_call.1} parent=0
    _
  %s8 = ssub.s32 1, %s6
  %s9 = scalar_select 0, %s8, %s6
  $region1: #{tpu_custom_call.1} parent=0
    #allocation2 [shape = 'u8[65536]{0}', space=vmem, size = 0x10000, scoped, tag = 'input window, operand 0']
    #allocation3 [shape = 's32[2]{0}', space=sflag, size = 0x8, scoped, tag = 'scoped memory for tpu_custom_call.1']
    #allocation4 [shape = 's32[2]{0}', space=sflag, size = 0x8, scoped, tag = 'scoped memory for tpu_custom_call.1']
    #allocation5 [shape = 'u8[65536]{0}', space=vmem, size = 0x10000, scoped, tag = 'input window, operand 1']
    #allocation6 [shape = 's32[2]{0}', space=sflag, size = 0x8, scoped, tag = 'scoped memory for tpu_custom_call.1']
    #allocation7 [shape = 'u8[1179648]{0}', space=vmem, size = 0x120000, scoped, tag = 'input window, operand 2, single buffered']
    #allocation8 [shape = 'u8[2048]{0}', space=vmem, size = 0x800, scoped, tag = 'input window, operand 3, single buffered']
    #allocation9 [shape = 's32[1]{0}', space=sflag, size = 0x4, scoped, tag = 'scoped memory for tpu_custom_call.1']
    #allocation10 [shape = 'u8[262144]{0}', space=vmem, size = 0x40000, scoped, tag = 'output window, operand 0']
    %10 = vsyncpa [#allocation3], 0
    %s11 = scalar_lea.sflag [#allocation3], 1
    %12 = vsyncpa %s11, 0
    %13 = vsyncpa [#allocation6], 0
    %s14 = scalar_lea.sflag [#allocation6], 1
    %15 = vsyncpa %s14, 0
    %16 = vsyncpa [#allocation9], 0
    %17 = vsyncpa [#allocation4], 0
    %s18 = scalar_lea.sflag [#allocation4], 1
    %19 = vsyncpa %s18, 0
    loop: start=0, step=1, limit=4
    $region2: #{tpu_custom_call.1} parent=1 // loop_pre_header
      _
    $region3: #{tpu_custom_call.1} parent=1 // loop_header
      %s21 = sphi 0, %s25
      %p22 = scmp.ge.s32.totalorder %s21, 4
      %s31 = sphi 0, %s33
      %s34 = sphi 0, %s31
      %s35 = sphi 0, %s34
      %s51 = sphi 0, %s35
      %s57 = sphi 0, %s59
      %s60 = sphi 0, %s57
      %s61 = sphi 0, %s60
      %s77 = sphi 0, %s61
      %s81 = sphi 0, %s81
      %s83 = sphi 0, %s81
      %s84 = sphi 0, %s83
      %s98 = sphi 0, %s84
      %s102 = sphi 0, %s102
      %s104 = sphi 0, %s102
      %s105 = sphi 0, %s104
      %s119 = sphi 0, %s105
      %s123 = sphi 0, %s123
      %s125 = sphi 0, %s123
      %s126 = sphi 0, %s125
      %s140 = sphi 0, %s126
      %s146 = sphi 0, %s148
      %s149 = sphi 0, %s146
      %s150 = sphi 0, %s149
      %s166 = sphi 0, %s150
    $region4: #{tpu_custom_call.1} parent=1 // loop_header_branch
      %24 = sbr.rel (%p22) target = $region8
    $region5: #{tpu_custom_call.1} parent=1 // loop_body
      %s26 = ssub.s32 %s21, 1
      %s27 = ssub.s32 %s21, 2
      %s28 = sadd.s32 %s21, 1
      %s29 = ssub.s32 %s21, %s28
      %p30 = scmp.eq.s32.totalorder %s29, 0
      %s32 = sadd.s32 %s31, 1
      %s33 = scalar_select %p30, %s31, %s32
      %p36 = pneg %p30
      %p37 = scmp.eq.s32.totalorder %s21, 1
      %p38 = por %p36, %p37
      %p39 = scmp.ne.s32.totalorder %s31, %s34
      %p40 = scmp.eq.s32.totalorder %s21, 0
      %p41 = por %p39, %p40
      %p42 = scmp.ne.s32.totalorder %s31, %s34
      %p43 = scmp.eq.s32.totalorder %s26, 1
      %p44 = por %p42, %p43
      %p45 = scmp.ne.s32.totalorder %s34, %s35
      %p46 = scmp.eq.s32.totalorder %s26, 0
      %p47 = por %p45, %p46
      %p48 = scmp.ne.s32.totalorder %s34, %s35
      %p49 = scmp.eq.s32.totalorder %s27, 1
      %p50 = por %p48, %p49
      %p52 = scmp.ne.s32.totalorder %s35, %s51
      %p53 = scmp.eq.s32.totalorder %s27, 0
      %p54 = por %p52, %p53
      %s55 = ssub.s32 %s21, %s28
      %p56 = scmp.eq.s32.totalorder %s55, 0
      %s58 = sadd.s32 %s57, 1
      %s59 = scalar_select %p56, %s57, %s58
      %p62 = pneg %p56
      %p63 = scmp.eq.s32.totalorder %s21, 1
      %p64 = por %p62, %p63
      %p65 = scmp.ne.s32.totalorder %s57, %s60
      %p66 = scmp.eq.s32.totalorder %s21, 0
      %p67 = por %p65, %p66
      %p68 = scmp.ne.s32.totalorder %s57, %s60
      %p69 = scmp.eq.s32.totalorder %s26, 1
      %p70 = por %p68, %p69
      %p71 = scmp.ne.s32.totalorder %s60, %s61
      %p72 = scmp.eq.s32.totalorder %s26, 0
      %p73 = por %p71, %p72
      %p74 = scmp.ne.s32.totalorder %s60, %s61
      %p75 = scmp.eq.s32.totalorder %s27, 1
      %p76 = por %p74, %p75
      %p78 = scmp.ne.s32.totalorder %s61, %s77
      %p79 = scmp.eq.s32.totalorder %s27, 0
      %p80 = por %p78, %p79
      %s82 = sadd.s32 %s81, 1
      %p85 = scmp.eq.s32.totalorder %s21, 1
      %p86 = scmp.ne.s32.totalorder %s81, %s83
      %p87 = scmp.eq.s32.totalorder %s21, 0
      %p88 = por %p86, %p87
      %p89 = scmp.ne.s32.totalorder %s81, %s83
      %p90 = scmp.eq.s32.totalorder %s26, 1
      %p91 = por %p89, %p90
      %p92 = scmp.ne.s32.totalorder %s83, %s84
      %p93 = scmp.eq.s32.totalorder %s26, 0
      %p94 = por %p92, %p93
      %p95 = scmp.ne.s32.totalorder %s83, %s84
      %p96 = scmp.eq.s32.totalorder %s27, 1
      %p97 = por %p95, %p96
      %p99 = scmp.ne.s32.totalorder %s84, %s98
      %p100 = scmp.eq.s32.totalorder %s27, 0
      %p101 = por %p99, %p100
      %s103 = sadd.s32 %s102, 1
      %p106 = scmp.eq.s32.totalorder %s21, 1
      %p107 = scmp.ne.s32.totalorder %s102, %s104
      %p108 = scmp.eq.s32.totalorder %s21, 0
      %p109 = por %p107, %p108
      %p110 = scmp.ne.s32.totalorder %s102, %s104
      %p111 = scmp.eq.s32.totalorder %s26, 1
      %p112 = por %p110, %p111
      %p113 = scmp.ne.s32.totalorder %s104, %s105
      %p114 = scmp.eq.s32.totalorder %s26, 0
      %p115 = por %p113, %p114
      %p116 = scmp.ne.s32.totalorder %s104, %s105
      %p117 = scmp.eq.s32.totalorder %s27, 1
      %p118 = por %p116, %p117
      %p120 = scmp.ne.s32.totalorder %s105, %s119
      %p121 = scmp.eq.s32.totalorder %s27, 0
      %p122 = por %p120, %p121
      %s124 = sadd.s32 %s123, 1
      %p127 = scmp.eq.s32.totalorder %s21, 1
      %p128 = scmp.ne.s32.totalorder %s123, %s125
      %p129 = scmp.eq.s32.totalorder %s21, 0
      %p130 = por %p128, %p129
      %p131 = scmp.ne.s32.totalorder %s123, %s125
      %p132 = scmp.eq.s32.totalorder %s26, 1
      %p133 = por %p131, %p132
      %p134 = scmp.ne.s32.totalorder %s125, %s126
      %p135 = scmp.eq.s32.totalorder %s26, 0
      %p136 = por %p134, %p135
      %p137 = scmp.ne.s32.totalorder %s125, %s126
      %p138 = scmp.eq.s32.totalorder %s27, 1
      %p139 = por %p137, %p138
      %p141 = scmp.ne.s32.totalorder %s126, %s140
      %p142 = scmp.eq.s32.totalorder %s27, 0
      %p143 = por %p141, %p142
      %s144 = ssub.s32 %s21, %s28
      %p145 = scmp.eq.s32.totalorder %s144, 0
      %s147 = sadd.s32 %s146, 1
      %s148 = scalar_select %p145, %s146, %s147
      %p151 = pneg %p145
      %p152 = scmp.eq.s32.totalorder %s21, 1
      %p153 = por %p151, %p152
      %p154 = scmp.ne.s32.totalorder %s146, %s149
      %p155 = scmp.eq.s32.totalorder %s21, 0
      %p156 = por %p154, %p155
      %p157 = scmp.ne.s32.totalorder %s146, %s149
      %p158 = scmp.eq.s32.totalorder %s26, 1
      %p159 = por %p157, %p158
      %p160 = scmp.ne.s32.totalorder %s149, %s150
      %p161 = scmp.eq.s32.totalorder %s26, 0
      %p162 = por %p160, %p161
      %p163 = scmp.ne.s32.totalorder %s149, %s150
      %p164 = scmp.eq.s32.totalorder %s27, 1
      %p165 = por %p163, %p164
      %p167 = scmp.ne.s32.totalorder %s150, %s166
      %p168 = scmp.eq.s32.totalorder %s27, 0
      %p169 = por %p167, %p168
      %p170 = scmp.le.s32.totalorder 1, %s21
      %p171 = scmp.lt.s32.totalorder %s21, 3
      %p172 = pnand %p170, %p171
      %p173 = pneg %p172
      // Predicated region
      $region9: #{tpu_custom_call.1} parent=5 // pred_check
        _
      $region10: #{tpu_custom_call.1} parent=5 // pred_check_branch
        %175 = sbr.rel (%p172) target = $region12
      $region11: #{tpu_custom_call.1} parent=5 // pred_region
        %s176 = ssub.s32 %s21, 1
        // Predicated region
        $region13: #{tpu_custom_call.1} parent=11 // pred_check
          %p177 = pneg %p94
        $region14: #{tpu_custom_call.1} parent=11 // pred_check_branch
          %179 = sbr.rel (%p177) target = $region16
        $region15: #{tpu_custom_call.1} parent=11 // pred_region
          %s181 = ssub.s32 36864, 36864
          %182 = vsyncadd [#allocation6], %s181
          %s183 = sshll.u32 [#allocation7], 4
          %s184 = int_to_ptr.vmem [resolvable:$true] %s183
          %189 = dma.hbm_to_vmem [thread:$0]  %s2, 36864, %s184, [#allocation6], 64, 64, 4
        $region16: #{tpu_custom_call.1} parent=11 // pred_fallthru
          _
        // Predicated region
        $region17: #{tpu_custom_call.1} parent=11 // pred_check
          %p190 = pneg %p115
        $region18: #{tpu_custom_call.1} parent=11 // pred_check_branch
          %192 = sbr.rel (%p190) target = $region20
        $region19: #{tpu_custom_call.1} parent=11 // pred_region
          %s194 = ssub.s32 64, 64
          %195 = vsyncadd [#allocation9], %s194
          %s197 = sshll.u32 [#allocation8], 4
          %s198 = int_to_ptr.vmem [resolvable:$true] %s197
          %200 = dma.hbm_to_vmem [thread:$0]  %s3, 64, %s198, [#allocation9]
        $region20: #{tpu_custom_call.1} parent=11 // pred_fallthru
          _
        // Predicated region
        $region21: #{tpu_custom_call.1} parent=11 // pred_check
          %p201 = pneg %p136
        $region22: #{tpu_custom_call.1} parent=11 // pred_check_branch
          %203 = sbr.rel (%p201) target = $region24
        $region23: #{tpu_custom_call.1} parent=11 // pred_region
          _
        $region24: #{tpu_custom_call.1} parent=11 // pred_fallthru
          _
      $region12: #{tpu_custom_call.1} parent=5 // pred_fallthru
        _
      %p204 = scmp.lt.s32.totalorder %s21, 2
      // Predicated region
      $region25: #{tpu_custom_call.1} parent=5 // pred_check
        %p205 = pneg %p204
      $region26: #{tpu_custom_call.1} parent=5 // pred_check_branch
        %207 = sbr.rel (%p205) target = $region28
      $region27: #{tpu_custom_call.1} parent=5 // pred_region
        // Predicated region
        $region29: #{tpu_custom_call.1} parent=27 // pred_check
          %p208 = pneg %p41
        $region30: #{tpu_custom_call.1} parent=27 // pred_check_branch
          %210 = sbr.rel (%p208) target = $region32
        $region31: #{tpu_custom_call.1} parent=27 // pred_region
          %s211 = sand.u32 %s31, 1
          %s212 = scalar_lea.sflag [#allocation3], %s211
          %s213 = sand.u32 %s31, 1
          %s214 = smul.addr %s213, 64
          %s215 = scalar_lea.vmem [#allocation2], %s214
          %s217 = ssub.s32 1024, 1024
          %218 = vsyncadd %s212, %s217
          %s219 = smul.addr %s21, 8
          %s220 = smul.addr %s219, 128
          %s221 = scalar_lea.hbm %s0, %s220
          %s222 = sshll.u32 %s215, 4
          %s223 = int_to_ptr.vmem [resolvable:$true] %s222
          %228 = dma.hbm_to_vmem [thread:$0]  %s221, 1024, %s223, %s212, 128, 128, 8
        $region32: #{tpu_custom_call.1} parent=27 // pred_fallthru
          _
        // Predicated region
        $region33: #{tpu_custom_call.1} parent=27 // pred_check
          %p229 = pneg %p67
        $region34: #{tpu_custom_call.1} parent=27 // pred_check_branch
          %231 = sbr.rel (%p229) target = $region36
        $region35: #{tpu_custom_call.1} parent=27 // pred_region
          %s232 = sand.u32 %s21, 1
          %s233 = scalar_lea.sflag [#allocation6], %s232
          %s234 = sand.u32 %s57, 1
          %s235 = smul.addr %s234, 64
          %s236 = scalar_lea.vmem [#allocation5], %s235
          %s238 = ssub.s32 1024, 1024
          %239 = vsyncadd %s233, %s238
          %s240 = smul.addr %s21, 8
          %s241 = smul.addr %s240, 128
          %s242 = scalar_lea.hbm %s1, %s241
          %s243 = sshll.u32 %s236, 4
          %s244 = int_to_ptr.vmem [resolvable:$true] %s243
          %249 = dma.hbm_to_vmem [thread:$0]  %s242, 1024, %s244, %s233, 128, 128, 8
        $region36: #{tpu_custom_call.1} parent=27 // pred_fallthru
          _
      $region28: #{tpu_custom_call.1} parent=5 // pred_fallthru
        _
      %p250 = scmp.le.s32.totalorder 1, %s21
      %p251 = scmp.lt.s32.totalorder %s21, 3
      %p252 = pnand %p250, %p251
      %p253 = pneg %p252
      // Predicated region
      $region37: #{tpu_custom_call.1} parent=5 // pred_check
        _
      $region38: #{tpu_custom_call.1} parent=5 // pred_check_branch
        %255 = sbr.rel (%p252) target = $region40
      $region39: #{tpu_custom_call.1} parent=5 // pred_region
        %s256 = ssub.s32 %s21, 1
        %s257 = sand.u32 %s34, 1
        %s258 = scalar_lea.sflag [#allocation3], %s257
        %s259 = sand.u32 %s34, 1
        %s260 = smul.addr %s259, 64
        %s261 = scalar_lea.vmem [#allocation2], %s260
        // Predicated region
        $region41: #{tpu_custom_call.1} parent=39 // pred_check
          %p262 = pneg %p47
        $region42: #{tpu_custom_call.1} parent=39 // pred_check_branch
          %264 = sbr.rel (%p262) target = $region44
        $region43: #{tpu_custom_call.1} parent=39 // pred_region
          %265 = dma.done %s258, 1024
        $region44: #{tpu_custom_call.1} parent=39 // pred_fallthru
          _
        %s266 = sand.u32 %s26, 1
        %s267 = scalar_lea.sflag [#allocation6], %s266
        %s268 = sand.u32 %s60, 1
        %s269 = smul.addr %s268, 64
        %s270 = scalar_lea.vmem [#allocation5], %s269
        // Predicated region
        $region45: #{tpu_custom_call.1} parent=39 // pred_check
          %p271 = pneg %p73
        $region46: #{tpu_custom_call.1} parent=39 // pred_check_branch
          %273 = sbr.rel (%p271) target = $region48
        $region47: #{tpu_custom_call.1} parent=39 // pred_region
          %274 = dma.done %s267, 1024
        $region48: #{tpu_custom_call.1} parent=39 // pred_fallthru
          _
        // Predicated region
        $region49: #{tpu_custom_call.1} parent=39 // pred_check
          %p275 = pneg %p94
        $region50: #{tpu_custom_call.1} parent=39 // pred_check_branch
          %277 = sbr.rel (%p275) target = $region52
        $region51: #{tpu_custom_call.1} parent=39 // pred_region
          %278 = dma.done [#allocation6], 36864
        $region52: #{tpu_custom_call.1} parent=39 // pred_fallthru
          _
        // Predicated region
        $region53: #{tpu_custom_call.1} parent=39 // pred_check
          %p279 = pneg %p115
        $region54: #{tpu_custom_call.1} parent=39 // pred_check_branch
          %281 = sbr.rel (%p279) target = $region56
        $region55: #{tpu_custom_call.1} parent=39 // pred_region
          %282 = dma.done [#allocation9], 64
        $region56: #{tpu_custom_call.1} parent=39 // pred_fallthru
          _
        %s283 = sand.u32 %s34, 1
        %s284 = scalar_lea.sflag [#allocation3], %s283
        %s285 = sand.u32 %s34, 1
        %s286 = smul.addr %s285, 64
        %s287 = scalar_lea.vmem [#allocation2], %s286
        %p288 = pneg %p47
        %p289 = pneg %p44
        %s290 = sand.u32 %s26, 1
        %s291 = scalar_lea.sflag [#allocation6], %s290
        %s292 = sand.u32 %s60, 1
        %s293 = smul.addr %s292, 64
        %s294 = scalar_lea.vmem [#allocation5], %s293
        %p295 = pneg %p73
        %p296 = pneg %p70
        %p297 = pneg %p94
        %p298 = pneg %p91
        %p299 = pneg %p115
        %p300 = pneg %p112
        %p301 = pneg %p136
        %p302 = pneg %p133
        %p303 = pneg %p162
        %p304 = pneg %p159
        %s305 = sand.u32 %s149, 1
        %s306 = scalar_lea.sflag [#allocation4], %s305
        %s307 = sand.u32 %s149, 1
        %s308 = smul.addr %s307, 256
        %s309 = scalar_lea.vmem [#allocation10], %s308
        %v311 = vld [vmem:[%s261] sm:$0xff]
        %v312 = vld [vmem:[%s261 + $0x8] sm:$0xff]
        %v313 = vld [vmem:[%s261 + $0x10] sm:$0xff]
        %v314 = vld [vmem:[%s261 + $0x18] sm:$0xff]
        %v315 = vld [vmem:[%s261 + $0x20] sm:$0xff]
        %v316 = vld [vmem:[%s261 + $0x28] sm:$0xff]
        %v317 = vld [vmem:[%s261 + $0x30] sm:$0xff]
        %v318 = vld [vmem:[%s261 + $0x38] sm:$0xff]
        %v319 = vld [vmem:[#allocation8] sm:$0xf]
        %v320 = vmax.f32 %v311, 0.0
        %v321 = vmax.f32 %v312, 0.0
        %v322 = vmax.f32 %v313, 0.0
        %v323 = vmax.f32 %v314, 0.0
        %v324 = vmax.f32 %v315, 0.0
        %v325 = vmax.f32 %v316, 0.0
        %v326 = vmax.f32 %v317, 0.0
        %v327 = vmax.f32 %v318, 0.0
        %v336 = vrot.slane %v320, 7
        %v337 = vrot.slane %v321, 7
        %v338 = vrot.slane %v322, 7
        %v339 = vrot.slane %v323, 7
        %v340 = vrot.slane %v324, 7
        %v341 = vrot.slane %v325, 7
        %v342 = vrot.slane %v326, 7
        %v343 = vrot.slane %v327, 7
        %vm352 = vcmask 1040384
        %v353 = vsel %vm352, 0.0, %v336
        %v354 = vsel %vm352, 0.0, %v337
        %v355 = vsel %vm352, 0.0, %v338
        %v356 = vsel %vm352, 0.0, %v339
        %v357 = vsel %vm352, 0.0, %v340
        %v358 = vsel %vm352, 0.0, %v341
        %v359 = vsel %vm352, 0.0, %v342
        %v360 = vsel %vm352, 0.0, %v343
        %v361 = vsel %vm352, %v336, 0.0
        %v362 = vsel %vm352, %v337, 0.0
        %v363 = vsel %vm352, %v338, 0.0
        %v364 = vsel %vm352, %v339, 0.0
        %v365 = vsel %vm352, %v340, 0.0
        %v366 = vsel %vm352, %v341, 0.0
        %v367 = vsel %vm352, %v342, 0.0
        %v368 = vsel %vm352, %v343, 0.0
        %vm384 = vcmask 1046528
        %v385 = vrot.slane 0.0, 1
        %v386 = vsel %vm384, %v385, %v385
        %v387 = vrot.slane %v353, 1
        %v388 = vrot.slane %v361, 1
        %v389 = vsel %vm384, %v387, %v388
        %v390 = vrot.slane %v354, 1
        %v391 = vrot.slane %v362, 1
        %v392 = vsel %vm384, %v390, %v391
        %v393 = vrot.slane %v355, 1
        %v394 = vrot.slane %v363, 1
        %v395 = vsel %vm384, %v393, %v394
        %v396 = vrot.slane %v356, 1
        %v397 = vrot.slane %v364, 1
        %v398 = vsel %vm384, %v396, %v397
        %v399 = vrot.slane %v357, 1
        %v400 = vrot.slane %v365, 1
        %v401 = vsel %vm384, %v399, %v400
        %v402 = vrot.slane %v358, 1
        %v403 = vrot.slane %v366, 1
        %v404 = vsel %vm384, %v402, %v403
        %v405 = vrot.slane %v359, 1
        %v406 = vrot.slane %v367, 1
        %v407 = vsel %vm384, %v405, %v406
        %vm416 = vcmask 1045504
        %v417 = vrot.slane 0.0, 2
        %v418 = vsel %vm416, %v417, %v417
        %v419 = vrot.slane %v353, 2
        %v420 = vrot.slane %v361, 2
        %v421 = vsel %vm416, %v419, %v420
        %v422 = vrot.slane %v354, 2
        %v423 = vrot.slane %v362, 2
        %v424 = vsel %vm416, %v422, %v423
        %v425 = vrot.slane %v355, 2
        %v426 = vrot.slane %v363, 2
        %v427 = vsel %vm416, %v425, %v426
        %v428 = vrot.slane %v356, 2
        %v429 = vrot.slane %v364, 2
        %v430 = vsel %vm416, %v428, %v429
        %v431 = vrot.slane %v357, 2
        %v432 = vrot.slane %v365, 2
        %v433 = vsel %vm416, %v431, %v432
        %v434 = vrot.slane %v358, 2
        %v435 = vrot.slane %v366, 2
        %v436 = vsel %vm416, %v434, %v435
        %v437 = vrot.slane %v359, 2
        %v438 = vrot.slane %v367, 2
        %v439 = vsel %vm416, %v437, %v438
        %v450 = vrot.slane %v360, 1
        %v451 = vrot.slane %v368, 1
        %v452 = vsel %vm384, %v450, %v451
        %v454 = vrot.slane %v360, 2
        %v455 = vrot.slane %v368, 2
        %v456 = vsel %vm416, %v454, %v455
        %v458 = vpack.c.bf16 %v353, 0.0
        %v459 = vpack.c.bf16 %v389, %v386
        %v460 = vpack.c.bf16 %v421, %v418
        %v461 = vpack.c.bf16 %v354, %v353
        %v462 = vpack.c.bf16 %v392, %v389
        %v463 = vpack.c.bf16 %v424, %v421
        %v464 = vpack.c.bf16 %v355, %v354
        %v465 = vpack.c.bf16 %v395, %v392
        %v466 = vpack.c.bf16 %v427, %v424
        %v467 = vpack.c.bf16 %v356, %v355
        %v468 = vpack.c.bf16 %v398, %v395
        %v469 = vpack.c.bf16 %v430, %v427
        %v470 = vpack.c.bf16 %v357, %v356
        %v471 = vpack.c.bf16 %v401, %v398
        %v472 = vpack.c.bf16 %v433, %v430
        %v473 = vpack.c.bf16 %v358, %v357
        %v474 = vpack.c.bf16 %v404, %v401
        %v475 = vpack.c.bf16 %v436, %v433
        %v476 = vpack.c.bf16 %v359, %v358
        %v477 = vpack.c.bf16 %v407, %v404
        %v478 = vpack.c.bf16 %v439, %v436
        %v479 = vpack.c.bf16 %v360, %v359
        %v480 = vpack.c.bf16 %v452, %v407
        %v481 = vpack.c.bf16 %v456, %v439
        %v482 = vpack.c.bf16 0.0, %v360
        %v483 = vpack.c.bf16 %v386, %v452
        %v484 = vpack.c.bf16 %v418, %v456
        %v485 = vld [vmem:[#allocation7] sm:$0xf]
        %v486 = vld [vmem:[#allocation7 + $0x4] sm:$0xf]
        %v487 = vld [vmem:[#allocation7 + $0x8] sm:$0xf]
        %v488 = vld [vmem:[#allocation7 + $0xc] sm:$0xf]
        %v489 = vld [vmem:[#allocation7 + $0x10] sm:$0xf]
        %v490 = vld [vmem:[#allocation7 + $0x14] sm:$0xf]
        %v491 = vld [vmem:[#allocation7 + $0x18] sm:$0xf]
        %v492 = vld [vmem:[#allocation7 + $0x1c] sm:$0xf]
        %v493 = vld [vmem:[#allocation7 + $0x20] sm:$0xf]
        %v494 = vld [vmem:[#allocation7 + $0x24] sm:$0xf]
        %v495 = vld [vmem:[#allocation7 + $0x28] sm:$0xf]
        %v496 = vld [vmem:[#allocation7 + $0x2c] sm:$0xf]
        %v497 = vld [vmem:[#allocation7 + $0x30] sm:$0xf]
        %v498 = vld [vmem:[#allocation7 + $0x34] sm:$0xf]
        %v499 = vld [vmem:[#allocation7 + $0x38] sm:$0xf]
        %v500 = vld [vmem:[#allocation7 + $0x3c] sm:$0xf]
        %v501 = vld [vmem:[#allocation7 + $0x40] sm:$0xf]
        %v502 = vld [vmem:[#allocation7 + $0x44] sm:$0xf]
        %v503 = vld [vmem:[#allocation7 + $0x48] sm:$0xf]
        %v504 = vld [vmem:[#allocation7 + $0x4c] sm:$0xf]
        %v505 = vld [vmem:[#allocation7 + $0x50] sm:$0xf]
        %v506 = vld [vmem:[#allocation7 + $0x54] sm:$0xf]
        %v507 = vld [vmem:[#allocation7 + $0x58] sm:$0xf]
        %v508 = vld [vmem:[#allocation7 + $0x5c] sm:$0xf]
        %v509 = vld [vmem:[#allocation7 + $0x60] sm:$0xf]
        %v510 = vld [vmem:[#allocation7 + $0x64] sm:$0xf]
        %v511 = vld [vmem:[#allocation7 + $0x68] sm:$0xf]
        %v512 = vld [vmem:[#allocation7 + $0x6c] sm:$0xf]
        %v513 = vld [vmem:[#allocation7 + $0x70] sm:$0xf]
        %v514 = vld [vmem:[#allocation7 + $0x74] sm:$0xf]
        %v515 = vld [vmem:[#allocation7 + $0x78] sm:$0xf]
        %v516 = vld [vmem:[#allocation7 + $0x7c] sm:$0xf]
        %v517 = vld [vmem:[#allocation7 + $0x80] sm:$0xf]
        %v518 = vld [vmem:[#allocation7 + $0x84] sm:$0xf]
        %v519 = vld [vmem:[#allocation7 + $0x88] sm:$0xf]
        %v520 = vld [vmem:[#allocation7 + $0x8c] sm:$0xf]
        %v521 = vld [vmem:[#allocation7 + $0x90] sm:$0xf]
        %v522 = vld [vmem:[#allocation7 + $0x94] sm:$0xf]
        %v523 = vld [vmem:[#allocation7 + $0x98] sm:$0xf]
        %v524 = vld [vmem:[#allocation7 + $0x9c] sm:$0xf]
        %v525 = vld [vmem:[#allocation7 + $0xa0] sm:$0xf]
        %v526 = vld [vmem:[#allocation7 + $0xa4] sm:$0xf]
        %v527 = vld [vmem:[#allocation7 + $0xa8] sm:$0xf]
        %v528 = vld [vmem:[#allocation7 + $0xac] sm:$0xf]
        %v529 = vld [vmem:[#allocation7 + $0xb0] sm:$0xf]
        %v530 = vld [vmem:[#allocation7 + $0xb4] sm:$0xf]
        %v531 = vld [vmem:[#allocation7 + $0xb8] sm:$0xf]
        %v532 = vld [vmem:[#allocation7 + $0xbc] sm:$0xf]
        %v533 = vld [vmem:[#allocation7 + $0xc0] sm:$0xf]
        %v534 = vld [vmem:[#allocation7 + $0xc4] sm:$0xf]
        %v535 = vld [vmem:[#allocation7 + $0xc8] sm:$0xf]
        %v536 = vld [vmem:[#allocation7 + $0xcc] sm:$0xf]
        %v537 = vld [vmem:[#allocation7 + $0xd0] sm:$0xf]
        %v538 = vld [vmem:[#allocation7 + $0xd4] sm:$0xf]
        %v539 = vld [vmem:[#allocation7 + $0xd8] sm:$0xf]
        %v540 = vld [vmem:[#allocation7 + $0xdc] sm:$0xf]
        %v541 = vld [vmem:[#allocation7 + $0xe0] sm:$0xf]
        %v542 = vld [vmem:[#allocation7 + $0xe4] sm:$0xf]
        %v543 = vld [vmem:[#allocation7 + $0xe8] sm:$0xf]
        %v544 = vld [vmem:[#allocation7 + $0xec] sm:$0xf]
        %v545 = vld [vmem:[#allocation7 + $0xf0] sm:$0xf]
        %v546 = vld [vmem:[#allocation7 + $0xf4] sm:$0xf]
        %v547 = vld [vmem:[#allocation7 + $0xf8] sm:$0xf]
        %v548 = vld [vmem:[#allocation7 + $0xfc] sm:$0xf]
        %v549 = vld [vmem:[#allocation7 + $0x100] sm:$0xf]
        %v550 = vld [vmem:[#allocation7 + $0x104] sm:$0xf]
        %v551 = vld [vmem:[#allocation7 + $0x108] sm:$0xf]
        %v552 = vld [vmem:[#allocation7 + $0x10c] sm:$0xf]
        %v553 = vld [vmem:[#allocation7 + $0x110] sm:$0xf]
        %v554 = vld [vmem:[#allocation7 + $0x114] sm:$0xf]
        %v555 = vld [vmem:[#allocation7 + $0x118] sm:$0xf]
        %v556 = vld [vmem:[#allocation7 + $0x11c] sm:$0xf]
        %v557 = vld [vmem:[#allocation7 + $0x120] sm:$0xf]
        %v558 = vld [vmem:[#allocation7 + $0x124] sm:$0xf]
        %v559 = vld [vmem:[#allocation7 + $0x128] sm:$0xf]
        %v560 = vld [vmem:[#allocation7 + $0x12c] sm:$0xf]
        %v561 = vld [vmem:[#allocation7 + $0x130] sm:$0xf]
        %v562 = vld [vmem:[#allocation7 + $0x134] sm:$0xf]
        %v563 = vld [vmem:[#allocation7 + $0x138] sm:$0xf]
        %v564 = vld [vmem:[#allocation7 + $0x13c] sm:$0xf]
        %v565 = vld [vmem:[#allocation7 + $0x140] sm:$0xf]
        %v566 = vld [vmem:[#allocation7 + $0x144] sm:$0xf]
        %v567 = vld [vmem:[#allocation7 + $0x148] sm:$0xf]
        %v568 = vld [vmem:[#allocation7 + $0x14c] sm:$0xf]
        %v569 = vld [vmem:[#allocation7 + $0x150] sm:$0xf]
        %v570 = vld [vmem:[#allocation7 + $0x154] sm:$0xf]
        %v571 = vld [vmem:[#allocation7 + $0x158] sm:$0xf]
        %v572 = vld [vmem:[#allocation7 + $0x15c] sm:$0xf]
        %v573 = vld [vmem:[#allocation7 + $0x160] sm:$0xf]
        %v574 = vld [vmem:[#allocation7 + $0x164] sm:$0xf]
        %v575 = vld [vmem:[#allocation7 + $0x168] sm:$0xf]
        %v576 = vld [vmem:[#allocation7 + $0x16c] sm:$0xf]
        %v577 = vld [vmem:[#allocation7 + $0x170] sm:$0xf]
        %v578 = vld [vmem:[#allocation7 + $0x174] sm:$0xf]
        %v579 = vld [vmem:[#allocation7 + $0x178] sm:$0xf]
        %v580 = vld [vmem:[#allocation7 + $0x17c] sm:$0xf]
        %v581 = vld [vmem:[#allocation7 + $0x180] sm:$0xf]
        %v582 = vld [vmem:[#allocation7 + $0x184] sm:$0xf]
        %v583 = vld [vmem:[#allocation7 + $0x188] sm:$0xf]
        %v584 = vld [vmem:[#allocation7 + $0x18c] sm:$0xf]
        %v585 = vld [vmem:[#allocation7 + $0x190] sm:$0xf]
        %v586 = vld [vmem:[#allocation7 + $0x194] sm:$0xf]
        %v587 = vld [vmem:[#allocation7 + $0x198] sm:$0xf]
        %v588 = vld [vmem:[#allocation7 + $0x19c] sm:$0xf]
        %v589 = vld [vmem:[#allocation7 + $0x1a0] sm:$0xf]
        %v590 = vld [vmem:[#allocation7 + $0x1a4] sm:$0xf]
        %v591 = vld [vmem:[#allocation7 + $0x1a8] sm:$0xf]
        %v592 = vld [vmem:[#allocation7 + $0x1ac] sm:$0xf]
        %v593 = vld [vmem:[#allocation7 + $0x1b0] sm:$0xf]
        %v594 = vld [vmem:[#allocation7 + $0x1b4] sm:$0xf]
        %v595 = vld [vmem:[#allocation7 + $0x1b8] sm:$0xf]
        %v596 = vld [vmem:[#allocation7 + $0x1bc] sm:$0xf]
        %v597 = vld [vmem:[#allocation7 + $0x1c0] sm:$0xf]
        %v598 = vld [vmem:[#allocation7 + $0x1c4] sm:$0xf]
        %v599 = vld [vmem:[#allocation7 + $0x1c8] sm:$0xf]
        %v600 = vld [vmem:[#allocation7 + $0x1cc] sm:$0xf]
        %v601 = vld [vmem:[#allocation7 + $0x1d0] sm:$0xf]
        %v602 = vld [vmem:[#allocation7 + $0x1d4] sm:$0xf]
        %v603 = vld [vmem:[#allocation7 + $0x1d8] sm:$0xf]
        %v604 = vld [vmem:[#allocation7 + $0x1dc] sm:$0xf]
        %v605 = vld [vmem:[#allocation7 + $0x1e0] sm:$0xf]
        %v606 = vld [vmem:[#allocation7 + $0x1e4] sm:$0xf]
        %v607 = vld [vmem:[#allocation7 + $0x1e8] sm:$0xf]
        %v608 = vld [vmem:[#allocation7 + $0x1ec] sm:$0xf]
        %v609 = vld [vmem:[#allocation7 + $0x1f0] sm:$0xf]
        %v610 = vld [vmem:[#allocation7 + $0x1f4] sm:$0xf]
        %v611 = vld [vmem:[#allocation7 + $0x1f8] sm:$0xf]
        %v612 = vld [vmem:[#allocation7 + $0x1fc] sm:$0xf]
        %v613 = vld [vmem:[#allocation7 + $0x200] sm:$0xf]
        %v614 = vld [vmem:[#allocation7 + $0x204] sm:$0xf]
        %v615 = vld [vmem:[#allocation7 + $0x208] sm:$0xf]
        %v616 = vld [vmem:[#allocation7 + $0x20c] sm:$0xf]
        %v617 = vld [vmem:[#allocation7 + $0x210] sm:$0xf]
        %v618 = vld [vmem:[#allocation7 + $0x214] sm:$0xf]
        %v619 = vld [vmem:[#allocation7 + $0x218] sm:$0xf]
        %v620 = vld [vmem:[#allocation7 + $0x21c] sm:$0xf]
        %v621 = vld [vmem:[#allocation7 + $0x220] sm:$0xf]
        %v622 = vld [vmem:[#allocation7 + $0x224] sm:$0xf]
        %v623 = vld [vmem:[#allocation7 + $0x228] sm:$0xf]
        %v624 = vld [vmem:[#allocation7 + $0x22c] sm:$0xf]
        %v625 = vld [vmem:[#allocation7 + $0x230] sm:$0xf]
        %v626 = vld [vmem:[#allocation7 + $0x234] sm:$0xf]
        %v627 = vld [vmem:[#allocation7 + $0x238] sm:$0xf]
        %v628 = vld [vmem:[#allocation7 + $0x23c] sm:$0xf]
        %v629 = vlaneseq
        %v630 = vshrl.u32 %v629, 7
        %v631 = vsub.s32 0, %v630
        %v632 = vrot.slane %v319, %v631
        %v777 = vunpack.c.l.b16 %v485
        %v778 = vunpack.c.l.b16 %v486
        %v779 = vunpack.c.l.b16 %v487
        %v780 = vunpack.c.l.b16 %v488
        %v781 = vunpack.c.l.b16 %v489
        %v782 = vunpack.c.l.b16 %v490
        %v783 = vunpack.c.l.b16 %v491
        %v784 = vunpack.c.l.b16 %v492
        %v785 = vunpack.c.l.b16 %v493
        %v786 = vunpack.c.l.b16 %v494
        %v787 = vunpack.c.l.b16 %v495
        %v788 = vunpack.c.l.b16 %v496
        %v789 = vunpack.c.l.b16 %v497
        %v790 = vunpack.c.l.b16 %v498
        %v791 = vunpack.c.l.b16 %v499
        %v792 = vunpack.c.l.b16 %v500
        %v793 = vunpack.c.l.b16 %v501
        %v794 = vunpack.c.l.b16 %v502
        %v795 = vunpack.c.l.b16 %v503
        %v796 = vunpack.c.l.b16 %v504
        %v797 = vunpack.c.l.b16 %v505
        %v798 = vunpack.c.l.b16 %v506
        %v799 = vunpack.c.l.b16 %v507
        %v800 = vunpack.c.l.b16 %v508
        %v801 = vunpack.c.l.b16 %v509
        %v802 = vunpack.c.l.b16 %v510
        %v803 = vunpack.c.l.b16 %v511
        %v804 = vunpack.c.l.b16 %v512
        %v805 = vunpack.c.l.b16 %v513
        %v806 = vunpack.c.l.b16 %v514
        %v807 = vunpack.c.l.b16 %v515
        %v808 = vunpack.c.l.b16 %v516
        %v809 = vunpack.c.l.b16 %v517
        %v810 = vunpack.c.l.b16 %v518
        %v811 = vunpack.c.l.b16 %v519
        %v812 = vunpack.c.l.b16 %v520
        %v813 = vunpack.c.l.b16 %v521
        %v814 = vunpack.c.l.b16 %v522
        %v815 = vunpack.c.l.b16 %v523
        %v816 = vunpack.c.l.b16 %v524
        %v817 = vunpack.c.l.b16 %v525
        %v818 = vunpack.c.l.b16 %v526
        %v819 = vunpack.c.l.b16 %v527
        %v820 = vunpack.c.l.b16 %v528
        %v821 = vunpack.c.l.b16 %v529
        %v822 = vunpack.c.l.b16 %v530
        %v823 = vunpack.c.l.b16 %v531
        %v824 = vunpack.c.l.b16 %v532
        %v825 = vunpack.c.l.b16 %v533
        %v826 = vunpack.c.l.b16 %v534
        %v827 = vunpack.c.l.b16 %v535
        %v828 = vunpack.c.l.b16 %v536
        %v829 = vunpack.c.l.b16 %v537
        %v830 = vunpack.c.l.b16 %v538
        %v831 = vunpack.c.l.b16 %v539
        %v832 = vunpack.c.l.b16 %v540
        %v833 = vunpack.c.l.b16 %v541
        %v834 = vunpack.c.l.b16 %v542
        %v835 = vunpack.c.l.b16 %v543
        %v836 = vunpack.c.l.b16 %v544
        %v837 = vunpack.c.l.b16 %v545
        %v838 = vunpack.c.l.b16 %v546
        %v839 = vunpack.c.l.b16 %v547
        %v840 = vunpack.c.l.b16 %v548
        %v841 = vunpack.c.l.b16 %v549
        %v842 = vunpack.c.l.b16 %v550
        %v843 = vunpack.c.l.b16 %v551
        %v844 = vunpack.c.l.b16 %v552
        %v845 = vunpack.c.l.b16 %v553
        %v846 = vunpack.c.l.b16 %v554
        %v847 = vunpack.c.l.b16 %v555
        %v848 = vunpack.c.l.b16 %v556
        %v849 = vunpack.c.l.b16 %v557
        %v850 = vunpack.c.l.b16 %v558
        %v851 = vunpack.c.l.b16 %v559
        %v852 = vunpack.c.l.b16 %v560
        %v853 = vunpack.c.l.b16 %v561
        %v854 = vunpack.c.l.b16 %v562
        %v855 = vunpack.c.l.b16 %v563
        %v856 = vunpack.c.l.b16 %v564
        %v857 = vunpack.c.l.b16 %v565
        %v858 = vunpack.c.l.b16 %v566
        %v859 = vunpack.c.l.b16 %v567
        %v860 = vunpack.c.l.b16 %v568
        %v861 = vunpack.c.l.b16 %v569
        %v862 = vunpack.c.l.b16 %v570
        %v863 = vunpack.c.l.b16 %v571
        %v864 = vunpack.c.l.b16 %v572
        %v865 = vunpack.c.l.b16 %v573
        %v866 = vunpack.c.l.b16 %v574
        %v867 = vunpack.c.l.b16 %v575
        %v868 = vunpack.c.l.b16 %v576
        %v869 = vunpack.c.l.b16 %v577
        %v870 = vunpack.c.l.b16 %v578
        %v871 = vunpack.c.l.b16 %v579
        %v872 = vunpack.c.l.b16 %v580
        %v873 = vunpack.c.l.b16 %v581
        %v874 = vunpack.c.l.b16 %v582
        %v875 = vunpack.c.l.b16 %v583
        %v876 = vunpack.c.l.b16 %v584
        %v877 = vunpack.c.l.b16 %v585
        %v878 = vunpack.c.l.b16 %v586
        %v879 = vunpack.c.l.b16 %v587
        %v880 = vunpack.c.l.b16 %v588
        %v881 = vunpack.c.l.b16 %v589
        %v882 = vunpack.c.l.b16 %v590
        %v883 = vunpack.c.l.b16 %v591
        %v884 = vunpack.c.l.b16 %v592
        %v885 = vunpack.c.l.b16 %v593
        %v886 = vunpack.c.l.b16 %v594
        %v887 = vunpack.c.l.b16 %v595
        %v888 = vunpack.c.l.b16 %v596
        %v889 = vunpack.c.l.b16 %v597
        %v890 = vunpack.c.l.b16 %v598
        %v891 = vunpack.c.l.b16 %v599
        %v892 = vunpack.c.l.b16 %v600
        %v893 = vunpack.c.l.b16 %v601
        %v894 = vunpack.c.l.b16 %v602
        %v895 = vunpack.c.l.b16 %v603
        %v896 = vunpack.c.l.b16 %v604
        %v897 = vunpack.c.l.b16 %v605
        %v898 = vunpack.c.l.b16 %v606
        %v899 = vunpack.c.l.b16 %v607
        %v900 = vunpack.c.l.b16 %v608
        %v901 = vunpack.c.l.b16 %v609
        %v902 = vunpack.c.l.b16 %v610
        %v903 = vunpack.c.l.b16 %v611
        %v904 = vunpack.c.l.b16 %v612
        %v905 = vunpack.c.l.b16 %v613
        %v906 = vunpack.c.l.b16 %v614
        %v907 = vunpack.c.l.b16 %v615
        %v908 = vunpack.c.l.b16 %v616
        %v909 = vunpack.c.l.b16 %v617
        %v910 = vunpack.c.l.b16 %v618
        %v911 = vunpack.c.l.b16 %v619
        %v912 = vunpack.c.l.b16 %v620
        %v913 = vunpack.c.l.b16 %v621
        %v914 = vunpack.c.l.b16 %v622
        %v915 = vunpack.c.l.b16 %v623
        %v916 = vunpack.c.l.b16 %v624
        %v917 = vunpack.c.l.b16 %v625
        %v918 = vunpack.c.l.b16 %v626
        %v919 = vunpack.c.l.b16 %v627
        %v920 = vunpack.c.l.b16 %v628
        %v921 = vpack.c.b16 %v778, %v777
        %v922 = vpack.c.b16 %v780, %v779
        %v923 = vpack.c.b16 %v782, %v781
        %v924 = vpack.c.b16 %v784, %v783
        %v925 = vpack.c.b16 %v786, %v785
        %v926 = vpack.c.b16 %v788, %v787
        %v927 = vpack.c.b16 %v790, %v789
        %v928 = vpack.c.b16 %v792, %v791
        %v929 = vpack.c.b16 %v794, %v793
        %v930 = vpack.c.b16 %v796, %v795
        %v931 = vpack.c.b16 %v798, %v797
        %v932 = vpack.c.b16 %v800, %v799
        %v933 = vpack.c.b16 %v802, %v801
        %v934 = vpack.c.b16 %v804, %v803
        %v935 = vpack.c.b16 %v806, %v805
        %v936 = vpack.c.b16 %v808, %v807
        %v937 = vpack.c.b16 %v810, %v809
        %v938 = vpack.c.b16 %v812, %v811
        %v939 = vpack.c.b16 %v814, %v813
        %v940 = vpack.c.b16 %v816, %v815
        %v941 = vpack.c.b16 %v818, %v817
        %v942 = vpack.c.b16 %v820, %v819
        %v943 = vpack.c.b16 %v822, %v821
        %v944 = vpack.c.b16 %v824, %v823
        %v945 = vpack.c.b16 %v826, %v825
        %v946 = vpack.c.b16 %v828, %v827
        %v947 = vpack.c.b16 %v830, %v829
        %v948 = vpack.c.b16 %v832, %v831
        %v949 = vpack.c.b16 %v834, %v833
        %v950 = vpack.c.b16 %v836, %v835
        %v951 = vpack.c.b16 %v838, %v837
        %v952 = vpack.c.b16 %v840, %v839
        %v953 = vpack.c.b16 %v842, %v841
        %v954 = vpack.c.b16 %v844, %v843
        %v955 = vpack.c.b16 %v846, %v845
        %v956 = vpack.c.b16 %v848, %v847
        %v957 = vpack.c.b16 %v850, %v849
        %v958 = vpack.c.b16 %v852, %v851
        %v959 = vpack.c.b16 %v854, %v853
        %v960 = vpack.c.b16 %v856, %v855
        %v961 = vpack.c.b16 %v858, %v857
        %v962 = vpack.c.b16 %v860, %v859
        %v963 = vpack.c.b16 %v862, %v861
        %v964 = vpack.c.b16 %v864, %v863
        %v965 = vpack.c.b16 %v866, %v865
        %v966 = vpack.c.b16 %v868, %v867
        %v967 = vpack.c.b16 %v870, %v869
        %v968 = vpack.c.b16 %v872, %v871
        %v969 = vpack.c.b16 %v874, %v873
        %v970 = vpack.c.b16 %v876, %v875
        %v971 = vpack.c.b16 %v878, %v877
        %v972 = vpack.c.b16 %v880, %v879
        %v973 = vpack.c.b16 %v882, %v881
        %v974 = vpack.c.b16 %v884, %v883
        %v975 = vpack.c.b16 %v886, %v885
        %v976 = vpack.c.b16 %v888, %v887
        %v977 = vpack.c.b16 %v890, %v889
        %v978 = vpack.c.b16 %v892, %v891
        %v979 = vpack.c.b16 %v894, %v893
        %v980 = vpack.c.b16 %v896, %v895
        %v981 = vpack.c.b16 %v898, %v897
        %v982 = vpack.c.b16 %v900, %v899
        %v983 = vpack.c.b16 %v902, %v901
        %v984 = vpack.c.b16 %v904, %v903
        %v985 = vpack.c.b16 %v906, %v905
        %v986 = vpack.c.b16 %v908, %v907
        %v987 = vpack.c.b16 %v910, %v909
        %v988 = vpack.c.b16 %v912, %v911
        %v989 = vpack.c.b16 %v914, %v913
        %v990 = vpack.c.b16 %v916, %v915
        %v991 = vpack.c.b16 %v918, %v917
        %v992 = vpack.c.b16 %v920, %v919
        %1065 = vmatprep.subr.bf16.mxu0 0
        %1066 = vmatpush1.bf16.msra.mxu0 %v921
        %1067 = vmatprep.subr.bf16.mxu0 0
        %1068 = vmatpush1.bf16.msra.mxu0 %v922
        %1069 = vmatprep.subr.bf16.mxu0 0
        %1070 = vmatpush1.bf16.msra.mxu0 %v923
        %1071 = vmatprep.subr.bf16.mxu0 0
        %1072 = vmatpush1.bf16.msra.mxu0 %v924
        %1073 = vmatprep.subr.bf16.mxu0 0
        %1074 = vmatpush1.bf16.msra.mxu0 %v925
        %1075 = vmatprep.subr.bf16.mxu0 0
        %1076 = vmatpush1.bf16.msra.mxu0 %v926
        %1077 = vmatprep.subr.bf16.mxu0 0
        %1078 = vmatpush1.bf16.msra.mxu0 %v927
        %1079 = vmatprep.subr.bf16.mxu0 0
        %1080 = vmatpush1.bf16.msra.mxu0 %v928
        %1081 = vmatprep.subr.bf16.mxu0 0
        %1082 = vmatpush1.bf16.msra.mxu0 %v929
        %1083 = vmatprep.subr.bf16.mxu0 0
        %1084 = vmatpush1.bf16.msra.mxu0 %v930
        %1085 = vmatprep.subr.bf16.mxu0 0
        %1086 = vmatpush1.bf16.msra.mxu0 %v931
        %1087 = vmatprep.subr.bf16.mxu0 0
        %1088 = vmatpush1.bf16.msra.mxu0 %v932
        %1089 = vmatprep.subr.bf16.mxu0 0
        %1090 = vmatpush1.bf16.msra.mxu0 %v933
        %1091 = vmatprep.subr.bf16.mxu0 0
        %1092 = vmatpush1.bf16.msra.mxu0 %v934
        %1093 = vmatprep.subr.bf16.mxu0 0
        %1094 = vmatpush1.bf16.msra.mxu0 %v935
        %1095 = vmatprep.subr.bf16.mxu0 0
        %1096 = vmatpush1.bf16.msra.mxu0 %v936
        %1097 = vmatprep.mubr.bf16.mxu0 %v459
        %1098 = vmatmul.mubr.bf16.gmra.mrb[0].mxu0 %v458
        %v1099 = vpop.f32.mrb[0].mxu0
        %v1100 = vadd.f32 %v632, %v1099
        %v1101 = vpop.f32.mrb[0].mxu0
        %v1102 = vpop.f32.mrb[0].mxu0
        %v1103 = vadd.f32 %v632, %v1102
        %v1104 = vpop.f32.mrb[0].mxu0
        %1105 = vmatprep.mubr.bf16.mxu0 %v465
        %1106 = vmatmul.mubr.bf16.gmra.mrb[0].mxu0 %v464
        %v1107 = vpop.f32.mrb[0].mxu0
        %v1108 = vadd.f32 %v632, %v1107
        %v1109 = vpop.f32.mrb[0].mxu0
        %v1110 = vpop.f32.mrb[0].mxu0
        %v1111 = vadd.f32 %v632, %v1110
        %v1112 = vpop.f32.mrb[0].mxu0
        %1113 = vmatprep.mubr.bf16.mxu0 %v471
        %1114 = vmatmul.mubr.bf16.gmra.mrb[0].mxu0 %v470
        %v1115 = vpop.f32.mrb[0].mxu0
        %v1116 = vadd.f32 %v632, %v1115
        %v1117 = vpop.f32.mrb[0].mxu0
        %v1118 = vpop.f32.mrb[0].mxu0
        %v1119 = vadd.f32 %v632, %v1118
        %v1120 = vpop.f32.mrb[0].mxu0
        %1121 = vmatprep.mubr.bf16.mxu0 %v477
        %1122 = vmatmul.mubr.bf16.gmra.mrb[0].mxu0 %v476
        %v1123 = vpop.f32.mrb[0].mxu0
        %v1124 = vadd.f32 %v632, %v1123
        %v1125 = vpop.f32.mrb[0].mxu0
        %v1126 = vpop.f32.mrb[0].mxu0
        %v1127 = vadd.f32 %v632, %v1126
        %v1128 = vpop.f32.mrb[0].mxu0
        %1129 = vdwg.mxu0
        %1130 = vmatprep.subr.bf16.mxu0 0
        %1131 = vmatpush1.bf16.msra.mxu0 %v937
        %1132 = vmatprep.subr.bf16.mxu0 0
        %1133 = vmatpush1.bf16.msra.mxu0 %v938
        %1134 = vmatprep.subr.bf16.mxu0 0
        %1135 = vmatpush1.bf16.msra.mxu0 %v939
        %1136 = vmatprep.subr.bf16.mxu0 0
        %1137 = vmatpush1.bf16.msra.mxu0 %v940
        %1138 = vmatprep.subr.bf16.mxu0 0
        %1139 = vmatpush1.bf16.msra.mxu0 %v941
        %1140 = vmatprep.subr.bf16.mxu0 0
        %1141 = vmatpush1.bf16.msra.mxu0 %v942
        %1142 = vmatprep.subr.bf16.mxu0 0
        %1143 = vmatpush1.bf16.msra.mxu0 %v943
        %1144 = vmatprep.subr.bf16.mxu0 0
        %1145 = vmatpush1.bf16.msra.mxu0 %v944
        %1146 = vmatprep.subr.bf16.mxu0 0
        %1147 = vmatpush1.bf16.msra.mxu0 %v945
        %1148 = vmatprep.subr.bf16.mxu0 0
        %1149 = vmatpush1.bf16.msra.mxu0 %v946
        %1150 = vmatprep.subr.bf16.mxu0 0
        %1151 = vmatpush1.bf16.msra.mxu0 %v947
        %1152 = vmatprep.subr.bf16.mxu0 0
        %1153 = vmatpush1.bf16.msra.mxu0 %v948
        %1154 = vmatprep.subr.bf16.mxu0 0
        %1155 = vmatpush1.bf16.msra.mxu0 %v949
        %1156 = vmatprep.subr.bf16.mxu0 0
        %1157 = vmatpush1.bf16.msra.mxu0 %v950
        %1158 = vmatprep.subr.bf16.mxu0 0
        %1159 = vmatpush1.bf16.msra.mxu0 %v951
        %1160 = vmatprep.subr.bf16.mxu0 0
        %1161 = vmatpush1.bf16.msra.mxu0 %v952
        %1162 = vmatprep.mubr.bf16.mxu0 %v461
        %1163 = vmatmul.mubr.bf16.gmra.mrb[0].mxu0 %v460
        %v1164 = vpop.f32.mrb[0].mxu0
        %v1165 = vadd.f32 %v1100, %v1164
        %v1166 = vpop.f32.mrb[0].mxu0
        %v1167 = vpop.f32.mrb[0].mxu0
        %v1168 = vadd.f32 %v1103, %v1167
        %v1169 = vpop.f32.mrb[0].mxu0
        %1170 = vmatprep.mubr.bf16.mxu0 %v467
        %1171 = vmatmul.mubr.bf16.gmra.mrb[0].mxu0 %v466
        %v1172 = vpop.f32.mrb[0].mxu0
        %v1173 = vadd.f32 %v1108, %v1172
        %v1174 = vpop.f32.mrb[0].mxu0
        %v1175 = vpop.f32.mrb[0].mxu0
        %v1176 = vadd.f32 %v1111, %v1175
        %v1177 = vpop.f32.mrb[0].mxu0
        %1178 = vmatprep.mubr.bf16.mxu0 %v473
        %1179 = vmatmul.mubr.bf16.gmra.mrb[0].mxu0 %v472
        %v1180 = vpop.f32.mrb[0].mxu0
        %v1181 = vadd.f32 %v1116, %v1180
        %v1182 = vpop.f32.mrb[0].mxu0
        %v1183 = vpop.f32.mrb[0].mxu0
        %v1184 = vadd.f32 %v1119, %v1183
        %v1185 = vpop.f32.mrb[0].mxu0
        %1186 = vmatprep.mubr.bf16.mxu0 %v479
        %1187 = vmatmul.mubr.bf16.gmra.mrb[0].mxu0 %v478
        %v1188 = vpop.f32.mrb[0].mxu0
        %v1189 = vadd.f32 %v1124, %v1188
        %v1190 = vpop.f32.mrb[0].mxu0
        %v1191 = vpop.f32.mrb[0].mxu0
        %v1192 = vadd.f32 %v1127, %v1191
        %v1193 = vpop.f32.mrb[0].mxu0
        %1194 = vdwg.mxu0
        %1195 = vmatprep.subr.bf16.mxu0 0
        %1196 = vmatpush1.bf16.msra.mxu0 %v953
        %1197 = vmatprep.subr.bf16.mxu0 0
        %1198 = vmatpush1.bf16.msra.mxu0 %v954
        %1199 = vmatprep.subr.bf16.mxu0 0
        %1200 = vmatpush1.bf16.msra.mxu0 %v955
        %1201 = vmatprep.subr.bf16.mxu0 0
        %1202 = vmatpush1.bf16.msra.mxu0 %v956
        %1203 = vmatprep.subr.bf16.mxu0 0
        %1204 = vmatpush1.bf16.msra.mxu0 %v957
        %1205 = vmatprep.subr.bf16.mxu0 0
        %1206 = vmatpush1.bf16.msra.mxu0 %v958
        %1207 = vmatprep.subr.bf16.mxu0 0
        %1208 = vmatpush1.bf16.msra.mxu0 %v959
        %1209 = vmatprep.subr.bf16.mxu0 0
        %1210 = vmatpush1.bf16.msra.mxu0 %v960
        %1211 = vmatprep.subr.bf16.mxu0 0
        %1212 = vmatpush1.bf16.msra.mxu0 %v961
        %1213 = vmatprep.subr.bf16.mxu0 0
        %1214 = vmatpush1.bf16.msra.mxu0 %v962
        %1215 = vmatprep.subr.bf16.mxu0 0
        %1216 = vmatpush1.bf16.msra.mxu0 %v963
        %1217 = vmatprep.subr.bf16.mxu0 0
        %1218 = vmatpush1.bf16.msra.mxu0 %v964
        %1219 = vmatprep.subr.bf16.mxu0 0
        %1220 = vmatpush1.bf16.msra.mxu0 %v965
        %1221 = vmatprep.subr.bf16.mxu0 0
        %1222 = vmatpush1.bf16.msra.mxu0 %v966
        %1223 = vmatprep.subr.bf16.mxu0 0
        %1224 = vmatpush1.bf16.msra.mxu0 %v967
        %1225 = vmatprep.subr.bf16.mxu0 0
        %1226 = vmatpush1.bf16.msra.mxu0 %v968
        %1227 = vmatprep.mubr.bf16.mxu0 %v463
        %1228 = vmatmul.mubr.bf16.gmra.mrb[0].mxu0 %v462
        %v1229 = vpop.f32.mrb[0].mxu0
        %v1230 = vadd.f32 %v1165, %v1229
        %v1231 = vpop.f32.mrb[0].mxu0
        %v1232 = vpop.f32.mrb[0].mxu0
        %v1233 = vadd.f32 %v1168, %v1232
        %v1234 = vpop.f32.mrb[0].mxu0
        %1235 = vmatprep.mubr.bf16.mxu0 %v469
        %1236 = vmatmul.mubr.bf16.gmra.mrb[0].mxu0 %v468
        %v1237 = vpop.f32.mrb[0].mxu0
        %v1238 = vadd.f32 %v1173, %v1237
        %v1239 = vpop.f32.mrb[0].mxu0
        %v1240 = vpop.f32.mrb[0].mxu0
        %v1241 = vadd.f32 %v1176, %v1240
        %v1242 = vpop.f32.mrb[0].mxu0
        %1243 = vmatprep.mubr.bf16.mxu0 %v475
        %1244 = vmatmul.mubr.bf16.gmra.mrb[0].mxu0 %v474
        %v1245 = vpop.f32.mrb[0].mxu0
        %v1246 = vadd.f32 %v1181, %v1245
        %v1247 = vpop.f32.mrb[0].mxu0
        %v1248 = vpop.f32.mrb[0].mxu0
        %v1249 = vadd.f32 %v1184, %v1248
        %v1250 = vpop.f32.mrb[0].mxu0
        %1251 = vmatprep.mubr.bf16.mxu0 %v481
        %1252 = vmatmul.mubr.bf16.gmra.mrb[0].mxu0 %v480
        %v1253 = vpop.f32.mrb[0].mxu0
        %v1254 = vadd.f32 %v1189, %v1253
        %v1255 = vpop.f32.mrb[0].mxu0
        %v1256 = vpop.f32.mrb[0].mxu0
        %v1257 = vadd.f32 %v1192, %v1256
        %v1258 = vpop.f32.mrb[0].mxu0
        %1259 = vdwg.mxu0
        %1260 = vmatprep.subr.bf16.mxu0 0
        %1261 = vmatpush1.bf16.msra.mxu0 %v969
        %1262 = vmatprep.subr.bf16.mxu0 0
        %1263 = vmatpush1.bf16.msra.mxu0 %v970
        %1264 = vmatprep.subr.bf16.mxu0 0
        %1265 = vmatpush1.bf16.msra.mxu0 %v971
        %1266 = vmatprep.subr.bf16.mxu0 0
        %1267 = vmatpush1.bf16.msra.mxu0 %v972
        %1268 = vmatprep.subr.bf16.mxu0 0
        %1269 = vmatpush1.bf16.msra.mxu0 %v973
        %1270 = vmatprep.subr.bf16.mxu0 0
        %1271 = vmatpush1.bf16.msra.mxu0 %v974
        %1272 = vmatprep.subr.bf16.mxu0 0
        %1273 = vmatpush1.bf16.msra.mxu0 %v975
        %1274 = vmatprep.subr.bf16.mxu0 0
        %1275 = vmatpush1.bf16.msra.mxu0 %v976
        %1276 = vmatprep.subr.bf16.mxu0 0
        %1277 = vmatpush1.bf16.msra.mxu0 %v977
        %1278 = vmatprep.subr.bf16.mxu0 0
        %1279 = vmatpush1.bf16.msra.mxu0 %v978
        %1280 = vmatprep.subr.bf16.mxu0 0
        %1281 = vmatpush1.bf16.msra.mxu0 %v979
        %1282 = vmatprep.subr.bf16.mxu0 0
        %1283 = vmatpush1.bf16.msra.mxu0 %v980
        %1284 = vmatprep.subr.bf16.mxu0 0
        %1285 = vmatpush1.bf16.msra.mxu0 %v981
        %1286 = vmatprep.subr.bf16.mxu0 0
        %1287 = vmatpush1.bf16.msra.mxu0 %v982
        %1288 = vmatprep.subr.bf16.mxu0 0
        %1289 = vmatpush1.bf16.msra.mxu0 %v983
        %1290 = vmatprep.subr.bf16.mxu0 0
        %1291 = vmatpush1.bf16.msra.mxu0 %v984
        %1292 = vmatprep.mubr.bf16.mxu0 %v465
        %1293 = vmatmul.mubr.bf16.gmra.mrb[0].mxu0 %v464
        %v1294 = vpop.f32.mrb[0].mxu0
        %v1295 = vadd.f32 %v1230, %v1294
        %v1296 = vpop.f32.mrb[0].mxu0
        %v1297 = vpop.f32.mrb[0].mxu0
        %v1298 = vadd.f32 %v1233, %v1297
        %v1299 = vpop.f32.mrb[0].mxu0
        %1300 = vmatprep.mubr.bf16.mxu0 %v471
        %1301 = vmatmul.mubr.bf16.gmra.mrb[0].mxu0 %v470
        %v1302 = vpop.f32.mrb[0].mxu0
        %v1303 = vadd.f32 %v1238, %v1302
        %v1304 = vpop.f32.mrb[0].mxu0
        %v1305 = vpop.f32.mrb[0].mxu0
        %v1306 = vadd.f32 %v1241, %v1305
        %v1307 = vpop.f32.mrb[0].mxu0
        %1308 = vmatprep.mubr.bf16.mxu0 %v477
        %1309 = vmatmul.mubr.bf16.gmra.mrb[0].mxu0 %v476
        %v1310 = vpop.f32.mrb[0].mxu0
        %v1311 = vadd.f32 %v1246, %v1310
        %v1312 = vpop.f32.mrb[0].mxu0
        %v1313 = vpop.f32.mrb[0].mxu0
        %v1314 = vadd.f32 %v1249, %v1313
        %v1315 = vpop.f32.mrb[0].mxu0
        %1316 = vmatprep.mubr.bf16.mxu0 %v483
        %1317 = vmatmul.mubr.bf16.gmra.mrb[0].mxu0 %v482
        %v1318 = vpop.f32.mrb[0].mxu0
        %v1319 = vadd.f32 %v1254, %v1318
        %v1320 = vpop.f32.mrb[0].mxu0
        %v1321 = vpop.f32.mrb[0].mxu0
        %v1322 = vadd.f32 %v1257, %v1321
        %v1323 = vpop.f32.mrb[0].mxu0
        %1324 = vdwg.mxu0
        %1325 = vmatprep.subr.bf16.mxu0 0
        %1326 = vmatpush1.bf16.msra.mxu0 %v985
        %1327 = vmatprep.subr.bf16.mxu0 0
        %1328 = vmatpush1.bf16.msra.mxu0 %v986
        %1329 = vmatprep.subr.bf16.mxu0 0
        %1330 = vmatpush1.bf16.msra.mxu0 %v987
        %1331 = vmatprep.subr.bf16.mxu0 0
        %1332 = vmatpush1.bf16.msra.mxu0 %v988
        %1333 = vmatprep.subr.bf16.mxu0 0
        %1334 = vmatpush1.bf16.msra.mxu0 %v989
        %1335 = vmatprep.subr.bf16.mxu0 0
        %1336 = vmatpush1.bf16.msra.mxu0 %v990
        %1337 = vmatprep.subr.bf16.mxu0 0
        %1338 = vmatpush1.bf16.msra.mxu0 %v991
        %1339 = vmatprep.subr.bf16.mxu0 0
        %1340 = vmatpush1.bf16.msra.mxu0 %v992
        %1341 = vmatprep.subr.bf16.mxu0 0
        %1342 = vmatpush1.bf16.msra.mxu0 0
        %1343 = vmatprep.subr.bf16.mxu0 0
        %1344 = vmatpush1.bf16.msra.mxu0 0
        %1345 = vmatprep.subr.bf16.mxu0 0
        %1346 = vmatpush1.bf16.msra.mxu0 0
        %1347 = vmatprep.subr.bf16.mxu0 0
        %1348 = vmatpush1.bf16.msra.mxu0 0
        %1349 = vmatprep.subr.bf16.mxu0 0
        %1350 = vmatpush1.bf16.msra.mxu0 0
        %1351 = vmatprep.subr.bf16.mxu0 0
        %1352 = vmatpush1.bf16.msra.mxu0 0
        %1353 = vmatprep.subr.bf16.mxu0 0
        %1354 = vmatpush1.bf16.msra.mxu0 0
        %1355 = vmatprep.subr.bf16.mxu0 0
        %1356 = vmatpush1.bf16.msra.mxu0 0
        %1357 = vmatprep.mubr.bf16.mxu0 0
        %1358 = vmatmul.mubr.bf16.gmra.mrb[0].mxu0 %v466
        %v1359 = vpop.f32.mrb[0].mxu0
        %v1360 = vadd.f32 %v1295, %v1359
        %v1361 = vpop.f32.mrb[0].mxu0
        %v1362 = vpop.f32.mrb[0].mxu0
        %v1363 = vadd.f32 %v1298, %v1362
        %v1364 = vpop.f32.mrb[0].mxu0
        %1365 = vmatprep.mubr.bf16.mxu0 0
        %1366 = vmatmul.mubr.bf16.gmra.mrb[0].mxu0 %v472
        %v1367 = vpop.f32.mrb[0].mxu0
        %v1368 = vadd.f32 %v1303, %v1367
        %v1369 = vpop.f32.mrb[0].mxu0
        %v1370 = vpop.f32.mrb[0].mxu0
        %v1371 = vadd.f32 %v1306, %v1370
        %v1372 = vpop.f32.mrb[0].mxu0
        %1373 = vmatprep.mubr.bf16.mxu0 0
        %1374 = vmatmul.mubr.bf16.gmra.mrb[0].mxu0 %v478
        %v1375 = vpop.f32.mrb[0].mxu0
        %v1376 = vadd.f32 %v1311, %v1375
        %v1377 = vpop.f32.mrb[0].mxu0
        %v1378 = vpop.f32.mrb[0].mxu0
        %v1379 = vadd.f32 %v1314, %v1378
        %v1380 = vpop.f32.mrb[0].mxu0
        %1381 = vmatprep.mubr.bf16.mxu0 0
        %1382 = vmatmul.mubr.bf16.gmra.mrb[0].mxu0 %v484
        %v1383 = vpop.f32.mrb[0].mxu0
        %v1384 = vadd.f32 %v1319, %v1383
        %v1385 = vpop.f32.mrb[0].mxu0
        %v1386 = vpop.f32.mrb[0].mxu0
        %v1387 = vadd.f32 %v1322, %v1386
        %v1388 = vpop.f32.mrb[0].mxu0
        %1389 = vdwg.mxu0
        %v1390 = vmax.f32 %v1360, 0.0
        %v1391 = vmax.f32 %v1363, 0.0
        %v1392 = vmax.f32 %v1368, 0.0
        %v1393 = vmax.f32 %v1371, 0.0
        %v1394 = vmax.f32 %v1376, 0.0
        %v1395 = vmax.f32 %v1379, 0.0
        %v1396 = vmax.f32 %v1384, 0.0
        %v1397 = vmax.f32 %v1387, 0.0
        %v1406 = vrot.slane %v1390, 7
        %v1407 = vrot.slane %v1391, 7
        %v1408 = vrot.slane %v1392, 7
        %v1409 = vrot.slane %v1393, 7
        %v1410 = vrot.slane %v1394, 7
        %v1411 = vrot.slane %v1395, 7
        %v1412 = vrot.slane %v1396, 7
        %v1413 = vrot.slane %v1397, 7
        %v1422 = vsel %vm352, 0.0, %v1406
        %v1423 = vsel %vm352, 0.0, %v1407
        %v1424 = vsel %vm352, 0.0, %v1408
        %v1425 = vsel %vm352, 0.0, %v1409
        %v1426 = vsel %vm352, 0.0, %v1410
        %v1427 = vsel %vm352, 0.0, %v1411
        %v1428 = vsel %vm352, 0.0, %v1412
        %v1429 = vsel %vm352, 0.0, %v1413
        %v1430 = vsel %vm352, %v1406, 0.0
        %v1431 = vsel %vm352, %v1407, 0.0
        %v1432 = vsel %vm352, %v1408, 0.0
        %v1433 = vsel %vm352, %v1409, 0.0
        %v1434 = vsel %vm352, %v1410, 0.0
        %v1435 = vsel %vm352, %v1411, 0.0
        %v1436 = vsel %vm352, %v1412, 0.0
        %v1437 = vsel %vm352, %v1413, 0.0
        %v1452 = vrot.slane %v1422, 1
        %v1453 = vrot.slane %v1430, 1
        %v1454 = vsel %vm384, %v1452, %v1453
        %v1455 = vrot.slane %v1423, 1
        %v1456 = vrot.slane %v1431, 1
        %v1457 = vsel %vm384, %v1455, %v1456
        %v1458 = vrot.slane %v1424, 1
        %v1459 = vrot.slane %v1432, 1
        %v1460 = vsel %vm384, %v1458, %v1459
        %v1461 = vrot.slane %v1425, 1
        %v1462 = vrot.slane %v1433, 1
        %v1463 = vsel %vm384, %v1461, %v1462
        %v1464 = vrot.slane %v1426, 1
        %v1465 = vrot.slane %v1434, 1
        %v1466 = vsel %vm384, %v1464, %v1465
        %v1467 = vrot.slane %v1427, 1
        %v1468 = vrot.slane %v1435, 1
        %v1469 = vsel %vm384, %v1467, %v1468
        %v1470 = vrot.slane %v1428, 1
        %v1471 = vrot.slane %v1436, 1
        %v1472 = vsel %vm384, %v1470, %v1471
        %v1480 = vrot.slane %v1422, 2
        %v1481 = vrot.slane %v1430, 2
        %v1482 = vsel %vm416, %v1480, %v1481
        %v1483 = vrot.slane %v1423, 2
        %v1484 = vrot.slane %v1431, 2
        %v1485 = vsel %vm416, %v1483, %v1484
        %v1486 = vrot.slane %v1424, 2
        %v1487 = vrot.slane %v1432, 2
        %v1488 = vsel %vm416, %v1486, %v1487
        %v1489 = vrot.slane %v1425, 2
        %v1490 = vrot.slane %v1433, 2
        %v1491 = vsel %vm416, %v1489, %v1490
        %v1492 = vrot.slane %v1426, 2
        %v1493 = vrot.slane %v1434, 2
        %v1494 = vsel %vm416, %v1492, %v1493
        %v1495 = vrot.slane %v1427, 2
        %v1496 = vrot.slane %v1435, 2
        %v1497 = vsel %vm416, %v1495, %v1496
        %v1498 = vrot.slane %v1428, 2
        %v1499 = vrot.slane %v1436, 2
        %v1500 = vsel %vm416, %v1498, %v1499
        %v1510 = vrot.slane %v1429, 1
        %v1511 = vrot.slane %v1437, 1
        %v1512 = vsel %vm384, %v1510, %v1511
        %v1514 = vrot.slane %v1429, 2
        %v1515 = vrot.slane %v1437, 2
        %v1516 = vsel %vm416, %v1514, %v1515
        %v1518 = vpack.c.bf16 %v1422, 0.0
        %v1519 = vpack.c.bf16 %v1454, %v386
        %v1520 = vpack.c.bf16 %v1482, %v418
        %v1521 = vpack.c.bf16 %v1423, %v1422
        %v1522 = vpack.c.bf16 %v1457, %v1454
        %v1523 = vpack.c.bf16 %v1485, %v1482
        %v1524 = vpack.c.bf16 %v1424, %v1423
        %v1525 = vpack.c.bf16 %v1460, %v1457
        %v1526 = vpack.c.bf16 %v1488, %v1485
        %v1527 = vpack.c.bf16 %v1425, %v1424
        %v1528 = vpack.c.bf16 %v1463, %v1460
        %v1529 = vpack.c.bf16 %v1491, %v1488
        %v1530 = vpack.c.bf16 %v1426, %v1425
        %v1531 = vpack.c.bf16 %v1466, %v1463
        %v1532 = vpack.c.bf16 %v1494, %v1491
        %v1533 = vpack.c.bf16 %v1427, %v1426
        %v1534 = vpack.c.bf16 %v1469, %v1466
        %v1535 = vpack.c.bf16 %v1497, %v1494
        %v1536 = vpack.c.bf16 %v1428, %v1427
        %v1537 = vpack.c.bf16 %v1472, %v1469
        %v1538 = vpack.c.bf16 %v1500, %v1497
        %v1539 = vpack.c.bf16 %v1429, %v1428
        %v1540 = vpack.c.bf16 %v1512, %v1472
        %v1541 = vpack.c.bf16 %v1516, %v1500
        %v1542 = vpack.c.bf16 0.0, %v1429
        %v1543 = vpack.c.bf16 %v386, %v1512
        %v1544 = vpack.c.bf16 %v418, %v1516
        %s1545 = scalar_lea.vmem [#allocation7], 576
        %v1546 = vld [vmem:[%s1545] sm:$0xf]
        %v1547 = vld [vmem:[%s1545 + $0x4] sm:$0xf]
        %v1548 = vld [vmem:[%s1545 + $0x8] sm:$0xf]
        %v1549 = vld [vmem:[%s1545 + $0xc] sm:$0xf]
        %v1550 = vld [vmem:[%s1545 + $0x10] sm:$0xf]
        %v1551 = vld [vmem:[%s1545 + $0x14] sm:$0xf]
        %v1552 = vld [vmem:[%s1545 + $0x18] sm:$0xf]
        %v1553 = vld [vmem:[%s1545 + $0x1c] sm:$0xf]
        %v1554 = vld [vmem:[%s1545 + $0x20] sm:$0xf]
        %v1555 = vld [vmem:[%s1545 + $0x24] sm:$0xf]
        %v1556 = vld [vmem:[%s1545 + $0x28] sm:$0xf]
        %v1557 = vld [vmem:[%s1545 + $0x2c] sm:$0xf]
        %v1558 = vld [vmem:[%s1545 + $0x30] sm:$0xf]
        %v1559 = vld [vmem:[%s1545 + $0x34] sm:$0xf]
        %v1560 = vld [vmem:[%s1545 + $0x38] sm:$0xf]
        %v1561 = vld [vmem:[%s1545 + $0x3c] sm:$0xf]
        %v1562 = vld [vmem:[%s1545 + $0x40] sm:$0xf]
        %v1563 = vld [vmem:[%s1545 + $0x44] sm:$0xf]
        %v1564 = vld [vmem:[%s1545 + $0x48] sm:$0xf]
        %v1565 = vld [vmem:[%s1545 + $0x4c] sm:$0xf]
        %v1566 = vld [vmem:[%s1545 + $0x50] sm:$0xf]
        %v1567 = vld [vmem:[%s1545 + $0x54] sm:$0xf]
        %v1568 = vld [vmem:[%s1545 + $0x58] sm:$0xf]
        %v1569 = vld [vmem:[%s1545 + $0x5c] sm:$0xf]
        %v1570 = vld [vmem:[%s1545 + $0x60] sm:$0xf]
        %v1571 = vld [vmem:[%s1545 + $0x64] sm:$0xf]
        %v1572 = vld [vmem:[%s1545 + $0x68] sm:$0xf]
        %v1573 = vld [vmem:[%s1545 + $0x6c] sm:$0xf]
        %v1574 = vld [vmem:[%s1545 + $0x70] sm:$0xf]
        %v1575 = vld [vmem:[%s1545 + $0x74] sm:$0xf]
        %v1576 = vld [vmem:[%s1545 + $0x78] sm:$0xf]
        %v1577 = vld [vmem:[%s1545 + $0x7c] sm:$0xf]
        %v1578 = vld [vmem:[%s1545 + $0x80] sm:$0xf]
        %v1579 = vld [vmem:[%s1545 + $0x84] sm:$0xf]
        %v1580 = vld [vmem:[%s1545 + $0x88] sm:$0xf]
        %v1581 = vld [vmem:[%s1545 + $0x8c] sm:$0xf]
        %v1582 = vld [vmem:[%s1545 + $0x90] sm:$0xf]
        %v1583 = vld [vmem:[%s1545 + $0x94] sm:$0xf]
        %v1584 = vld [vmem:[%s1545 + $0x98] sm:$0xf]
        %v1585 = vld [vmem:[%s1545 + $0x9c] sm:$0xf]
        %v1586 = vld [vmem:[%s1545 + $0xa0] sm:$0xf]
        %v1587 = vld [vmem:[%s1545 + $0xa4] sm:$0xf]
        %v1588 = vld [vmem:[%s1545 + $0xa8] sm:$0xf]
        %v1589 = vld [vmem:[%s1545 + $0xac] sm:$0xf]
        %v1590 = vld [vmem:[%s1545 + $0xb0] sm:$0xf]
        %v1591 = vld [vmem:[%s1545 + $0xb4] sm:$0xf]
        %v1592 = vld [vmem:[%s1545 + $0xb8] sm:$0xf]
        %v1593 = vld [vmem:[%s1545 + $0xbc] sm:$0xf]
        %v1594 = vld [vmem:[%s1545 + $0xc0] sm:$0xf]
        %v1595 = vld [vmem:[%s1545 + $0xc4] sm:$0xf]
        %v1596 = vld [vmem:[%s1545 + $0xc8] sm:$0xf]
        %v1597 = vld [vmem:[%s1545 + $0xcc] sm:$0xf]
        %v1598 = vld [vmem:[%s1545 + $0xd0] sm:$0xf]
        %v1599 = vld [vmem:[%s1545 + $0xd4] sm:$0xf]
        %v1600 = vld [vmem:[%s1545 + $0xd8] sm:$0xf]
        %v1601 = vld [vmem:[%s1545 + $0xdc] sm:$0xf]
        %v1602 = vld [vmem:[%s1545 + $0xe0] sm:$0xf]
        %v1603 = vld [vmem:[%s1545 + $0xe4] sm:$0xf]
        %v1604 = vld [vmem:[%s1545 + $0xe8] sm:$0xf]
        %v1605 = vld [vmem:[%s1545 + $0xec] sm:$0xf]
        %v1606 = vld [vmem:[%s1545 + $0xf0] sm:$0xf]
        %v1607 = vld [vmem:[%s1545 + $0xf4] sm:$0xf]
        %v1608 = vld [vmem:[%s1545 + $0xf8] sm:$0xf]
        %v1609 = vld [vmem:[%s1545 + $0xfc] sm:$0xf]
        %v1610 = vld [vmem:[%s1545 + $0x100] sm:$0xf]
        %v1611 = vld [vmem:[%s1545 + $0x104] sm:$0xf]
        %v1612 = vld [vmem:[%s1545 + $0x108] sm:$0xf]
        %v1613 = vld [vmem:[%s1545 + $0x10c] sm:$0xf]
        %v1614 = vld [vmem:[%s1545 + $0x110] sm:$0xf]
        %v1615 = vld [vmem:[%s1545 + $0x114] sm:$0xf]
        %v1616 = vld [vmem:[%s1545 + $0x118] sm:$0xf]
        %v1617 = vld [vmem:[%s1545 + $0x11c] sm:$0xf]
        %v1618 = vld [vmem:[%s1545 + $0x120] sm:$0xf]
        %v1619 = vld [vmem:[%s1545 + $0x124] sm:$0xf]
        %v1620 = vld [vmem:[%s1545 + $0x128] sm:$0xf]
        %v1621 = vld [vmem:[%s1545 + $0x12c] sm:$0xf]
        %v1622 = vld [vmem:[%s1545 + $0x130] sm:$0xf]
        %v1623 = vld [vmem:[%s1545 + $0x134] sm:$0xf]
        %v1624 = vld [vmem:[%s1545 + $0x138] sm:$0xf]
        %v1625 = vld [vmem:[%s1545 + $0x13c] sm:$0xf]
        %v1626 = vld [vmem:[%s1545 + $0x140] sm:$0xf]
        %v1627 = vld [vmem:[%s1545 + $0x144] sm:$0xf]
        %v1628 = vld [vmem:[%s1545 + $0x148] sm:$0xf]
        %v1629 = vld [vmem:[%s1545 + $0x14c] sm:$0xf]
        %v1630 = vld [vmem:[%s1545 + $0x150] sm:$0xf]
        %v1631 = vld [vmem:[%s1545 + $0x154] sm:$0xf]
        %v1632 = vld [vmem:[%s1545 + $0x158] sm:$0xf]
        %v1633 = vld [vmem:[%s1545 + $0x15c] sm:$0xf]
        %v1634 = vld [vmem:[%s1545 + $0x160] sm:$0xf]
        %v1635 = vld [vmem:[%s1545 + $0x164] sm:$0xf]
        %v1636 = vld [vmem:[%s1545 + $0x168] sm:$0xf]
        %v1637 = vld [vmem:[%s1545 + $0x16c] sm:$0xf]
        %v1638 = vld [vmem:[%s1545 + $0x170] sm:$0xf]
        %v1639 = vld [vmem:[%s1545 + $0x174] sm:$0xf]
        %v1640 = vld [vmem:[%s1545 + $0x178] sm:$0xf]
        %v1641 = vld [vmem:[%s1545 + $0x17c] sm:$0xf]
        %v1642 = vld [vmem:[%s1545 + $0x180] sm:$0xf]
        %v1643 = vld [vmem:[%s1545 + $0x184] sm:$0xf]
        %v1644 = vld [vmem:[%s1545 + $0x188] sm:$0xf]
        %v1645 = vld [vmem:[%s1545 + $0x18c] sm:$0xf]
        %v1646 = vld [vmem:[%s1545 + $0x190] sm:$0xf]
        %v1647 = vld [vmem:[%s1545 + $0x194] sm:$0xf]
        %v1648 = vld [vmem:[%s1545 + $0x198] sm:$0xf]
        %v1649 = vld [vmem:[%s1545 + $0x19c] sm:$0xf]
        %v1650 = vld [vmem:[%s1545 + $0x1a0] sm:$0xf]
        %v1651 = vld [vmem:[%s1545 + $0x1a4] sm:$0xf]
        %v1652 = vld [vmem:[%s1545 + $0x1a8] sm:$0xf]
        %v1653 = vld [vmem:[%s1545 + $0x1ac] sm:$0xf]
        %v1654 = vld [vmem:[%s1545 + $0x1b0] sm:$0xf]
        %v1655 = vld [vmem:[%s1545 + $0x1b4] sm:$0xf]
        %v1656 = vld [vmem:[%s1545 + $0x1b8] sm:$0xf]
        %v1657 = vld [vmem:[%s1545 + $0x1bc] sm:$0xf]
        %v1658 = vld [vmem:[%s1545 + $0x1c0] sm:$0xf]
        %v1659 = vld [vmem:[%s1545 + $0x1c4] sm:$0xf]
        %v1660 = vld [vmem:[%s1545 + $0x1c8] sm:$0xf]
        %v1661 = vld [vmem:[%s1545 + $0x1cc] sm:$0xf]
        %v1662 = vld [vmem:[%s1545 + $0x1d0] sm:$0xf]
        %v1663 = vld [vmem:[%s1545 + $0x1d4] sm:$0xf]
        %v1664 = vld [vmem:[%s1545 + $0x1d8] sm:$0xf]
        %v1665 = vld [vmem:[%s1545 + $0x1dc] sm:$0xf]
        %v1666 = vld [vmem:[%s1545 + $0x1e0] sm:$0xf]
        %v1667 = vld [vmem:[%s1545 + $0x1e4] sm:$0xf]
        %v1668 = vld [vmem:[%s1545 + $0x1e8] sm:$0xf]
        %v1669 = vld [vmem:[%s1545 + $0x1ec] sm:$0xf]
        %v1670 = vld [vmem:[%s1545 + $0x1f0] sm:$0xf]
        %v1671 = vld [vmem:[%s1545 + $0x1f4] sm:$0xf]
        %v1672 = vld [vmem:[%s1545 + $0x1f8] sm:$0xf]
        %v1673 = vld [vmem:[%s1545 + $0x1fc] sm:$0xf]
        %v1674 = vld [vmem:[%s1545 + $0x200] sm:$0xf]
        %v1675 = vld [vmem:[%s1545 + $0x204] sm:$0xf]
        %v1676 = vld [vmem:[%s1545 + $0x208] sm:$0xf]
        %v1677 = vld [vmem:[%s1545 + $0x20c] sm:$0xf]
        %v1678 = vld [vmem:[%s1545 + $0x210] sm:$0xf]
        %v1679 = vld [vmem:[%s1545 + $0x214] sm:$0xf]
        %v1680 = vld [vmem:[%s1545 + $0x218] sm:$0xf]
        %v1681 = vld [vmem:[%s1545 + $0x21c] sm:$0xf]
        %v1682 = vld [vmem:[%s1545 + $0x220] sm:$0xf]
        %v1683 = vld [vmem:[%s1545 + $0x224] sm:$0xf]
        %v1684 = vld [vmem:[%s1545 + $0x228] sm:$0xf]
        %v1685 = vld [vmem:[%s1545 + $0x22c] sm:$0xf]
        %v1686 = vld [vmem:[%s1545 + $0x230] sm:$0xf]
        %v1687 = vld [vmem:[%s1545 + $0x234] sm:$0xf]
        %v1688 = vld [vmem:[%s1545 + $0x238] sm:$0xf]
        %v1689 = vld [vmem:[%s1545 + $0x23c] sm:$0xf]
        %v1690 = vlaneseq
        %v1691 = vshrl.u32 %v1690, 7
        %v1692 = vsub.s32 1, %v1691
        %v1693 = vrot.slane %v319, %v1692
        %v1838 = vunpack.c.l.b16 %v1546
        %v1839 = vunpack.c.l.b16 %v1547
        %v1840 = vunpack.c.l.b16 %v1548
        %v1841 = vunpack.c.l.b16 %v1549
        %v1842 = vunpack.c.l.b16 %v1550
        %v1843 = vunpack.c.l.b16 %v1551
        %v1844 = vunpack.c.l.b16 %v1552
        %v1845 = vunpack.c.l.b16 %v1553
        %v1846 = vunpack.c.l.b16 %v1554
        %v1847 = vunpack.c.l.b16 %v1555
        %v1848 = vunpack.c.l.b16 %v1556
        %v1849 = vunpack.c.l.b16 %v1557
        %v1850 = vunpack.c.l.b16 %v1558
        %v1851 = vunpack.c.l.b16 %v1559
        %v1852 = vunpack.c.l.b16 %v1560
        %v1853 = vunpack.c.l.b16 %v1561
        %v1854 = vunpack.c.l.b16 %v1562
        %v1855 = vunpack.c.l.b16 %v1563
        %v1856 = vunpack.c.l.b16 %v1564
        %v1857 = vunpack.c.l.b16 %v1565
        %v1858 = vunpack.c.l.b16 %v1566
        %v1859 = vunpack.c.l.b16 %v1567
        %v1860 = vunpack.c.l.b16 %v1568
        %v1861 = vunpack.c.l.b16 %v1569
        %v1862 = vunpack.c.l.b16 %v1570
        %v1863 = vunpack.c.l.b16 %v1571
        %v1864 = vunpack.c.l.b16 %v1572
        %v1865 = vunpack.c.l.b16 %v1573
        %v1866 = vunpack.c.l.b16 %v1574
        %v1867 = vunpack.c.l.b16 %v1575
        %v1868 = vunpack.c.l.b16 %v1576
        %v1869 = vunpack.c.l.b16 %v1577
        %v1870 = vunpack.c.l.b16 %v1578
        %v1871 = vunpack.c.l.b16 %v1579
        %v1872 = vunpack.c.l.b16 %v1580
        %v1873 = vunpack.c.l.b16 %v1581
        %v1874 = vunpack.c.l.b16 %v1582
        %v1875 = vunpack.c.l.b16 %v1583
        %v1876 = vunpack.c.l.b16 %v1584
        %v1877 = vunpack.c.l.b16 %v1585
        %v1878 = vunpack.c.l.b16 %v1586
        %v1879 = vunpack.c.l.b16 %v1587
        %v1880 = vunpack.c.l.b16 %v1588
        %v1881 = vunpack.c.l.b16 %v1589
        %v1882 = vunpack.c.l.b16 %v1590
        %v1883 = vunpack.c.l.b16 %v1591
        %v1884 = vunpack.c.l.b16 %v1592
        %v1885 = vunpack.c.l.b16 %v1593
        %v1886 = vunpack.c.l.b16 %v1594
        %v1887 = vunpack.c.l.b16 %v1595
        %v1888 = vunpack.c.l.b16 %v1596
        %v1889 = vunpack.c.l.b16 %v1597
        %v1890 = vunpack.c.l.b16 %v1598
        %v1891 = vunpack.c.l.b16 %v1599
        %v1892 = vunpack.c.l.b16 %v1600
        %v1893 = vunpack.c.l.b16 %v1601
        %v1894 = vunpack.c.l.b16 %v1602
        %v1895 = vunpack.c.l.b16 %v1603
        %v1896 = vunpack.c.l.b16 %v1604
        %v1897 = vunpack.c.l.b16 %v1605
        %v1898 = vunpack.c.l.b16 %v1606
        %v1899 = vunpack.c.l.b16 %v1607
        %v1900 = vunpack.c.l.b16 %v1608
        %v1901 = vunpack.c.l.b16 %v1609
        %v1902 = vunpack.c.l.b16 %v1610
        %v1903 = vunpack.c.l.b16 %v1611
        %v1904 = vunpack.c.l.b16 %v1612
        %v1905 = vunpack.c.l.b16 %v1613
        %v1906 = vunpack.c.l.b16 %v1614
        %v1907 = vunpack.c.l.b16 %v1615
        %v1908 = vunpack.c.l.b16 %v1616
        %v1909 = vunpack.c.l.b16 %v1617
        %v1910 = vunpack.c.l.b16 %v1618
        %v1911 = vunpack.c.l.b16 %v1619
        %v1912 = vunpack.c.l.b16 %v1620
        %v1913 = vunpack.c.l.b16 %v1621
        %v1914 = vunpack.c.l.b16 %v1622
        %v1915 = vunpack.c.l.b16 %v1623
        %v1916 = vunpack.c.l.b16 %v1624
        %v1917 = vunpack.c.l.b16 %v1625
        %v1918 = vunpack.c.l.b16 %v1626
        %v1919 = vunpack.c.l.b16 %v1627
        %v1920 = vunpack.c.l.b16 %v1628
        %v1921 = vunpack.c.l.b16 %v1629
        %v1922 = vunpack.c.l.b16 %v1630
        %v1923 = vunpack.c.l.b16 %v1631
        %v1924 = vunpack.c.l.b16 %v1632
        %v1925 = vunpack.c.l.b16 %v1633
        %v1926 = vunpack.c.l.b16 %v1634
        %v1927 = vunpack.c.l.b16 %v1635
        %v1928 = vunpack.c.l.b16 %v1636
        %v1929 = vunpack.c.l.b16 %v1637
        %v1930 = vunpack.c.l.b16 %v1638
        %v1931 = vunpack.c.l.b16 %v1639
        %v1932 = vunpack.c.l.b16 %v1640
        %v1933 = vunpack.c.l.b16 %v1641
        %v1934 = vunpack.c.l.b16 %v1642
        %v1935 = vunpack.c.l.b16 %v1643
        %v1936 = vunpack.c.l.b16 %v1644
        %v1937 = vunpack.c.l.b16 %v1645
        %v1938 = vunpack.c.l.b16 %v1646
        %v1939 = vunpack.c.l.b16 %v1647
        %v1940 = vunpack.c.l.b16 %v1648
        %v1941 = vunpack.c.l.b16 %v1649
        %v1942 = vunpack.c.l.b16 %v1650
        %v1943 = vunpack.c.l.b16 %v1651
        %v1944 = vunpack.c.l.b16 %v1652
        %v1945 = vunpack.c.l.b16 %v1653
        %v1946 = vunpack.c.l.b16 %v1654
        %v1947 = vunpack.c.l.b16 %v1655
        %v1948 = vunpack.c.l.b16 %v1656
        %v1949 = vunpack.c.l.b16 %v1657
        %v1950 = vunpack.c.l.b16 %v1658
        %v1951 = vunpack.c.l.b16 %v1659
        %v1952 = vunpack.c.l.b16 %v1660
        %v1953 = vunpack.c.l.b16 %v1661
        %v1954 = vunpack.c.l.b16 %v1662
        %v1955 = vunpack.c.l.b16 %v1663
        %v1956 = vunpack.c.l.b16 %v1664
        %v1957 = vunpack.c.l.b16 %v1665
        %v1958 = vunpack.c.l.b16 %v1666
        %v1959 = vunpack.c.l.b16 %v1667
        %v1960 = vunpack.c.l.b16 %v1668
        %v1961 = vunpack.c.l.b16 %v1669
        %v1962 = vunpack.c.l.b16 %v1670
        %v1963 = vunpack.c.l.b16 %v1671
        %v1964 = vunpack.c.l.b16 %v1672
        %v1965 = vunpack.c.l.b16 %v1673
        %v1966 = vunpack.c.l.b16 %v1674
        %v1967 = vunpack.c.l.b16 %v1675
        %v1968 = vunpack.c.l.b16 %v1676
        %v1969 = vunpack.c.l.b16 %v1677
        %v1970 = vunpack.c.l.b16 %v1678
        %v1971 = vunpack.c.l.b16 %v1679
        %v1972 = vunpack.c.l.b16 %v1680
        %v1973 = vunpack.c.l.b16 %v1681
        %v1974 = vunpack.c.l.b16 %v1682
        %v1975 = vunpack.c.l.b16 %v1683
        %v1976 = vunpack.c.l.b16 %v1684
        %v1977 = vunpack.c.l.b16 %v1685
        %v1978 = vunpack.c.l.b16 %v1686
        %v1979 = vunpack.c.l.b16 %v1687
        %v1980 = vunpack.c.l.b16 %v1688
        %v1981 = vunpack.c.l.b16 %v1689
        %v1982 = vpack.c.b16 %v1839, %v1838
        %v1983 = vpack.c.b16 %v1841, %v1840
        %v1984 = vpack.c.b16 %v1843, %v1842
        %v1985 = vpack.c.b16 %v1845, %v1844
        %v1986 = vpack.c.b16 %v1847, %v1846
        %v1987 = vpack.c.b16 %v1849, %v1848
        %v1988 = vpack.c.b16 %v1851, %v1850
        %v1989 = vpack.c.b16 %v1853, %v1852
        %v1990 = vpack.c.b16 %v1855, %v1854
        %v1991 = vpack.c.b16 %v1857, %v1856
        %v1992 = vpack.c.b16 %v1859, %v1858
        %v1993 = vpack.c.b16 %v1861, %v1860
        %v1994 = vpack.c.b16 %v1863, %v1862
        %v1995 = vpack.c.b16 %v1865, %v1864
        %v1996 = vpack.c.b16 %v1867, %v1866
        %v1997 = vpack.c.b16 %v1869, %v1868
        %v1998 = vpack.c.b16 %v1871, %v1870
        %v1999 = vpack.c.b16 %v1873, %v1872
        %v2000 = vpack.c.b16 %v1875, %v1874
        %v2001 = vpack.c.b16 %v1877, %v1876
        %v2002 = vpack.c.b16 %v1879, %v1878
        %v2003 = vpack.c.b16 %v1881, %v1880
        %v2004 = vpack.c.b16 %v1883, %v1882
        %v2005 = vpack.c.b16 %v1885, %v1884
        %v2006 = vpack.c.b16 %v1887, %v1886
        %v2007 = vpack.c.b16 %v1889, %v1888
        %v2008 = vpack.c.b16 %v1891, %v1890
        %v2009 = vpack.c.b16 %v1893, %v1892
        %v2010 = vpack.c.b16 %v1895, %v1894
        %v2011 = vpack.c.b16 %v1897, %v1896
        %v2012 = vpack.c.b16 %v1899, %v1898
        %v2013 = vpack.c.b16 %v1901, %v1900
        %v2014 = vpack.c.b16 %v1903, %v1902
        %v2015 = vpack.c.b16 %v1905, %v1904
        %v2016 = vpack.c.b16 %v1907, %v1906
        %v2017 = vpack.c.b16 %v1909, %v1908
        %v2018 = vpack.c.b16 %v1911, %v1910
        %v2019 = vpack.c.b16 %v1913, %v1912
        %v2020 = vpack.c.b16 %v1915, %v1914
        %v2021 = vpack.c.b16 %v1917, %v1916
        %v2022 = vpack.c.b16 %v1919, %v1918
        %v2023 = vpack.c.b16 %v1921, %v1920
        %v2024 = vpack.c.b16 %v1923, %v1922
        %v2025 = vpack.c.b16 %v1925, %v1924
        %v2026 = vpack.c.b16 %v1927, %v1926
        %v2027 = vpack.c.b16 %v1929, %v1928
        %v2028 = vpack.c.b16 %v1931, %v1930
        %v2029 = vpack.c.b16 %v1933, %v1932
        %v2030 = vpack.c.b16 %v1935, %v1934
        %v2031 = vpack.c.b16 %v1937, %v1936
        %v2032 = vpack.c.b16 %v1939, %v1938
        %v2033 = vpack.c.b16 %v1941, %v1940
        %v2034 = vpack.c.b16 %v1943, %v1942
        %v2035 = vpack.c.b16 %v1945, %v1944
        %v2036 = vpack.c.b16 %v1947, %v1946
        %v2037 = vpack.c.b16 %v1949, %v1948
        %v2038 = vpack.c.b16 %v1951, %v1950
        %v2039 = vpack.c.b16 %v1953, %v1952
        %v2040 = vpack.c.b16 %v1955, %v1954
        %v2041 = vpack.c.b16 %v1957, %v1956
        %v2042 = vpack.c.b16 %v1959, %v1958
        %v2043 = vpack.c.b16 %v1961, %v1960
        %v2044 = vpack.c.b16 %v1963, %v1962
        %v2045 = vpack.c.b16 %v1965, %v1964
        %v2046 = vpack.c.b16 %v1967, %v1966
        %v2047 = vpack.c.b16 %v1969, %v1968
        %v2048 = vpack.c.b16 %v1971, %v1970
        %v2049 = vpack.c.b16 %v1973, %v1972
        %v2050 = vpack.c.b16 %v1975, %v1974
        %v2051 = vpack.c.b16 %v1977, %v1976
        %v2052 = vpack.c.b16 %v1979, %v1978
        %v2053 = vpack.c.b16 %v1981, %v1980
        %2126 = vmatprep.subr.bf16.mxu0 0
        %2127 = vmatpush1.bf16.msra.mxu0 %v1982
        %2128 = vmatprep.subr.bf16.mxu0 0
        %2129 = vmatpush1.bf16.msra.mxu0 %v1983
        %2130 = vmatprep.subr.bf16.mxu0 0
        %2131 = vmatpush1.bf16.msra.mxu0 %v1984
        %2132 = vmatprep.subr.bf16.mxu0 0
        %2133 = vmatpush1.bf16.msra.mxu0 %v1985
        %2134 = vmatprep.subr.bf16.mxu0 0
        %2135 = vmatpush1.bf16.msra.mxu0 %v1986
        %2136 = vmatprep.subr.bf16.mxu0 0
        %2137 = vmatpush1.bf16.msra.mxu0 %v1987
        %2138 = vmatprep.subr.bf16.mxu0 0
        %2139 = vmatpush1.bf16.msra.mxu0 %v1988
        %2140 = vmatprep.subr.bf16.mxu0 0
        %2141 = vmatpush1.bf16.msra.mxu0 %v1989
        %2142 = vmatprep.subr.bf16.mxu0 0
        %2143 = vmatpush1.bf16.msra.mxu0 %v1990
        %2144 = vmatprep.subr.bf16.mxu0 0
        %2145 = vmatpush1.bf16.msra.mxu0 %v1991
        %2146 = vmatprep.subr.bf16.mxu0 0
        %2147 = vmatpush1.bf16.msra.mxu0 %v1992
        %2148 = vmatprep.subr.bf16.mxu0 0
        %2149 = vmatpush1.bf16.msra.mxu0 %v1993
        %2150 = vmatprep.subr.bf16.mxu0 0
        %2151 = vmatpush1.bf16.msra.mxu0 %v1994
        %2152 = vmatprep.subr.bf16.mxu0 0
        %2153 = vmatpush1.bf16.msra.mxu0 %v1995
        %2154 = vmatprep.subr.bf16.mxu0 0
        %2155 = vmatpush1.bf16.msra.mxu0 %v1996
        %2156 = vmatprep.subr.bf16.mxu0 0
        %2157 = vmatpush1.bf16.msra.mxu0 %v1997
        %2158 = vmatprep.mubr.bf16.mxu0 %v1519
        %2159 = vmatmul.mubr.bf16.gmra.mrb[0].mxu0 %v1518
        %v2160 = vpop.f32.mrb[0].mxu0
        %v2161 = vadd.f32 %v1693, %v2160
        %v2162 = vpop.f32.mrb[0].mxu0
        %v2163 = vpop.f32.mrb[0].mxu0
        %v2164 = vadd.f32 %v1693, %v2163
        %v2165 = vpop.f32.mrb[0].mxu0
        %2166 = vmatprep.mubr.bf16.mxu0 %v1525
        %2167 = vmatmul.mubr.bf16.gmra.mrb[0].mxu0 %v1524
        %v2168 = vpop.f32.mrb[0].mxu0
        %v2169 = vadd.f32 %v1693, %v2168
        %v2170 = vpop.f32.mrb[0].mxu0
        %v2171 = vpop.f32.mrb[0].mxu0
        %v2172 = vadd.f32 %v1693, %v2171
        %v2173 = vpop.f32.mrb[0].mxu0
        %2174 = vmatprep.mubr.bf16.mxu0 %v1531
        %2175 = vmatmul.mubr.bf16.gmra.mrb[0].mxu0 %v1530
        %v2176 = vpop.f32.mrb[0].mxu0
        %v2177 = vadd.f32 %v1693, %v2176
        %v2178 = vpop.f32.mrb[0].mxu0
        %v2179 = vpop.f32.mrb[0].mxu0
        %v2180 = vadd.f32 %v1693, %v2179
        %v2181 = vpop.f32.mrb[0].mxu0
        %2182 = vmatprep.mubr.bf16.mxu0 %v1537
        %2183 = vmatmul.mubr.bf16.gmra.mrb[0].mxu0 %v1536
        %v2184 = vpop.f32.mrb[0].mxu0
        %v2185 = vadd.f32 %v1693, %v2184
        %v2186 = vpop.f32.mrb[0].mxu0
        %v2187 = vpop.f32.mrb[0].mxu0
        %v2188 = vadd.f32 %v1693, %v2187
        %v2189 = vpop.f32.mrb[0].mxu0
        %2190 = vdwg.mxu0
        %2191 = vmatprep.subr.bf16.mxu0 0
        %2192 = vmatpush1.bf16.msra.mxu0 %v1998
        %2193 = vmatprep.subr.bf16.mxu0 0
        %2194 = vmatpush1.bf16.msra.mxu0 %v1999
        %2195 = vmatprep.subr.bf16.mxu0 0
        %2196 = vmatpush1.bf16.msra.mxu0 %v2000
        %2197 = vmatprep.subr.bf16.mxu0 0
        %2198 = vmatpush1.bf16.msra.mxu0 %v2001
        %2199 = vmatprep.subr.bf16.mxu0 0
        %2200 = vmatpush1.bf16.msra.mxu0 %v2002
        %2201 = vmatprep.subr.bf16.mxu0 0
        %2202 = vmatpush1.bf16.msra.mxu0 %v2003
        %2203 = vmatprep.subr.bf16.mxu0 0
        %2204 = vmatpush1.bf16.msra.mxu0 %v2004
        %2205 = vmatprep.subr.bf16.mxu0 0
        %2206 = vmatpush1.bf16.msra.mxu0 %v2005
        %2207 = vmatprep.subr.bf16.mxu0 0
        %2208 = vmatpush1.bf16.msra.mxu0 %v2006
        %2209 = vmatprep.subr.bf16.mxu0 0
        %2210 = vmatpush1.bf16.msra.mxu0 %v2007
        %2211 = vmatprep.subr.bf16.mxu0 0
        %2212 = vmatpush1.bf16.msra.mxu0 %v2008
        %2213 = vmatprep.subr.bf16.mxu0 0
        %2214 = vmatpush1.bf16.msra.mxu0 %v2009
        %2215 = vmatprep.subr.bf16.mxu0 0
        %2216 = vmatpush1.bf16.msra.mxu0 %v2010
        %2217 = vmatprep.subr.bf16.mxu0 0
        %2218 = vmatpush1.bf16.msra.mxu0 %v2011
        %2219 = vmatprep.subr.bf16.mxu0 0
        %2220 = vmatpush1.bf16.msra.mxu0 %v2012
        %2221 = vmatprep.subr.bf16.mxu0 0
        %2222 = vmatpush1.bf16.msra.mxu0 %v2013
        %2223 = vmatprep.mubr.bf16.mxu0 %v1521
        %2224 = vmatmul.mubr.bf16.gmra.mrb[0].mxu0 %v1520
        %v2225 = vpop.f32.mrb[0].mxu0
        %v2226 = vadd.f32 %v2161, %v2225
        %v2227 = vpop.f32.mrb[0].mxu0
        %v2228 = vpop.f32.mrb[0].mxu0
        %v2229 = vadd.f32 %v2164, %v2228
        %v2230 = vpop.f32.mrb[0].mxu0
        %2231 = vmatprep.mubr.bf16.mxu0 %v1527
        %2232 = vmatmul.mubr.bf16.gmra.mrb[0].mxu0 %v1526
        %v2233 = vpop.f32.mrb[0].mxu0
        %v2234 = vadd.f32 %v2169, %v2233
        %v2235 = vpop.f32.mrb[0].mxu0
        %v2236 = vpop.f32.mrb[0].mxu0
        %v2237 = vadd.f32 %v2172, %v2236
        %v2238 = vpop.f32.mrb[0].mxu0
        %2239 = vmatprep.mubr.bf16.mxu0 %v1533
        %2240 = vmatmul.mubr.bf16.gmra.mrb[0].mxu0 %v1532
        %v2241 = vpop.f32.mrb[0].mxu0
        %v2242 = vadd.f32 %v2177, %v2241
        %v2243 = vpop.f32.mrb[0].mxu0
        %v2244 = vpop.f32.mrb[0].mxu0
        %v2245 = vadd.f32 %v2180, %v2244
        %v2246 = vpop.f32.mrb[0].mxu0
        %2247 = vmatprep.mubr.bf16.mxu0 %v1539
        %2248 = vmatmul.mubr.bf16.gmra.mrb[0].mxu0 %v1538
        %v2249 = vpop.f32.mrb[0].mxu0
        %v2250 = vadd.f32 %v2185, %v2249
        %v2251 = vpop.f32.mrb[0].mxu0
        %v2252 = vpop.f32.mrb[0].mxu0
        %v2253 = vadd.f32 %v2188, %v2252
        %v2254 = vpop.f32.mrb[0].mxu0
        %2255 = vdwg.mxu0
        %2256 = vmatprep.subr.bf16.mxu0 0
        %2257 = vmatpush1.bf16.msra.mxu0 %v2014
        %2258 = vmatprep.subr.bf16.mxu0 0
        %2259 = vmatpush1.bf16.msra.mxu0 %v2015
        %2260 = vmatprep.subr.bf16.mxu0 0
        %2261 = vmatpush1.bf16.msra.mxu0 %v2016
        %2262 = vmatprep.subr.bf16.mxu0 0
        %2263 = vmatpush1.bf16.msra.mxu0 %v2017
        %2264 = vmatprep.subr.bf16.mxu0 0
        %2265 = vmatpush1.bf16.msra.mxu0 %v2018
        %2266 = vmatprep.subr.bf16.mxu0 0
        %2267 = vmatpush1.bf16.msra.mxu0 %v2019
        %2268 = vmatprep.subr.bf16.mxu0 0
        %2269 = vmatpush1.bf16.msra.mxu0 %v2020
        %2270 = vmatprep.subr.bf16.mxu0 0
        %2271 = vmatpush1.bf16.msra.mxu0 %v2021
        %2272 = vmatprep.subr.bf16.mxu0 0
        %2273 = vmatpush1.bf16.msra.mxu0 %v2022
        %2274 = vmatprep.subr.bf16.mxu0 0
        %2275 = vmatpush1.bf16.msra.mxu0 %v2023
        %2276 = vmatprep.subr.bf16.mxu0 0
        %2277 = vmatpush1.bf16.msra.mxu0 %v2024
        %2278 = vmatprep.subr.bf16.mxu0 0
        %2279 = vmatpush1.bf16.msra.mxu0 %v2025
        %2280 = vmatprep.subr.bf16.mxu0 0
        %2281 = vmatpush1.bf16.msra.mxu0 %v2026
        %2282 = vmatprep.subr.bf16.mxu0 0
        %2283 = vmatpush1.bf16.msra.mxu0 %v2027
        %2284 = vmatprep.subr.bf16.mxu0 0
        %2285 = vmatpush1.bf16.msra.mxu0 %v2028
        %2286 = vmatprep.subr.bf16.mxu0 0
        %2287 = vmatpush1.bf16.msra.mxu0 %v2029
        %2288 = vmatprep.mubr.bf16.mxu0 %v1523
        %2289 = vmatmul.mubr.bf16.gmra.mrb[0].mxu0 %v1522
        %v2290 = vpop.f32.mrb[0].mxu0
        %v2291 = vadd.f32 %v2226, %v2290
        %v2292 = vpop.f32.mrb[0].mxu0
        %v2293 = vpop.f32.mrb[0].mxu0
        %v2294 = vadd.f32 %v2229, %v2293
        %v2295 = vpop.f32.mrb[0].mxu0
        %2296 = vmatprep.mubr.bf16.mxu0 %v1529
        %2297 = vmatmul.mubr.bf16.gmra.mrb[0].mxu0 %v1528
        %v2298 = vpop.f32.mrb[0].mxu0
        %v2299 = vadd.f32 %v2234, %v2298
        %v2300 = vpop.f32.mrb[0].mxu0
        %v2301 = vpop.f32.mrb[0].mxu0
        %v2302 = vadd.f32 %v2237, %v2301
        %v2303 = vpop.f32.mrb[0].mxu0
        %2304 = vmatprep.mubr.bf16.mxu0 %v1535
        %2305 = vmatmul.mubr.bf16.gmra.mrb[0].mxu0 %v1534
        %v2306 = vpop.f32.mrb[0].mxu0
        %v2307 = vadd.f32 %v2242, %v2306
        %v2308 = vpop.f32.mrb[0].mxu0
        %v2309 = vpop.f32.mrb[0].mxu0
        %v2310 = vadd.f32 %v2245, %v2309
        %v2311 = vpop.f32.mrb[0].mxu0
        %2312 = vmatprep.mubr.bf16.mxu0 %v1541
        %2313 = vmatmul.mubr.bf16.gmra.mrb[0].mxu0 %v1540
        %v2314 = vpop.f32.mrb[0].mxu0
        %v2315 = vadd.f32 %v2250, %v2314
        %v2316 = vpop.f32.mrb[0].mxu0
        %v2317 = vpop.f32.mrb[0].mxu0
        %v2318 = vadd.f32 %v2253, %v2317
        %v2319 = vpop.f32.mrb[0].mxu0
        %2320 = vdwg.mxu0
        %2321 = vmatprep.subr.bf16.mxu0 0
        %2322 = vmatpush1.bf16.msra.mxu0 %v2030
        %2323 = vmatprep.subr.bf16.mxu0 0
        %2324 = vmatpush1.bf16.msra.mxu0 %v2031
        %2325 = vmatprep.subr.bf16.mxu0 0
        %2326 = vmatpush1.bf16.msra.mxu0 %v2032
        %2327 = vmatprep.subr.bf16.mxu0 0
        %2328 = vmatpush1.bf16.msra.mxu0 %v2033
        %2329 = vmatprep.subr.bf16.mxu0 0
        %2330 = vmatpush1.bf16.msra.mxu0 %v2034
        %2331 = vmatprep.subr.bf16.mxu0 0
        %2332 = vmatpush1.bf16.msra.mxu0 %v2035
        %2333 = vmatprep.subr.bf16.mxu0 0
        %2334 = vmatpush1.bf16.msra.mxu0 %v2036
        %2335 = vmatprep.subr.bf16.mxu0 0
        %2336 = vmatpush1.bf16.msra.mxu0 %v2037
        %2337 = vmatprep.subr.bf16.mxu0 0
        %2338 = vmatpush1.bf16.msra.mxu0 %v2038
        %2339 = vmatprep.subr.bf16.mxu0 0
        %2340 = vmatpush1.bf16.msra.mxu0 %v2039
        %2341 = vmatprep.subr.bf16.mxu0 0
        %2342 = vmatpush1.bf16.msra.mxu0 %v2040
        %2343 = vmatprep.subr.bf16.mxu0 0
        %2344 = vmatpush1.bf16.msra.mxu0 %v2041
        %2345 = vmatprep.subr.bf16.mxu0 0
        %2346 = vmatpush1.bf16.msra.mxu0 %v2042
        %2347 = vmatprep.subr.bf16.mxu0 0
        %2348 = vmatpush1.bf16.msra.mxu0 %v2043
        %2349 = vmatprep.subr.bf16.mxu0 0
        %2350 = vmatpush1.bf16.msra.mxu0 %v2044
        %2351 = vmatprep.subr.bf16.mxu0 0
        %2352 = vmatpush1.bf16.msra.mxu0 %v2045
        %2353 = vmatprep.mubr.bf16.mxu0 %v1525
        %2354 = vmatmul.mubr.bf16.gmra.mrb[0].mxu0 %v1524
        %v2355 = vpop.f32.mrb[0].mxu0
        %v2356 = vadd.f32 %v2291, %v2355
        %v2357 = vpop.f32.mrb[0].mxu0
        %v2358 = vpop.f32.mrb[0].mxu0
        %v2359 = vadd.f32 %v2294, %v2358
        %v2360 = vpop.f32.mrb[0].mxu0
        %2361 = vmatprep.mubr.bf16.mxu0 %v1531
        %2362 = vmatmul.mubr.bf16.gmra.mrb[0].mxu0 %v1530
        %v2363 = vpop.f32.mrb[0].mxu0
        %v2364 = vadd.f32 %v2299, %v2363
        %v2365 = vpop.f32.mrb[0].mxu0
        %v2366 = vpop.f32.mrb[0].mxu0
        %v2367 = vadd.f32 %v2302, %v2366
        %v2368 = vpop.f32.mrb[0].mxu0
        %2369 = vmatprep.mubr.bf16.mxu0 %v1537
        %2370 = vmatmul.mubr.bf16.gmra.mrb[0].mxu0 %v1536
        %v2371 = vpop.f32.mrb[0].mxu0
        %v2372 = vadd.f32 %v2307, %v2371
        %v2373 = vpop.f32.mrb[0].mxu0
        %v2374 = vpop.f32.mrb[0].mxu0
        %v2375 = vadd.f32 %v2310, %v2374
        %v2376 = vpop.f32.mrb[0].mxu0
        %2377 = vmatprep.mubr.bf16.mxu0 %v1543
        %2378 = vmatmul.mubr.bf16.gmra.mrb[0].mxu0 %v1542
        %v2379 = vpop.f32.mrb[0].mxu0
        %v2380 = vadd.f32 %v2315, %v2379
        %v2381 = vpop.f32.mrb[0].mxu0
        %v2382 = vpop.f32.mrb[0].mxu0
        %v2383 = vadd.f32 %v2318, %v2382
        %v2384 = vpop.f32.mrb[0].mxu0
        %2385 = vdwg.mxu0
        %2386 = vmatprep.subr.bf16.mxu0 0
        %2387 = vmatpush1.bf16.msra.mxu0 %v2046
        %2388 = vmatprep.subr.bf16.mxu0 0
        %2389 = vmatpush1.bf16.msra.mxu0 %v2047
        %2390 = vmatprep.subr.bf16.mxu0 0
        %2391 = vmatpush1.bf16.msra.mxu0 %v2048
        %2392 = vmatprep.subr.bf16.mxu0 0
        %2393 = vmatpush1.bf16.msra.mxu0 %v2049
        %2394 = vmatprep.subr.bf16.mxu0 0
        %2395 = vmatpush1.bf16.msra.mxu0 %v2050
        %2396 = vmatprep.subr.bf16.mxu0 0
        %2397 = vmatpush1.bf16.msra.mxu0 %v2051
        %2398 = vmatprep.subr.bf16.mxu0 0
        %2399 = vmatpush1.bf16.msra.mxu0 %v2052
        %2400 = vmatprep.subr.bf16.mxu0 0
        %2401 = vmatpush1.bf16.msra.mxu0 %v2053
        %2402 = vmatprep.subr.bf16.mxu0 0
        %2403 = vmatpush1.bf16.msra.mxu0 0
        %2404 = vmatprep.subr.bf16.mxu0 0
        %2405 = vmatpush1.bf16.msra.mxu0 0
        %2406 = vmatprep.subr.bf16.mxu0 0
        %2407 = vmatpush1.bf16.msra.mxu0 0
        %2408 = vmatprep.subr.bf16.mxu0 0
        %2409 = vmatpush1.bf16.msra.mxu0 0
        %2410 = vmatprep.subr.bf16.mxu0 0
        %2411 = vmatpush1.bf16.msra.mxu0 0
        %2412 = vmatprep.subr.bf16.mxu0 0
        %2413 = vmatpush1.bf16.msra.mxu0 0
        %2414 = vmatprep.subr.bf16.mxu0 0
        %2415 = vmatpush1.bf16.msra.mxu0 0
        %2416 = vmatprep.subr.bf16.mxu0 0
        %2417 = vmatpush1.bf16.msra.mxu0 0
        %2418 = vmatprep.mubr.bf16.mxu0 0
        %2419 = vmatmul.mubr.bf16.gmra.mrb[0].mxu0 %v1526
        %v2420 = vpop.f32.mrb[0].mxu0
        %v2421 = vadd.f32 %v2356, %v2420
        %v2422 = vpop.f32.mrb[0].mxu0
        %v2423 = vpop.f32.mrb[0].mxu0
        %v2424 = vadd.f32 %v2359, %v2423
        %v2425 = vpop.f32.mrb[0].mxu0
        %2426 = vmatprep.mubr.bf16.mxu0 0
        %2427 = vmatmul.mubr.bf16.gmra.mrb[0].mxu0 %v1532
        %v2428 = vpop.f32.mrb[0].mxu0
        %v2429 = vadd.f32 %v2364, %v2428
        %v2430 = vpop.f32.mrb[0].mxu0
        %v2431 = vpop.f32.mrb[0].mxu0
        %v2432 = vadd.f32 %v2367, %v2431
        %v2433 = vpop.f32.mrb[0].mxu0
        %2434 = vmatprep.mubr.bf16.mxu0 0
        %2435 = vmatmul.mubr.bf16.gmra.mrb[0].mxu0 %v1538
        %v2436 = vpop.f32.mrb[0].mxu0
        %v2437 = vadd.f32 %v2372, %v2436
        %v2438 = vpop.f32.mrb[0].mxu0
        %v2439 = vpop.f32.mrb[0].mxu0
        %v2440 = vadd.f32 %v2375, %v2439
        %v2441 = vpop.f32.mrb[0].mxu0
        %2442 = vmatprep.mubr.bf16.mxu0 0
        %2443 = vmatmul.mubr.bf16.gmra.mrb[0].mxu0 %v1544
        %v2444 = vpop.f32.mrb[0].mxu0
        %v2445 = vadd.f32 %v2380, %v2444
        %v2446 = vpop.f32.mrb[0].mxu0
        %v2447 = vpop.f32.mrb[0].mxu0
        %v2448 = vadd.f32 %v2383, %v2447
        %v2449 = vpop.f32.mrb[0].mxu0
        %2450 = vdwg.mxu0
        %v2451 = vadd.f32 %v2421, %v311
        %v2452 = vadd.f32 %v2424, %v312
        %v2453 = vadd.f32 %v2429, %v313
        %v2454 = vadd.f32 %v2432, %v314
        %v2455 = vadd.f32 %v2437, %v315
        %v2456 = vadd.f32 %v2440, %v316
        %v2457 = vadd.f32 %v2445, %v317
        %v2458 = vadd.f32 %v2448, %v318
        %v2459 = vld [vmem:[%s270] sm:$0xff]
        %v2460 = vld [vmem:[%s270 + $0x8] sm:$0xff]
        %v2461 = vld [vmem:[%s270 + $0x10] sm:$0xff]
        %v2462 = vld [vmem:[%s270 + $0x18] sm:$0xff]
        %v2463 = vld [vmem:[%s270 + $0x20] sm:$0xff]
        %v2464 = vld [vmem:[%s270 + $0x28] sm:$0xff]
        %v2465 = vld [vmem:[%s270 + $0x30] sm:$0xff]
        %v2466 = vld [vmem:[%s270 + $0x38] sm:$0xff]
        %v2467 = vadd.f32 %v2451, %v2459
        %v2468 = vadd.f32 %v2452, %v2460
        %v2469 = vadd.f32 %v2453, %v2461
        %v2470 = vadd.f32 %v2454, %v2462
        %v2471 = vadd.f32 %v2455, %v2463
        %v2472 = vadd.f32 %v2456, %v2464
        %v2473 = vadd.f32 %v2457, %v2465
        %v2474 = vadd.f32 %v2458, %v2466
        %v2475 = vmax.f32 %v2467, 0.0
        %v2476 = vmax.f32 %v2468, 0.0
        %v2477 = vmax.f32 %v2469, 0.0
        %v2478 = vmax.f32 %v2470, 0.0
        %v2479 = vmax.f32 %v2471, 0.0
        %v2480 = vmax.f32 %v2472, 0.0
        %v2481 = vmax.f32 %v2473, 0.0
        %v2482 = vmax.f32 %v2474, 0.0
        %v2491 = vrot.slane %v2475, 7
        %v2492 = vrot.slane %v2476, 7
        %v2493 = vrot.slane %v2477, 7
        %v2494 = vrot.slane %v2478, 7
        %v2495 = vrot.slane %v2479, 7
        %v2496 = vrot.slane %v2480, 7
        %v2497 = vrot.slane %v2481, 7
        %v2498 = vrot.slane %v2482, 7
        %v2507 = vsel %vm352, 0.0, %v2491
        %v2508 = vsel %vm352, 0.0, %v2492
        %v2509 = vsel %vm352, 0.0, %v2493
        %v2510 = vsel %vm352, 0.0, %v2494
        %v2511 = vsel %vm352, 0.0, %v2495
        %v2512 = vsel %vm352, 0.0, %v2496
        %v2513 = vsel %vm352, 0.0, %v2497
        %v2514 = vsel %vm352, 0.0, %v2498
        %v2515 = vsel %vm352, %v2491, 0.0
        %v2516 = vsel %vm352, %v2492, 0.0
        %v2517 = vsel %vm352, %v2493, 0.0
        %v2518 = vsel %vm352, %v2494, 0.0
        %v2519 = vsel %vm352, %v2495, 0.0
        %v2520 = vsel %vm352, %v2496, 0.0
        %v2521 = vsel %vm352, %v2497, 0.0
        %v2522 = vsel %vm352, %v2498, 0.0
        %v2537 = vrot.slane %v2507, 1
        %v2538 = vrot.slane %v2515, 1
        %v2539 = vsel %vm384, %v2537, %v2538
        %v2540 = vrot.slane %v2508, 1
        %v2541 = vrot.slane %v2516, 1
        %v2542 = vsel %vm384, %v2540, %v2541
        %v2543 = vrot.slane %v2509, 1
        %v2544 = vrot.slane %v2517, 1
        %v2545 = vsel %vm384, %v2543, %v2544
        %v2546 = vrot.slane %v2510, 1
        %v2547 = vrot.slane %v2518, 1
        %v2548 = vsel %vm384, %v2546, %v2547
        %v2549 = vrot.slane %v2511, 1
        %v2550 = vrot.slane %v2519, 1
        %v2551 = vsel %vm384, %v2549, %v2550
        %v2552 = vrot.slane %v2512, 1
        %v2553 = vrot.slane %v2520, 1
        %v2554 = vsel %vm384, %v2552, %v2553
        %v2555 = vrot.slane %v2513, 1
        %v2556 = vrot.slane %v2521, 1
        %v2557 = vsel %vm384, %v2555, %v2556
        %v2565 = vrot.slane %v2507, 2
        %v2566 = vrot.slane %v2515, 2
        %v2567 = vsel %vm416, %v2565, %v2566
        %v2568 = vrot.slane %v2508, 2
        %v2569 = vrot.slane %v2516, 2
        %v2570 = vsel %vm416, %v2568, %v2569
        %v2571 = vrot.slane %v2509, 2
        %v2572 = vrot.slane %v2517, 2
        %v2573 = vsel %vm416, %v2571, %v2572
        %v2574 = vrot.slane %v2510, 2
        %v2575 = vrot.slane %v2518, 2
        %v2576 = vsel %vm416, %v2574, %v2575
        %v2577 = vrot.slane %v2511, 2
        %v2578 = vrot.slane %v2519, 2
        %v2579 = vsel %vm416, %v2577, %v2578
        %v2580 = vrot.slane %v2512, 2
        %v2581 = vrot.slane %v2520, 2
        %v2582 = vsel %vm416, %v2580, %v2581
        %v2583 = vrot.slane %v2513, 2
        %v2584 = vrot.slane %v2521, 2
        %v2585 = vsel %vm416, %v2583, %v2584
        %v2595 = vrot.slane %v2514, 1
        %v2596 = vrot.slane %v2522, 1
        %v2597 = vsel %vm384, %v2595, %v2596
        %v2599 = vrot.slane %v2514, 2
        %v2600 = vrot.slane %v2522, 2
        %v2601 = vsel %vm416, %v2599, %v2600
        %v2603 = vpack.c.bf16 %v2507, 0.0
        %v2604 = vpack.c.bf16 %v2539, %v386
        %v2605 = vpack.c.bf16 %v2567, %v418
        %v2606 = vpack.c.bf16 %v2508, %v2507
        %v2607 = vpack.c.bf16 %v2542, %v2539
        %v2608 = vpack.c.bf16 %v2570, %v2567
        %v2609 = vpack.c.bf16 %v2509, %v2508
        %v2610 = vpack.c.bf16 %v2545, %v2542
        %v2611 = vpack.c.bf16 %v2573, %v2570
        %v2612 = vpack.c.bf16 %v2510, %v2509
        %v2613 = vpack.c.bf16 %v2548, %v2545
        %v2614 = vpack.c.bf16 %v2576, %v2573
        %v2615 = vpack.c.bf16 %v2511, %v2510
        %v2616 = vpack.c.bf16 %v2551, %v2548
        %v2617 = vpack.c.bf16 %v2579, %v2576
        %v2618 = vpack.c.bf16 %v2512, %v2511
        %v2619 = vpack.c.bf16 %v2554, %v2551
        %v2620 = vpack.c.bf16 %v2582, %v2579
        %v2621 = vpack.c.bf16 %v2513, %v2512
        %v2622 = vpack.c.bf16 %v2557, %v2554
        %v2623 = vpack.c.bf16 %v2585, %v2582
        %v2624 = vpack.c.bf16 %v2514, %v2513
        %v2625 = vpack.c.bf16 %v2597, %v2557
        %v2626 = vpack.c.bf16 %v2601, %v2585
        %v2627 = vpack.c.bf16 0.0, %v2514
        %v2628 = vpack.c.bf16 %v386, %v2597
        %v2629 = vpack.c.bf16 %v418, %v2601
        %s2630 = scalar_lea.vmem [#allocation7], 1152
        %v2631 = vld [vmem:[%s2630] sm:$0xf]
        %v2632 = vld [vmem:[%s2630 + $0x4] sm:$0xf]
        %v2633 = vld [vmem:[%s2630 + $0x8] sm:$0xf]
        %v2634 = vld [vmem:[%s2630 + $0xc] sm:$0xf]
        %v2635 = vld [vmem:[%s2630 + $0x10] sm:$0xf]
        %v2636 = vld [vmem:[%s2630 + $0x14] sm:$0xf]
        %v2637 = vld [vmem:[%s2630 + $0x18] sm:$0xf]
        %v2638 = vld [vmem:[%s2630 + $0x1c] sm:$0xf]
        %v2639 = vld [vmem:[%s2630 + $0x20] sm:$0xf]
        %v2640 = vld [vmem:[%s2630 + $0x24] sm:$0xf]
        %v2641 = vld [vmem:[%s2630 + $0x28] sm:$0xf]
        %v2642 = vld [vmem:[%s2630 + $0x2c] sm:$0xf]
        %v2643 = vld [vmem:[%s2630 + $0x30] sm:$0xf]
        %v2644 = vld [vmem:[%s2630 + $0x34] sm:$0xf]
        %v2645 = vld [vmem:[%s2630 + $0x38] sm:$0xf]
        %v2646 = vld [vmem:[%s2630 + $0x3c] sm:$0xf]
        %v2647 = vld [vmem:[%s2630 + $0x40] sm:$0xf]
        %v2648 = vld [vmem:[%s2630 + $0x44] sm:$0xf]
        %v2649 = vld [vmem:[%s2630 + $0x48] sm:$0xf]
        %v2650 = vld [vmem:[%s2630 + $0x4c] sm:$0xf]
        %v2651 = vld [vmem:[%s2630 + $0x50] sm:$0xf]
        %v2652 = vld [vmem:[%s2630 + $0x54] sm:$0xf]
        %v2653 = vld [vmem:[%s2630 + $0x58] sm:$0xf]
        %v2654 = vld [vmem:[%s2630 + $0x5c] sm:$0xf]
        %v2655 = vld [vmem:[%s2630 + $0x60] sm:$0xf]
        %v2656 = vld [vmem:[%s2630 + $0x64] sm:$0xf]
        %v2657 = vld [vmem:[%s2630 + $0x68] sm:$0xf]
        %v2658 = vld [vmem:[%s2630 + $0x6c] sm:$0xf]
        %v2659 = vld [vmem:[%s2630 + $0x70] sm:$0xf]
        %v2660 = vld [vmem:[%s2630 + $0x74] sm:$0xf]
        %v2661 = vld [vmem:[%s2630 + $0x78] sm:$0xf]
        %v2662 = vld [vmem:[%s2630 + $0x7c] sm:$0xf]
        %v2663 = vld [vmem:[%s2630 + $0x80] sm:$0xf]
        %v2664 = vld [vmem:[%s2630 + $0x84] sm:$0xf]
        %v2665 = vld [vmem:[%s2630 + $0x88] sm:$0xf]
        %v2666 = vld [vmem:[%s2630 + $0x8c] sm:$0xf]
        %v2667 = vld [vmem:[%s2630 + $0x90] sm:$0xf]
        %v2668 = vld [vmem:[%s2630 + $0x94] sm:$0xf]
        %v2669 = vld [vmem:[%s2630 + $0x98] sm:$0xf]
        %v2670 = vld [vmem:[%s2630 + $0x9c] sm:$0xf]
        %v2671 = vld [vmem:[%s2630 + $0xa0] sm:$0xf]
        %v2672 = vld [vmem:[%s2630 + $0xa4] sm:$0xf]
        %v2673 = vld [vmem:[%s2630 + $0xa8] sm:$0xf]
        %v2674 = vld [vmem:[%s2630 + $0xac] sm:$0xf]
        %v2675 = vld [vmem:[%s2630 + $0xb0] sm:$0xf]
        %v2676 = vld [vmem:[%s2630 + $0xb4] sm:$0xf]
        %v2677 = vld [vmem:[%s2630 + $0xb8] sm:$0xf]
        %v2678 = vld [vmem:[%s2630 + $0xbc] sm:$0xf]
        %v2679 = vld [vmem:[%s2630 + $0xc0] sm:$0xf]
        %v2680 = vld [vmem:[%s2630 + $0xc4] sm:$0xf]
        %v2681 = vld [vmem:[%s2630 + $0xc8] sm:$0xf]
        %v2682 = vld [vmem:[%s2630 + $0xcc] sm:$0xf]
        %v2683 = vld [vmem:[%s2630 + $0xd0] sm:$0xf]
        %v2684 = vld [vmem:[%s2630 + $0xd4] sm:$0xf]
        %v2685 = vld [vmem:[%s2630 + $0xd8] sm:$0xf]
        %v2686 = vld [vmem:[%s2630 + $0xdc] sm:$0xf]
        %v2687 = vld [vmem:[%s2630 + $0xe0] sm:$0xf]
        %v2688 = vld [vmem:[%s2630 + $0xe4] sm:$0xf]
        %v2689 = vld [vmem:[%s2630 + $0xe8] sm:$0xf]
        %v2690 = vld [vmem:[%s2630 + $0xec] sm:$0xf]
        %v2691 = vld [vmem:[%s2630 + $0xf0] sm:$0xf]
        %v2692 = vld [vmem:[%s2630 + $0xf4] sm:$0xf]
        %v2693 = vld [vmem:[%s2630 + $0xf8] sm:$0xf]
        %v2694 = vld [vmem:[%s2630 + $0xfc] sm:$0xf]
        %v2695 = vld [vmem:[%s2630 + $0x100] sm:$0xf]
        %v2696 = vld [vmem:[%s2630 + $0x104] sm:$0xf]
        %v2697 = vld [vmem:[%s2630 + $0x108] sm:$0xf]
        %v2698 = vld [vmem:[%s2630 + $0x10c] sm:$0xf]
        %v2699 = vld [vmem:[%s2630 + $0x110] sm:$0xf]
        %v2700 = vld [vmem:[%s2630 + $0x114] sm:$0xf]
        %v2701 = vld [vmem:[%s2630 + $0x118] sm:$0xf]
        %v2702 = vld [vmem:[%s2630 + $0x11c] sm:$0xf]
        %v2703 = vld [vmem:[%s2630 + $0x120] sm:$0xf]
        %v2704 = vld [vmem:[%s2630 + $0x124] sm:$0xf]
        %v2705 = vld [vmem:[%s2630 + $0x128] sm:$0xf]
        %v2706 = vld [vmem:[%s2630 + $0x12c] sm:$0xf]
        %v2707 = vld [vmem:[%s2630 + $0x130] sm:$0xf]
        %v2708 = vld [vmem:[%s2630 + $0x134] sm:$0xf]
        %v2709 = vld [vmem:[%s2630 + $0x138] sm:$0xf]
        %v2710 = vld [vmem:[%s2630 + $0x13c] sm:$0xf]
        %v2711 = vld [vmem:[%s2630 + $0x140] sm:$0xf]
        %v2712 = vld [vmem:[%s2630 + $0x144] sm:$0xf]
        %v2713 = vld [vmem:[%s2630 + $0x148] sm:$0xf]
        %v2714 = vld [vmem:[%s2630 + $0x14c] sm:$0xf]
        %v2715 = vld [vmem:[%s2630 + $0x150] sm:$0xf]
        %v2716 = vld [vmem:[%s2630 + $0x154] sm:$0xf]
        %v2717 = vld [vmem:[%s2630 + $0x158] sm:$0xf]
        %v2718 = vld [vmem:[%s2630 + $0x15c] sm:$0xf]
        %v2719 = vld [vmem:[%s2630 + $0x160] sm:$0xf]
        %v2720 = vld [vmem:[%s2630 + $0x164] sm:$0xf]
        %v2721 = vld [vmem:[%s2630 + $0x168] sm:$0xf]
        %v2722 = vld [vmem:[%s2630 + $0x16c] sm:$0xf]
        %v2723 = vld [vmem:[%s2630 + $0x170] sm:$0xf]
        %v2724 = vld [vmem:[%s2630 + $0x174] sm:$0xf]
        %v2725 = vld [vmem:[%s2630 + $0x178] sm:$0xf]
        %v2726 = vld [vmem:[%s2630 + $0x17c] sm:$0xf]
        %v2727 = vld [vmem:[%s2630 + $0x180] sm:$0xf]
        %v2728 = vld [vmem:[%s2630 + $0x184] sm:$0xf]
        %v2729 = vld [vmem:[%s2630 + $0x188] sm:$0xf]
        %v2730 = vld [vmem:[%s2630 + $0x18c] sm:$0xf]
        %v2731 = vld [vmem:[%s2630 + $0x190] sm:$0xf]
        %v2732 = vld [vmem:[%s2630 + $0x194] sm:$0xf]
        %v2733 = vld [vmem:[%s2630 + $0x198] sm:$0xf]
        %v2734 = vld [vmem:[%s2630 + $0x19c] sm:$0xf]
        %v2735 = vld [vmem:[%s2630 + $0x1a0] sm:$0xf]
        %v2736 = vld [vmem:[%s2630 + $0x1a4] sm:$0xf]
        %v2737 = vld [vmem:[%s2630 + $0x1a8] sm:$0xf]
        %v2738 = vld [vmem:[%s2630 + $0x1ac] sm:$0xf]
        %v2739 = vld [vmem:[%s2630 + $0x1b0] sm:$0xf]
        %v2740 = vld [vmem:[%s2630 + $0x1b4] sm:$0xf]
        %v2741 = vld [vmem:[%s2630 + $0x1b8] sm:$0xf]
        %v2742 = vld [vmem:[%s2630 + $0x1bc] sm:$0xf]
        %v2743 = vld [vmem:[%s2630 + $0x1c0] sm:$0xf]
        %v2744 = vld [vmem:[%s2630 + $0x1c4] sm:$0xf]
        %v2745 = vld [vmem:[%s2630 + $0x1c8] sm:$0xf]
        %v2746 = vld [vmem:[%s2630 + $0x1cc] sm:$0xf]
        %v2747 = vld [vmem:[%s2630 + $0x1d0] sm:$0xf]
        %v2748 = vld [vmem:[%s2630 + $0x1d4] sm:$0xf]
        %v2749 = vld [vmem:[%s2630 + $0x1d8] sm:$0xf]
        %v2750 = vld [vmem:[%s2630 + $0x1dc] sm:$0xf]
        %v2751 = vld [vmem:[%s2630 + $0x1e0] sm:$0xf]
        %v2752 = vld [vmem:[%s2630 + $0x1e4] sm:$0xf]
        %v2753 = vld [vmem:[%s2630 + $0x1e8] sm:$0xf]
        %v2754 = vld [vmem:[%s2630 + $0x1ec] sm:$0xf]
        %v2755 = vld [vmem:[%s2630 + $0x1f0] sm:$0xf]
        %v2756 = vld [vmem:[%s2630 + $0x1f4] sm:$0xf]
        %v2757 = vld [vmem:[%s2630 + $0x1f8] sm:$0xf]
        %v2758 = vld [vmem:[%s2630 + $0x1fc] sm:$0xf]
        %v2759 = vld [vmem:[%s2630 + $0x200] sm:$0xf]
        %v2760 = vld [vmem:[%s2630 + $0x204] sm:$0xf]
        %v2761 = vld [vmem:[%s2630 + $0x208] sm:$0xf]
        %v2762 = vld [vmem:[%s2630 + $0x20c] sm:$0xf]
        %v2763 = vld [vmem:[%s2630 + $0x210] sm:$0xf]
        %v2764 = vld [vmem:[%s2630 + $0x214] sm:$0xf]
        %v2765 = vld [vmem:[%s2630 + $0x218] sm:$0xf]
        %v2766 = vld [vmem:[%s2630 + $0x21c] sm:$0xf]
        %v2767 = vld [vmem:[%s2630 + $0x220] sm:$0xf]
        %v2768 = vld [vmem:[%s2630 + $0x224] sm:$0xf]
        %v2769 = vld [vmem:[%s2630 + $0x228] sm:$0xf]
        %v2770 = vld [vmem:[%s2630 + $0x22c] sm:$0xf]
        %v2771 = vld [vmem:[%s2630 + $0x230] sm:$0xf]
        %v2772 = vld [vmem:[%s2630 + $0x234] sm:$0xf]
        %v2773 = vld [vmem:[%s2630 + $0x238] sm:$0xf]
        %v2774 = vld [vmem:[%s2630 + $0x23c] sm:$0xf]
        %v2775 = vlaneseq
        %v2776 = vshrl.u32 %v2775, 7
        %v2777 = vsub.s32 2, %v2776
        %v2778 = vrot.slane %v319, %v2777
        %v2923 = vunpack.c.l.b16 %v2631
        %v2924 = vunpack.c.l.b16 %v2632
        %v2925 = vunpack.c.l.b16 %v2633
        %v2926 = vunpack.c.l.b16 %v2634
        %v2927 = vunpack.c.l.b16 %v2635
        %v2928 = vunpack.c.l.b16 %v2636
        %v2929 = vunpack.c.l.b16 %v2637
        %v2930 = vunpack.c.l.b16 %v2638
        %v2931 = vunpack.c.l.b16 %v2639
        %v2932 = vunpack.c.l.b16 %v2640
        %v2933 = vunpack.c.l.b16 %v2641
        %v2934 = vunpack.c.l.b16 %v2642
        %v2935 = vunpack.c.l.b16 %v2643
        %v2936 = vunpack.c.l.b16 %v2644
        %v2937 = vunpack.c.l.b16 %v2645
        %v2938 = vunpack.c.l.b16 %v2646
        %v2939 = vunpack.c.l.b16 %v2647
        %v2940 = vunpack.c.l.b16 %v2648
        %v2941 = vunpack.c.l.b16 %v2649
        %v2942 = vunpack.c.l.b16 %v2650
        %v2943 = vunpack.c.l.b16 %v2651
        %v2944 = vunpack.c.l.b16 %v2652
        %v2945 = vunpack.c.l.b16 %v2653
        %v2946 = vunpack.c.l.b16 %v2654
        %v2947 = vunpack.c.l.b16 %v2655
        %v2948 = vunpack.c.l.b16 %v2656
        %v2949 = vunpack.c.l.b16 %v2657
        %v2950 = vunpack.c.l.b16 %v2658
        %v2951 = vunpack.c.l.b16 %v2659
        %v2952 = vunpack.c.l.b16 %v2660
        %v2953 = vunpack.c.l.b16 %v2661
        %v2954 = vunpack.c.l.b16 %v2662
        %v2955 = vunpack.c.l.b16 %v2663
        %v2956 = vunpack.c.l.b16 %v2664
        %v2957 = vunpack.c.l.b16 %v2665
        %v2958 = vunpack.c.l.b16 %v2666
        %v2959 = vunpack.c.l.b16 %v2667
        %v2960 = vunpack.c.l.b16 %v2668
        %v2961 = vunpack.c.l.b16 %v2669
        %v2962 = vunpack.c.l.b16 %v2670
        %v2963 = vunpack.c.l.b16 %v2671
        %v2964 = vunpack.c.l.b16 %v2672
        %v2965 = vunpack.c.l.b16 %v2673
        %v2966 = vunpack.c.l.b16 %v2674
        %v2967 = vunpack.c.l.b16 %v2675
        %v2968 = vunpack.c.l.b16 %v2676
        %v2969 = vunpack.c.l.b16 %v2677
        %v2970 = vunpack.c.l.b16 %v2678
        %v2971 = vunpack.c.l.b16 %v2679
        %v2972 = vunpack.c.l.b16 %v2680
        %v2973 = vunpack.c.l.b16 %v2681
        %v2974 = vunpack.c.l.b16 %v2682
        %v2975 = vunpack.c.l.b16 %v2683
        %v2976 = vunpack.c.l.b16 %v2684
        %v2977 = vunpack.c.l.b16 %v2685
        %v2978 = vunpack.c.l.b16 %v2686
        %v2979 = vunpack.c.l.b16 %v2687
        %v2980 = vunpack.c.l.b16 %v2688
        %v2981 = vunpack.c.l.b16 %v2689
        %v2982 = vunpack.c.l.b16 %v2690
        %v2983 = vunpack.c.l.b16 %v2691
        %v2984 = vunpack.c.l.b16 %v2692
        %v2985 = vunpack.c.l.b16 %v2693
        %v2986 = vunpack.c.l.b16 %v2694
        %v2987 = vunpack.c.l.b16 %v2695
        %v2988 = vunpack.c.l.b16 %v2696
        %v2989 = vunpack.c.l.b16 %v2697
        %v2990 = vunpack.c.l.b16 %v2698
        %v2991 = vunpack.c.l.b16 %v2699
        %v2992 = vunpack.c.l.b16 %v2700
        %v2993 = vunpack.c.l.b16 %v2701
        %v2994 = vunpack.c.l.b16 %v2702
        %v2995 = vunpack.c.l.b16 %v2703
        %v2996 = vunpack.c.l.b16 %v2704
        %v2997 = vunpack.c.l.b16 %v2705
        %v2998 = vunpack.c.l.b16 %v2706
        %v2999 = vunpack.c.l.b16 %v2707
        %v3000 = vunpack.c.l.b16 %v2708
        %v3001 = vunpack.c.l.b16 %v2709
        %v3002 = vunpack.c.l.b16 %v2710
        %v3003 = vunpack.c.l.b16 %v2711
        %v3004 = vunpack.c.l.b16 %v2712
        %v3005 = vunpack.c.l.b16 %v2713
        %v3006 = vunpack.c.l.b16 %v2714
        %v3007 = vunpack.c.l.b16 %v2715
        %v3008 = vunpack.c.l.b16 %v2716
        %v3009 = vunpack.c.l.b16 %v2717
        %v3010 = vunpack.c.l.b16 %v2718
        %v3011 = vunpack.c.l.b16 %v2719
        %v3012 = vunpack.c.l.b16 %v2720
        %v3013 = vunpack.c.l.b16 %v2721
        %v3014 = vunpack.c.l.b16 %v2722
        %v3015 = vunpack.c.l.b16 %v2723
        %v3016 = vunpack.c.l.b16 %v2724
        %v3017 = vunpack.c.l.b16 %v2725
        %v3018 = vunpack.c.l.b16 %v2726
        %v3019 = vunpack.c.l.b16 %v2727
        %v3020 = vunpack.c.l.b16 %v2728
        %v3021 = vunpack.c.l.b16 %v2729
        %v3022 = vunpack.c.l.b16 %v2730
        %v3023 = vunpack.c.l.b16 %v2731
        %v3024 = vunpack.c.l.b16 %v2732
        %v3025 = vunpack.c.l.b16 %v2733
        %v3026 = vunpack.c.l.b16 %v2734
        %v3027 = vunpack.c.l.b16 %v2735
        %v3028 = vunpack.c.l.b16 %v2736
        %v3029 = vunpack.c.l.b16 %v2737
        %v3030 = vunpack.c.l.b16 %v2738
        %v3031 = vunpack.c.l.b16 %v2739
        %v3032 = vunpack.c.l.b16 %v2740
        %v3033 = vunpack.c.l.b16 %v2741
        %v3034 = vunpack.c.l.b16 %v2742
        %v3035 = vunpack.c.l.b16 %v2743
        %v3036 = vunpack.c.l.b16 %v2744
        %v3037 = vunpack.c.l.b16 %v2745
        %v3038 = vunpack.c.l.b16 %v2746
        %v3039 = vunpack.c.l.b16 %v2747
        %v3040 = vunpack.c.l.b16 %v2748
        %v3041 = vunpack.c.l.b16 %v2749
        %v3042 = vunpack.c.l.b16 %v2750
        %v3043 = vunpack.c.l.b16 %v2751
        %v3044 = vunpack.c.l.b16 %v2752
        %v3045 = vunpack.c.l.b16 %v2753
        %v3046 = vunpack.c.l.b16 %v2754
        %v3047 = vunpack.c.l.b16 %v2755
        %v3048 = vunpack.c.l.b16 %v2756
        %v3049 = vunpack.c.l.b16 %v2757
        %v3050 = vunpack.c.l.b16 %v2758
        %v3051 = vunpack.c.l.b16 %v2759
        %v3052 = vunpack.c.l.b16 %v2760
        %v3053 = vunpack.c.l.b16 %v2761
        %v3054 = vunpack.c.l.b16 %v2762
        %v3055 = vunpack.c.l.b16 %v2763
        %v3056 = vunpack.c.l.b16 %v2764
        %v3057 = vunpack.c.l.b16 %v2765
        %v3058 = vunpack.c.l.b16 %v2766
        %v3059 = vunpack.c.l.b16 %v2767
        %v3060 = vunpack.c.l.b16 %v2768
        %v3061 = vunpack.c.l.b16 %v2769
        %v3062 = vunpack.c.l.b16 %v2770
        %v3063 = vunpack.c.l.b16 %v2771
        %v3064 = vunpack.c.l.b16 %v2772
        %v3065 = vunpack.c.l.b16 %v2773
        %v3066 = vunpack.c.l.b16 %v2774
        %v3067 = vpack.c.b16 %v2924, %v2923
        %v3068 = vpack.c.b16 %v2926, %v2925
        %v3069 = vpack.c.b16 %v2928, %v2927
        %v3070 = vpack.c.b16 %v2930, %v2929
        %v3071 = vpack.c.b16 %v2932, %v2931
        %v3072 = vpack.c.b16 %v2934, %v2933
        %v3073 = vpack.c.b16 %v2936, %v2935
        %v3074 = vpack.c.b16 %v2938, %v2937
        %v3075 = vpack.c.b16 %v2940, %v2939
        %v3076 = vpack.c.b16 %v2942, %v2941
        %v3077 = vpack.c.b16 %v2944, %v2943
        %v3078 = vpack.c.b16 %v2946, %v2945
        %v3079 = vpack.c.b16 %v2948, %v2947
        %v3080 = vpack.c.b16 %v2950, %v2949
        %v3081 = vpack.c.b16 %v2952, %v2951
        %v3082 = vpack.c.b16 %v2954, %v2953
        %v3083 = vpack.c.b16 %v2956, %v2955
        %v3084 = vpack.c.b16 %v2958, %v2957
        %v3085 = vpack.c.b16 %v2960, %v2959
        %v3086 = vpack.c.b16 %v2962, %v2961
        %v3087 = vpack.c.b16 %v2964, %v2963
        %v3088 = vpack.c.b16 %v2966, %v2965
        %v3089 = vpack.c.b16 %v2968, %v2967
        %v3090 = vpack.c.b16 %v2970, %v2969
        %v3091 = vpack.c.b16 %v2972, %v2971
        %v3092 = vpack.c.b16 %v2974, %v2973
        %v3093 = vpack.c.b16 %v2976, %v2975
        %v3094 = vpack.c.b16 %v2978, %v2977
        %v3095 = vpack.c.b16 %v2980, %v2979
        %v3096 = vpack.c.b16 %v2982, %v2981
        %v3097 = vpack.c.b16 %v2984, %v2983
        %v3098 = vpack.c.b16 %v2986, %v2985
        %v3099 = vpack.c.b16 %v2988, %v2987
        %v3100 = vpack.c.b16 %v2990, %v2989
        %v3101 = vpack.c.b16 %v2992, %v2991
        %v3102 = vpack.c.b16 %v2994, %v2993
        %v3103 = vpack.c.b16 %v2996, %v2995
        %v3104 = vpack.c.b16 %v2998, %v2997
        %v3105 = vpack.c.b16 %v3000, %v2999
        %v3106 = vpack.c.b16 %v3002, %v3001
        %v3107 = vpack.c.b16 %v3004, %v3003
        %v3108 = vpack.c.b16 %v3006, %v3005
        %v3109 = vpack.c.b16 %v3008, %v3007
        %v3110 = vpack.c.b16 %v3010, %v3009
        %v3111 = vpack.c.b16 %v3012, %v3011
        %v3112 = vpack.c.b16 %v3014, %v3013
        %v3113 = vpack.c.b16 %v3016, %v3015
        %v3114 = vpack.c.b16 %v3018, %v3017
        %v3115 = vpack.c.b16 %v3020, %v3019
        %v3116 = vpack.c.b16 %v3022, %v3021
        %v3117 = vpack.c.b16 %v3024, %v3023
        %v3118 = vpack.c.b16 %v3026, %v3025
        %v3119 = vpack.c.b16 %v3028, %v3027
        %v3120 = vpack.c.b16 %v3030, %v3029
        %v3121 = vpack.c.b16 %v3032, %v3031
        %v3122 = vpack.c.b16 %v3034, %v3033
        %v3123 = vpack.c.b16 %v3036, %v3035
        %v3124 = vpack.c.b16 %v3038, %v3037
        %v3125 = vpack.c.b16 %v3040, %v3039
        %v3126 = vpack.c.b16 %v3042, %v3041
        %v3127 = vpack.c.b16 %v3044, %v3043
        %v3128 = vpack.c.b16 %v3046, %v3045
        %v3129 = vpack.c.b16 %v3048, %v3047
        %v3130 = vpack.c.b16 %v3050, %v3049
        %v3131 = vpack.c.b16 %v3052, %v3051
        %v3132 = vpack.c.b16 %v3054, %v3053
        %v3133 = vpack.c.b16 %v3056, %v3055
        %v3134 = vpack.c.b16 %v3058, %v3057
        %v3135 = vpack.c.b16 %v3060, %v3059
        %v3136 = vpack.c.b16 %v3062, %v3061
        %v3137 = vpack.c.b16 %v3064, %v3063
        %v3138 = vpack.c.b16 %v3066, %v3065
        %3211 = vmatprep.subr.bf16.mxu0 0
        %3212 = vmatpush1.bf16.msra.mxu0 %v3067
        %3213 = vmatprep.subr.bf16.mxu0 0
        %3214 = vmatpush1.bf16.msra.mxu0 %v3068
        %3215 = vmatprep.subr.bf16.mxu0 0
        %3216 = vmatpush1.bf16.msra.mxu0 %v3069
        %3217 = vmatprep.subr.bf16.mxu0 0
        %3218 = vmatpush1.bf16.msra.mxu0 %v3070
        %3219 = vmatprep.subr.bf16.mxu0 0
        %3220 = vmatpush1.bf16.msra.mxu0 %v3071
        %3221 = vmatprep.subr.bf16.mxu0 0
        %3222 = vmatpush1.bf16.msra.mxu0 %v3072
        %3223 = vmatprep.subr.bf16.mxu0 0
        %3224 = vmatpush1.bf16.msra.mxu0 %v3073
        %3225 = vmatprep.subr.bf16.mxu0 0
        %3226 = vmatpush1.bf16.msra.mxu0 %v3074
        %3227 = vmatprep.subr.bf16.mxu0 0
        %3228 = vmatpush1.bf16.msra.mxu0 %v3075
        %3229 = vmatprep.subr.bf16.mxu0 0
        %3230 = vmatpush1.bf16.msra.mxu0 %v3076
        %3231 = vmatprep.subr.bf16.mxu0 0
        %3232 = vmatpush1.bf16.msra.mxu0 %v3077
        %3233 = vmatprep.subr.bf16.mxu0 0
        %3234 = vmatpush1.bf16.msra.mxu0 %v3078
        %3235 = vmatprep.subr.bf16.mxu0 0
        %3236 = vmatpush1.bf16.msra.mxu0 %v3079
        %3237 = vmatprep.subr.bf16.mxu0 0
        %3238 = vmatpush1.bf16.msra.mxu0 %v3080
        %3239 = vmatprep.subr.bf16.mxu0 0
        %3240 = vmatpush1.bf16.msra.mxu0 %v3081
        %3241 = vmatprep.subr.bf16.mxu0 0
        %3242 = vmatpush1.bf16.msra.mxu0 %v3082
        %3243 = vmatprep.mubr.bf16.mxu0 %v2604
        %3244 = vmatmul.mubr.bf16.gmra.mrb[0].mxu0 %v2603
        %v3245 = vpop.f32.mrb[0].mxu0
        %v3246 = vadd.f32 %v2778, %v3245
        %v3247 = vpop.f32.mrb[0].mxu0
        %v3248 = vpop.f32.mrb[0].mxu0
        %v3249 = vadd.f32 %v2778, %v3248
        %v3250 = vpop.f32.mrb[0].mxu0
        %3251 = vmatprep.mubr.bf16.mxu0 %v2610
        %3252 = vmatmul.mubr.bf16.gmra.mrb[0].mxu0 %v2609
        %v3253 = vpop.f32.mrb[0].mxu0
        %v3254 = vadd.f32 %v2778, %v3253
        %v3255 = vpop.f32.mrb[0].mxu0
        %v3256 = vpop.f32.mrb[0].mxu0
        %v3257 = vadd.f32 %v2778, %v3256
        %v3258 = vpop.f32.mrb[0].mxu0
        %3259 = vmatprep.mubr.bf16.mxu0 %v2616
        %3260 = vmatmul.mubr.bf16.gmra.mrb[0].mxu0 %v2615
        %v3261 = vpop.f32.mrb[0].mxu0
        %v3262 = vadd.f32 %v2778, %v3261
        %v3263 = vpop.f32.mrb[0].mxu0
        %v3264 = vpop.f32.mrb[0].mxu0
        %v3265 = vadd.f32 %v2778, %v3264
        %v3266 = vpop.f32.mrb[0].mxu0
        %3267 = vmatprep.mubr.bf16.mxu0 %v2622
        %3268 = vmatmul.mubr.bf16.gmra.mrb[0].mxu0 %v2621
        %v3269 = vpop.f32.mrb[0].mxu0
        %v3270 = vadd.f32 %v2778, %v3269
        %v3271 = vpop.f32.mrb[0].mxu0
        %v3272 = vpop.f32.mrb[0].mxu0
        %v3273 = vadd.f32 %v2778, %v3272
        %v3274 = vpop.f32.mrb[0].mxu0
        %3275 = vdwg.mxu0
        %3276 = vmatprep.subr.bf16.mxu0 0
        %3277 = vmatpush1.bf16.msra.mxu0 %v3083
        %3278 = vmatprep.subr.bf16.mxu0 0
        %3279 = vmatpush1.bf16.msra.mxu0 %v3084
        %3280 = vmatprep.subr.bf16.mxu0 0
        %3281 = vmatpush1.bf16.msra.mxu0 %v3085
        %3282 = vmatprep.subr.bf16.mxu0 0
        %3283 = vmatpush1.bf16.msra.mxu0 %v3086
        %3284 = vmatprep.subr.bf16.mxu0 0
        %3285 = vmatpush1.bf16.msra.mxu0 %v3087
        %3286 = vmatprep.subr.bf16.mxu0 0
        %3287 = vmatpush1.bf16.msra.mxu0 %v3088
        %3288 = vmatprep.subr.bf16.mxu0 0
        %3289 = vmatpush1.bf16.msra.mxu0 %v3089
        %3290 = vmatprep.subr.bf16.mxu0 0
        %3291 = vmatpush1.bf16.msra.mxu0 %v3090
        %3292 = vmatprep.subr.bf16.mxu0 0
        %3293 = vmatpush1.bf16.msra.mxu0 %v3091
        %3294 = vmatprep.subr.bf16.mxu0 0
        %3295 = vmatpush1.bf16.msra.mxu0 %v3092
        %3296 = vmatprep.subr.bf16.mxu0 0
        %3297 = vmatpush1.bf16.msra.mxu0 %v3093
        %3298 = vmatprep.subr.bf16.mxu0 0
        %3299 = vmatpush1.bf16.msra.mxu0 %v3094
        %3300 = vmatprep.subr.bf16.mxu0 0
        %3301 = vmatpush1.bf16.msra.mxu0 %v3095
        %3302 = vmatprep.subr.bf16.mxu0 0
        %3303 = vmatpush1.bf16.msra.mxu0 %v3096
        %3304 = vmatprep.subr.bf16.mxu0 0
        %3305 = vmatpush1.bf16.msra.mxu0 %v3097
        %3306 = vmatprep.subr.bf16.mxu0 0
        %3307 = vmatpush1.bf16.msra.mxu0 %v3098
        %3308 = vmatprep.mubr.bf16.mxu0 %v2606
        %3309 = vmatmul.mubr.bf16.gmra.mrb[0].mxu0 %v2605
        %v3310 = vpop.f32.mrb[0].mxu0
        %v3311 = vadd.f32 %v3246, %v3310
        %v3312 = vpop.f32.mrb[0].mxu0
        %v3313 = vpop.f32.mrb[0].mxu0
        %v3314 = vadd.f32 %v3249, %v3313
        %v3315 = vpop.f32.mrb[0].mxu0
        %3316 = vmatprep.mubr.bf16.mxu0 %v2612
        %3317 = vmatmul.mubr.bf16.gmra.mrb[0].mxu0 %v2611
        %v3318 = vpop.f32.mrb[0].mxu0
        %v3319 = vadd.f32 %v3254, %v3318
        %v3320 = vpop.f32.mrb[0].mxu0
        %v3321 = vpop.f32.mrb[0].mxu0
        %v3322 = vadd.f32 %v3257, %v3321
        %v3323 = vpop.f32.mrb[0].mxu0
        %3324 = vmatprep.mubr.bf16.mxu0 %v2618
        %3325 = vmatmul.mubr.bf16.gmra.mrb[0].mxu0 %v2617
        %v3326 = vpop.f32.mrb[0].mxu0
        %v3327 = vadd.f32 %v3262, %v3326
        %v3328 = vpop.f32.mrb[0].mxu0
        %v3329 = vpop.f32.mrb[0].mxu0
        %v3330 = vadd.f32 %v3265, %v3329
        %v3331 = vpop.f32.mrb[0].mxu0
        %3332 = vmatprep.mubr.bf16.mxu0 %v2624
        %3333 = vmatmul.mubr.bf16.gmra.mrb[0].mxu0 %v2623
        %v3334 = vpop.f32.mrb[0].mxu0
        %v3335 = vadd.f32 %v3270, %v3334
        %v3336 = vpop.f32.mrb[0].mxu0
        %v3337 = vpop.f32.mrb[0].mxu0
        %v3338 = vadd.f32 %v3273, %v3337
        %v3339 = vpop.f32.mrb[0].mxu0
        %3340 = vdwg.mxu0
        %3341 = vmatprep.subr.bf16.mxu0 0
        %3342 = vmatpush1.bf16.msra.mxu0 %v3099
        %3343 = vmatprep.subr.bf16.mxu0 0
        %3344 = vmatpush1.bf16.msra.mxu0 %v3100
        %3345 = vmatprep.subr.bf16.mxu0 0
        %3346 = vmatpush1.bf16.msra.mxu0 %v3101
        %3347 = vmatprep.subr.bf16.mxu0 0
        %3348 = vmatpush1.bf16.msra.mxu0 %v3102
        %3349 = vmatprep.subr.bf16.mxu0 0
        %3350 = vmatpush1.bf16.msra.mxu0 %v3103
        %3351 = vmatprep.subr.bf16.mxu0 0
        %3352 = vmatpush1.bf16.msra.mxu0 %v3104
        %3353 = vmatprep.subr.bf16.mxu0 0
        %3354 = vmatpush1.bf16.msra.mxu0 %v3105
        %3355 = vmatprep.subr.bf16.mxu0 0
        %3356 = vmatpush1.bf16.msra.mxu0 %v3106
        %3357 = vmatprep.subr.bf16.mxu0 0
        %3358 = vmatpush1.bf16.msra.mxu0 %v3107
        %3359 = vmatprep.subr.bf16.mxu0 0
        %3360 = vmatpush1.bf16.msra.mxu0 %v3108
        %3361 = vmatprep.subr.bf16.mxu0 0
        %3362 = vmatpush1.bf16.msra.mxu0 %v3109
        %3363 = vmatprep.subr.bf16.mxu0 0
        %3364 = vmatpush1.bf16.msra.mxu0 %v3110
        %3365 = vmatprep.subr.bf16.mxu0 0
        %3366 = vmatpush1.bf16.msra.mxu0 %v3111
        %3367 = vmatprep.subr.bf16.mxu0 0
        %3368 = vmatpush1.bf16.msra.mxu0 %v3112
        %3369 = vmatprep.subr.bf16.mxu0 0
        %3370 = vmatpush1.bf16.msra.mxu0 %v3113
        %3371 = vmatprep.subr.bf16.mxu0 0
        %3372 = vmatpush1.bf16.msra.mxu0 %v3114
        %3373 = vmatprep.mubr.bf16.mxu0 %v2608
        %3374 = vmatmul.mubr.bf16.gmra.mrb[0].mxu0 %v2607
        %v3375 = vpop.f32.mrb[0].mxu0
        %v3376 = vadd.f32 %v3311, %v3375
        %v3377 = vpop.f32.mrb[0].mxu0
        %v3378 = vpop.f32.mrb[0].mxu0
        %v3379 = vadd.f32 %v3314, %v3378
        %v3380 = vpop.f32.mrb[0].mxu0
        %3381 = vmatprep.mubr.bf16.mxu0 %v2614
        %3382 = vmatmul.mubr.bf16.gmra.mrb[0].mxu0 %v2613
        %v3383 = vpop.f32.mrb[0].mxu0
        %v3384 = vadd.f32 %v3319, %v3383
        %v3385 = vpop.f32.mrb[0].mxu0
        %v3386 = vpop.f32.mrb[0].mxu0
        %v3387 = vadd.f32 %v3322, %v3386
        %v3388 = vpop.f32.mrb[0].mxu0
        %3389 = vmatprep.mubr.bf16.mxu0 %v2620
        %3390 = vmatmul.mubr.bf16.gmra.mrb[0].mxu0 %v2619
        %v3391 = vpop.f32.mrb[0].mxu0
        %v3392 = vadd.f32 %v3327, %v3391
        %v3393 = vpop.f32.mrb[0].mxu0
        %v3394 = vpop.f32.mrb[0].mxu0
        %v3395 = vadd.f32 %v3330, %v3394
        %v3396 = vpop.f32.mrb[0].mxu0
        %3397 = vmatprep.mubr.bf16.mxu0 %v2626
        %3398 = vmatmul.mubr.bf16.gmra.mrb[0].mxu0 %v2625
        %v3399 = vpop.f32.mrb[0].mxu0
        %v3400 = vadd.f32 %v3335, %v3399
        %v3401 = vpop.f32.mrb[0].mxu0
        %v3402 = vpop.f32.mrb[0].mxu0
        %v3403 = vadd.f32 %v3338, %v3402
        %v3404 = vpop.f32.mrb[0].mxu0
        %3405 = vdwg.mxu0
        %3406 = vmatprep.subr.bf16.mxu0 0
        %3407 = vmatpush1.bf16.msra.mxu0 %v3115
        %3408 = vmatprep.subr.bf16.mxu0 0
        %3409 = vmatpush1.bf16.msra.mxu0 %v3116
        %3410 = vmatprep.subr.bf16.mxu0 0
        %3411 = vmatpush1.bf16.msra.mxu0 %v3117
        %3412 = vmatprep.subr.bf16.mxu0 0
        %3413 = vmatpush1.bf16.msra.mxu0 %v3118
        %3414 = vmatprep.subr.bf16.mxu0 0
        %3415 = vmatpush1.bf16.msra.mxu0 %v3119
        %3416 = vmatprep.subr.bf16.mxu0 0
        %3417 = vmatpush1.bf16.msra.mxu0 %v3120
        %3418 = vmatprep.subr.bf16.mxu0 0
        %3419 = vmatpush1.bf16.msra.mxu0 %v3121
        %3420 = vmatprep.subr.bf16.mxu0 0
        %3421 = vmatpush1.bf16.msra.mxu0 %v3122
        %3422 = vmatprep.subr.bf16.mxu0 0
        %3423 = vmatpush1.bf16.msra.mxu0 %v3123
        %3424 = vmatprep.subr.bf16.mxu0 0
        %3425 = vmatpush1.bf16.msra.mxu0 %v3124
        %3426 = vmatprep.subr.bf16.mxu0 0
        %3427 = vmatpush1.bf16.msra.mxu0 %v3125
        %3428 = vmatprep.subr.bf16.mxu0 0
        %3429 = vmatpush1.bf16.msra.mxu0 %v3126
        %3430 = vmatprep.subr.bf16.mxu0 0
        %3431 = vmatpush1.bf16.msra.mxu0 %v3127
        %3432 = vmatprep.subr.bf16.mxu0 0
        %3433 = vmatpush1.bf16.msra.mxu0 %v3128
        %3434 = vmatprep.subr.bf16.mxu0 0
        %3435 = vmatpush1.bf16.msra.mxu0 %v3129
        %3436 = vmatprep.subr.bf16.mxu0 0
        %3437 = vmatpush1.bf16.msra.mxu0 %v3130
        %3438 = vmatprep.mubr.bf16.mxu0 %v2610
        %3439 = vmatmul.mubr.bf16.gmra.mrb[0].mxu0 %v2609
        %v3440 = vpop.f32.mrb[0].mxu0
        %v3441 = vadd.f32 %v3376, %v3440
        %v3442 = vpop.f32.mrb[0].mxu0
        %v3443 = vpop.f32.mrb[0].mxu0
        %v3444 = vadd.f32 %v3379, %v3443
        %v3445 = vpop.f32.mrb[0].mxu0
        %3446 = vmatprep.mubr.bf16.mxu0 %v2616
        %3447 = vmatmul.mubr.bf16.gmra.mrb[0].mxu0 %v2615
        %v3448 = vpop.f32.mrb[0].mxu0
        %v3449 = vadd.f32 %v3384, %v3448
        %v3450 = vpop.f32.mrb[0].mxu0
        %v3451 = vpop.f32.mrb[0].mxu0
        %v3452 = vadd.f32 %v3387, %v3451
        %v3453 = vpop.f32.mrb[0].mxu0
        %3454 = vmatprep.mubr.bf16.mxu0 %v2622
        %3455 = vmatmul.mubr.bf16.gmra.mrb[0].mxu0 %v2621
        %v3456 = vpop.f32.mrb[0].mxu0
        %v3457 = vadd.f32 %v3392, %v3456
        %v3458 = vpop.f32.mrb[0].mxu0
        %v3459 = vpop.f32.mrb[0].mxu0
        %v3460 = vadd.f32 %v3395, %v3459
        %v3461 = vpop.f32.mrb[0].mxu0
        %3462 = vmatprep.mubr.bf16.mxu0 %v2628
        %3463 = vmatmul.mubr.bf16.gmra.mrb[0].mxu0 %v2627
        %v3464 = vpop.f32.mrb[0].mxu0
        %v3465 = vadd.f32 %v3400, %v3464
        %v3466 = vpop.f32.mrb[0].mxu0
        %v3467 = vpop.f32.mrb[0].mxu0
        %v3468 = vadd.f32 %v3403, %v3467
        %v3469 = vpop.f32.mrb[0].mxu0
        %3470 = vdwg.mxu0
        %3471 = vmatprep.subr.bf16.mxu0 0
        %3472 = vmatpush1.bf16.msra.mxu0 %v3131
        %3473 = vmatprep.subr.bf16.mxu0 0
        %3474 = vmatpush1.bf16.msra.mxu0 %v3132
        %3475 = vmatprep.subr.bf16.mxu0 0
        %3476 = vmatpush1.bf16.msra.mxu0 %v3133
        %3477 = vmatprep.subr.bf16.mxu0 0
        %3478 = vmatpush1.bf16.msra.mxu0 %v3134
        %3479 = vmatprep.subr.bf16.mxu0 0
        %3480 = vmatpush1.bf16.msra.mxu0 %v3135
        %3481 = vmatprep.subr.bf16.mxu0 0
        %3482 = vmatpush1.bf16.msra.mxu0 %v3136
        %3483 = vmatprep.subr.bf16.mxu0 0
        %3484 = vmatpush1.bf16.msra.mxu0 %v3137
        %3485 = vmatprep.subr.bf16.mxu0 0
        %3486 = vmatpush1.bf16.msra.mxu0 %v3138
        %3487 = vmatprep.subr.bf16.mxu0 0
        %3488 = vmatpush1.bf16.msra.mxu0 0
        %3489 = vmatprep.subr.bf16.mxu0 0
        %3490 = vmatpush1.bf16.msra.mxu0 0
        %3491 = vmatprep.subr.bf16.mxu0 0
        %3492 = vmatpush1.bf16.msra.mxu0 0
        %3493 = vmatprep.subr.bf16.mxu0 0
        %3494 = vmatpush1.bf16.msra.mxu0 0
        %3495 = vmatprep.subr.bf16.mxu0 0
        %3496 = vmatpush1.bf16.msra.mxu0 0
        %3497 = vmatprep.subr.bf16.mxu0 0
        %3498 = vmatpush1.bf16.msra.mxu0 0
        %3499 = vmatprep.subr.bf16.mxu0 0
        %3500 = vmatpush1.bf16.msra.mxu0 0
        %3501 = vmatprep.subr.bf16.mxu0 0
        %3502 = vmatpush1.bf16.msra.mxu0 0
        %3503 = vmatprep.mubr.bf16.mxu0 0
        %3504 = vmatmul.mubr.bf16.gmra.mrb[0].mxu0 %v2611
        %v3505 = vpop.f32.mrb[0].mxu0
        %v3506 = vadd.f32 %v3441, %v3505
        %v3507 = vpop.f32.mrb[0].mxu0
        %v3508 = vpop.f32.mrb[0].mxu0
        %v3509 = vadd.f32 %v3444, %v3508
        %v3510 = vpop.f32.mrb[0].mxu0
        %3511 = vmatprep.mubr.bf16.mxu0 0
        %3512 = vmatmul.mubr.bf16.gmra.mrb[0].mxu0 %v2617
        %v3513 = vpop.f32.mrb[0].mxu0
        %v3514 = vadd.f32 %v3449, %v3513
        %v3515 = vpop.f32.mrb[0].mxu0
        %v3516 = vpop.f32.mrb[0].mxu0
        %v3517 = vadd.f32 %v3452, %v3516
        %v3518 = vpop.f32.mrb[0].mxu0
        %3519 = vmatprep.mubr.bf16.mxu0 0
        %3520 = vmatmul.mubr.bf16.gmra.mrb[0].mxu0 %v2623
        %v3521 = vpop.f32.mrb[0].mxu0
        %v3522 = vadd.f32 %v3457, %v3521
        %v3523 = vpop.f32.mrb[0].mxu0
        %v3524 = vpop.f32.mrb[0].mxu0
        %v3525 = vadd.f32 %v3460, %v3524
        %v3526 = vpop.f32.mrb[0].mxu0
        %3527 = vmatprep.mubr.bf16.mxu0 0
        %3528 = vmatmul.mubr.bf16.gmra.mrb[0].mxu0 %v2629
        %v3529 = vpop.f32.mrb[0].mxu0
        %v3530 = vadd.f32 %v3465, %v3529
        %v3531 = vpop.f32.mrb[0].mxu0
        %v3532 = vpop.f32.mrb[0].mxu0
        %v3533 = vadd.f32 %v3468, %v3532
        %v3534 = vpop.f32.mrb[0].mxu0
        %3535 = vdwg.mxu0
        %v3536 = vmax.f32 %v3506, 0.0
        %v3537 = vmax.f32 %v3509, 0.0
        %v3538 = vmax.f32 %v3514, 0.0
        %v3539 = vmax.f32 %v3517, 0.0
        %v3540 = vmax.f32 %v3522, 0.0
        %v3541 = vmax.f32 %v3525, 0.0
        %v3542 = vmax.f32 %v3530, 0.0
        %v3543 = vmax.f32 %v3533, 0.0
        %v3552 = vrot.slane %v3536, 7
        %v3553 = vrot.slane %v3537, 7
        %v3554 = vrot.slane %v3538, 7
        %v3555 = vrot.slane %v3539, 7
        %v3556 = vrot.slane %v3540, 7
        %v3557 = vrot.slane %v3541, 7
        %v3558 = vrot.slane %v3542, 7
        %v3559 = vrot.slane %v3543, 7
        %v3568 = vsel %vm352, 0.0, %v3552
        %v3569 = vsel %vm352, 0.0, %v3553
        %v3570 = vsel %vm352, 0.0, %v3554
        %v3571 = vsel %vm352, 0.0, %v3555
        %v3572 = vsel %vm352, 0.0, %v3556
        %v3573 = vsel %vm352, 0.0, %v3557
        %v3574 = vsel %vm352, 0.0, %v3558
        %v3575 = vsel %vm352, 0.0, %v3559
        %v3576 = vsel %vm352, %v3552, 0.0
        %v3577 = vsel %vm352, %v3553, 0.0
        %v3578 = vsel %vm352, %v3554, 0.0
        %v3579 = vsel %vm352, %v3555, 0.0
        %v3580 = vsel %vm352, %v3556, 0.0
        %v3581 = vsel %vm352, %v3557, 0.0
        %v3582 = vsel %vm352, %v3558, 0.0
        %v3583 = vsel %vm352, %v3559, 0.0
        %v3598 = vrot.slane %v3568, 1
        %v3599 = vrot.slane %v3576, 1
        %v3600 = vsel %vm384, %v3598, %v3599
        %v3601 = vrot.slane %v3569, 1
        %v3602 = vrot.slane %v3577, 1
        %v3603 = vsel %vm384, %v3601, %v3602
        %v3604 = vrot.slane %v3570, 1
        %v3605 = vrot.slane %v3578, 1
        %v3606 = vsel %vm384, %v3604, %v3605
        %v3607 = vrot.slane %v3571, 1
        %v3608 = vrot.slane %v3579, 1
        %v3609 = vsel %vm384, %v3607, %v3608
        %v3610 = vrot.slane %v3572, 1
        %v3611 = vrot.slane %v3580, 1
        %v3612 = vsel %vm384, %v3610, %v3611
        %v3613 = vrot.slane %v3573, 1
        %v3614 = vrot.slane %v3581, 1
        %v3615 = vsel %vm384, %v3613, %v3614
        %v3616 = vrot.slane %v3574, 1
        %v3617 = vrot.slane %v3582, 1
        %v3618 = vsel %vm384, %v3616, %v3617
        %v3626 = vrot.slane %v3568, 2
        %v3627 = vrot.slane %v3576, 2
        %v3628 = vsel %vm416, %v3626, %v3627
        %v3629 = vrot.slane %v3569, 2
        %v3630 = vrot.slane %v3577, 2
        %v3631 = vsel %vm416, %v3629, %v3630
        %v3632 = vrot.slane %v3570, 2
        %v3633 = vrot.slane %v3578, 2
        %v3634 = vsel %vm416, %v3632, %v3633
        %v3635 = vrot.slane %v3571, 2
        %v3636 = vrot.slane %v3579, 2
        %v3637 = vsel %vm416, %v3635, %v3636
        %v3638 = vrot.slane %v3572, 2
        %v3639 = vrot.slane %v3580, 2
        %v3640 = vsel %vm416, %v3638, %v3639
        %v3641 = vrot.slane %v3573, 2
        %v3642 = vrot.slane %v3581, 2
        %v3643 = vsel %vm416, %v3641, %v3642
        %v3644 = vrot.slane %v3574, 2
        %v3645 = vrot.slane %v3582, 2
        %v3646 = vsel %vm416, %v3644, %v3645
        %v3656 = vrot.slane %v3575, 1
        %v3657 = vrot.slane %v3583, 1
        %v3658 = vsel %vm384, %v3656, %v3657
        %v3660 = vrot.slane %v3575, 2
        %v3661 = vrot.slane %v3583, 2
        %v3662 = vsel %vm416, %v3660, %v3661
        %v3664 = vpack.c.bf16 %v3568, 0.0
        %v3665 = vpack.c.bf16 %v3600, %v386
        %v3666 = vpack.c.bf16 %v3628, %v418
        %v3667 = vpack.c.bf16 %v3569, %v3568
        %v3668 = vpack.c.bf16 %v3603, %v3600
        %v3669 = vpack.c.bf16 %v3631, %v3628
        %v3670 = vpack.c.bf16 %v3570, %v3569
        %v3671 = vpack.c.bf16 %v3606, %v3603
        %v3672 = vpack.c.bf16 %v3634, %v3631
        %v3673 = vpack.c.bf16 %v3571, %v3570
        %v3674 = vpack.c.bf16 %v3609, %v3606
        %v3675 = vpack.c.bf16 %v3637, %v3634
        %v3676 = vpack.c.bf16 %v3572, %v3571
        %v3677 = vpack.c.bf16 %v3612, %v3609
        %v3678 = vpack.c.bf16 %v3640, %v3637
        %v3679 = vpack.c.bf16 %v3573, %v3572
        %v3680 = vpack.c.bf16 %v3615, %v3612
        %v3681 = vpack.c.bf16 %v3643, %v3640
        %v3682 = vpack.c.bf16 %v3574, %v3573
        %v3683 = vpack.c.bf16 %v3618, %v3615
        %v3684 = vpack.c.bf16 %v3646, %v3643
        %v3685 = vpack.c.bf16 %v3575, %v3574
        %v3686 = vpack.c.bf16 %v3658, %v3618
        %v3687 = vpack.c.bf16 %v3662, %v3646
        %v3688 = vpack.c.bf16 0.0, %v3575
        %v3689 = vpack.c.bf16 %v386, %v3658
        %v3690 = vpack.c.bf16 %v418, %v3662
        %s3691 = scalar_lea.vmem [#allocation7], 1728
        %v3692 = vld [vmem:[%s3691] sm:$0xf]
        %v3693 = vld [vmem:[%s3691 + $0x4] sm:$0xf]
        %v3694 = vld [vmem:[%s3691 + $0x8] sm:$0xf]
        %v3695 = vld [vmem:[%s3691 + $0xc] sm:$0xf]
        %v3696 = vld [vmem:[%s3691 + $0x10] sm:$0xf]
        %v3697 = vld [vmem:[%s3691 + $0x14] sm:$0xf]
        %v3698 = vld [vmem:[%s3691 + $0x18] sm:$0xf]
        %v3699 = vld [vmem:[%s3691 + $0x1c] sm:$0xf]
        %v3700 = vld [vmem:[%s3691 + $0x20] sm:$0xf]
        %v3701 = vld [vmem:[%s3691 + $0x24] sm:$0xf]
        %v3702 = vld [vmem:[%s3691 + $0x28] sm:$0xf]
        %v3703 = vld [vmem:[%s3691 + $0x2c] sm:$0xf]
        %v3704 = vld [vmem:[%s3691 + $0x30] sm:$0xf]
        %v3705 = vld [vmem:[%s3691 + $0x34] sm:$0xf]
        %v3706 = vld [vmem:[%s3691 + $0x38] sm:$0xf]
        %v3707 = vld [vmem:[%s3691 + $0x3c] sm:$0xf]
        %v3708 = vld [vmem:[%s3691 + $0x40] sm:$0xf]
        %v3709 = vld [vmem:[%s3691 + $0x44] sm:$0xf]
        %v3710 = vld [vmem:[%s3691 + $0x48] sm:$0xf]
        %v3711 = vld [vmem:[%s3691 + $0x4c] sm:$0xf]
        %v3712 = vld [vmem:[%s3691 + $0x50] sm:$0xf]
        %v3713 = vld [vmem:[%s3691 + $0x54] sm:$0xf]
        %v3714 = vld [vmem:[%s3691 + $0x58] sm:$0xf]
        %v3715 = vld [vmem:[%s3691 + $0x5c] sm:$0xf]
        %v3716 = vld [vmem:[%s3691 + $0x60] sm:$0xf]
        %v3717 = vld [vmem:[%s3691 + $0x64] sm:$0xf]
        %v3718 = vld [vmem:[%s3691 + $0x68] sm:$0xf]
        %v3719 = vld [vmem:[%s3691 + $0x6c] sm:$0xf]
        %v3720 = vld [vmem:[%s3691 + $0x70] sm:$0xf]
        %v3721 = vld [vmem:[%s3691 + $0x74] sm:$0xf]
        %v3722 = vld [vmem:[%s3691 + $0x78] sm:$0xf]
        %v3723 = vld [vmem:[%s3691 + $0x7c] sm:$0xf]
        %v3724 = vld [vmem:[%s3691 + $0x80] sm:$0xf]
        %v3725 = vld [vmem:[%s3691 + $0x84] sm:$0xf]
        %v3726 = vld [vmem:[%s3691 + $0x88] sm:$0xf]
        %v3727 = vld [vmem:[%s3691 + $0x8c] sm:$0xf]
        %v3728 = vld [vmem:[%s3691 + $0x90] sm:$0xf]
        %v3729 = vld [vmem:[%s3691 + $0x94] sm:$0xf]
        %v3730 = vld [vmem:[%s3691 + $0x98] sm:$0xf]
        %v3731 = vld [vmem:[%s3691 + $0x9c] sm:$0xf]
        %v3732 = vld [vmem:[%s3691 + $0xa0] sm:$0xf]
        %v3733 = vld [vmem:[%s3691 + $0xa4] sm:$0xf]
        %v3734 = vld [vmem:[%s3691 + $0xa8] sm:$0xf]
        %v3735 = vld [vmem:[%s3691 + $0xac] sm:$0xf]
        %v3736 = vld [vmem:[%s3691 + $0xb0] sm:$0xf]
        %v3737 = vld [vmem:[%s3691 + $0xb4] sm:$0xf]
        %v3738 = vld [vmem:[%s3691 + $0xb8] sm:$0xf]
        %v3739 = vld [vmem:[%s3691 + $0xbc] sm:$0xf]
        %v3740 = vld [vmem:[%s3691 + $0xc0] sm:$0xf]
        %v3741 = vld [vmem:[%s3691 + $0xc4] sm:$0xf]
        %v3742 = vld [vmem:[%s3691 + $0xc8] sm:$0xf]
        %v3743 = vld [vmem:[%s3691 + $0xcc] sm:$0xf]
        %v3744 = vld [vmem:[%s3691 + $0xd0] sm:$0xf]
        %v3745 = vld [vmem:[%s3691 + $0xd4] sm:$0xf]
        %v3746 = vld [vmem:[%s3691 + $0xd8] sm:$0xf]
        %v3747 = vld [vmem:[%s3691 + $0xdc] sm:$0xf]
        %v3748 = vld [vmem:[%s3691 + $0xe0] sm:$0xf]
        %v3749 = vld [vmem:[%s3691 + $0xe4] sm:$0xf]
        %v3750 = vld [vmem:[%s3691 + $0xe8] sm:$0xf]
        %v3751 = vld [vmem:[%s3691 + $0xec] sm:$0xf]
        %v3752 = vld [vmem:[%s3691 + $0xf0] sm:$0xf]
        %v3753 = vld [vmem:[%s3691 + $0xf4] sm:$0xf]
        %v3754 = vld [vmem:[%s3691 + $0xf8] sm:$0xf]
        %v3755 = vld [vmem:[%s3691 + $0xfc] sm:$0xf]
        %v3756 = vld [vmem:[%s3691 + $0x100] sm:$0xf]
        %v3757 = vld [vmem:[%s3691 + $0x104] sm:$0xf]
        %v3758 = vld [vmem:[%s3691 + $0x108] sm:$0xf]
        %v3759 = vld [vmem:[%s3691 + $0x10c] sm:$0xf]
        %v3760 = vld [vmem:[%s3691 + $0x110] sm:$0xf]
        %v3761 = vld [vmem:[%s3691 + $0x114] sm:$0xf]
        %v3762 = vld [vmem:[%s3691 + $0x118] sm:$0xf]
        %v3763 = vld [vmem:[%s3691 + $0x11c] sm:$0xf]
        %v3764 = vld [vmem:[%s3691 + $0x120] sm:$0xf]
        %v3765 = vld [vmem:[%s3691 + $0x124] sm:$0xf]
        %v3766 = vld [vmem:[%s3691 + $0x128] sm:$0xf]
        %v3767 = vld [vmem:[%s3691 + $0x12c] sm:$0xf]
        %v3768 = vld [vmem:[%s3691 + $0x130] sm:$0xf]
        %v3769 = vld [vmem:[%s3691 + $0x134] sm:$0xf]
        %v3770 = vld [vmem:[%s3691 + $0x138] sm:$0xf]
        %v3771 = vld [vmem:[%s3691 + $0x13c] sm:$0xf]
        %v3772 = vld [vmem:[%s3691 + $0x140] sm:$0xf]
        %v3773 = vld [vmem:[%s3691 + $0x144] sm:$0xf]
        %v3774 = vld [vmem:[%s3691 + $0x148] sm:$0xf]
        %v3775 = vld [vmem:[%s3691 + $0x14c] sm:$0xf]
        %v3776 = vld [vmem:[%s3691 + $0x150] sm:$0xf]
        %v3777 = vld [vmem:[%s3691 + $0x154] sm:$0xf]
        %v3778 = vld [vmem:[%s3691 + $0x158] sm:$0xf]
        %v3779 = vld [vmem:[%s3691 + $0x15c] sm:$0xf]
        %v3780 = vld [vmem:[%s3691 + $0x160] sm:$0xf]
        %v3781 = vld [vmem:[%s3691 + $0x164] sm:$0xf]
        %v3782 = vld [vmem:[%s3691 + $0x168] sm:$0xf]
        %v3783 = vld [vmem:[%s3691 + $0x16c] sm:$0xf]
        %v3784 = vld [vmem:[%s3691 + $0x170] sm:$0xf]
        %v3785 = vld [vmem:[%s3691 + $0x174] sm:$0xf]
        %v3786 = vld [vmem:[%s3691 + $0x178] sm:$0xf]
        %v3787 = vld [vmem:[%s3691 + $0x17c] sm:$0xf]
        %v3788 = vld [vmem:[%s3691 + $0x180] sm:$0xf]
        %v3789 = vld [vmem:[%s3691 + $0x184] sm:$0xf]
        %v3790 = vld [vmem:[%s3691 + $0x188] sm:$0xf]
        %v3791 = vld [vmem:[%s3691 + $0x18c] sm:$0xf]
        %v3792 = vld [vmem:[%s3691 + $0x190] sm:$0xf]
        %v3793 = vld [vmem:[%s3691 + $0x194] sm:$0xf]
        %v3794 = vld [vmem:[%s3691 + $0x198] sm:$0xf]
        %v3795 = vld [vmem:[%s3691 + $0x19c] sm:$0xf]
        %v3796 = vld [vmem:[%s3691 + $0x1a0] sm:$0xf]
        %v3797 = vld [vmem:[%s3691 + $0x1a4] sm:$0xf]
        %v3798 = vld [vmem:[%s3691 + $0x1a8] sm:$0xf]
        %v3799 = vld [vmem:[%s3691 + $0x1ac] sm:$0xf]
        %v3800 = vld [vmem:[%s3691 + $0x1b0] sm:$0xf]
        %v3801 = vld [vmem:[%s3691 + $0x1b4] sm:$0xf]
        %v3802 = vld [vmem:[%s3691 + $0x1b8] sm:$0xf]
        %v3803 = vld [vmem:[%s3691 + $0x1bc] sm:$0xf]
        %v3804 = vld [vmem:[%s3691 + $0x1c0] sm:$0xf]
        %v3805 = vld [vmem:[%s3691 + $0x1c4] sm:$0xf]
        %v3806 = vld [vmem:[%s3691 + $0x1c8] sm:$0xf]
        %v3807 = vld [vmem:[%s3691 + $0x1cc] sm:$0xf]
        %v3808 = vld [vmem:[%s3691 + $0x1d0] sm:$0xf]
        %v3809 = vld [vmem:[%s3691 + $0x1d4] sm:$0xf]
        %v3810 = vld [vmem:[%s3691 + $0x1d8] sm:$0xf]
        %v3811 = vld [vmem:[%s3691 + $0x1dc] sm:$0xf]
        %v3812 = vld [vmem:[%s3691 + $0x1e0] sm:$0xf]
        %v3813 = vld [vmem:[%s3691 + $0x1e4] sm:$0xf]
        %v3814 = vld [vmem:[%s3691 + $0x1e8] sm:$0xf]
        %v3815 = vld [vmem:[%s3691 + $0x1ec] sm:$0xf]
        %v3816 = vld [vmem:[%s3691 + $0x1f0] sm:$0xf]
        %v3817 = vld [vmem:[%s3691 + $0x1f4] sm:$0xf]
        %v3818 = vld [vmem:[%s3691 + $0x1f8] sm:$0xf]
        %v3819 = vld [vmem:[%s3691 + $0x1fc] sm:$0xf]
        %v3820 = vld [vmem:[%s3691 + $0x200] sm:$0xf]
        %v3821 = vld [vmem:[%s3691 + $0x204] sm:$0xf]
        %v3822 = vld [vmem:[%s3691 + $0x208] sm:$0xf]
        %v3823 = vld [vmem:[%s3691 + $0x20c] sm:$0xf]
        %v3824 = vld [vmem:[%s3691 + $0x210] sm:$0xf]
        %v3825 = vld [vmem:[%s3691 + $0x214] sm:$0xf]
        %v3826 = vld [vmem:[%s3691 + $0x218] sm:$0xf]
        %v3827 = vld [vmem:[%s3691 + $0x21c] sm:$0xf]
        %v3828 = vld [vmem:[%s3691 + $0x220] sm:$0xf]
        %v3829 = vld [vmem:[%s3691 + $0x224] sm:$0xf]
        %v3830 = vld [vmem:[%s3691 + $0x228] sm:$0xf]
        %v3831 = vld [vmem:[%s3691 + $0x22c] sm:$0xf]
        %v3832 = vld [vmem:[%s3691 + $0x230] sm:$0xf]
        %v3833 = vld [vmem:[%s3691 + $0x234] sm:$0xf]
        %v3834 = vld [vmem:[%s3691 + $0x238] sm:$0xf]
        %v3835 = vld [vmem:[%s3691 + $0x23c] sm:$0xf]
        %v3836 = vlaneseq
        %v3837 = vshrl.u32 %v3836, 7
        %v3838 = vsub.s32 3, %v3837
        %v3839 = vrot.slane %v319, %v3838
        %v3984 = vunpack.c.l.b16 %v3692
        %v3985 = vunpack.c.l.b16 %v3693
        %v3986 = vunpack.c.l.b16 %v3694
        %v3987 = vunpack.c.l.b16 %v3695
        %v3988 = vunpack.c.l.b16 %v3696
        %v3989 = vunpack.c.l.b16 %v3697
        %v3990 = vunpack.c.l.b16 %v3698
        %v3991 = vunpack.c.l.b16 %v3699
        %v3992 = vunpack.c.l.b16 %v3700
        %v3993 = vunpack.c.l.b16 %v3701
        %v3994 = vunpack.c.l.b16 %v3702
        %v3995 = vunpack.c.l.b16 %v3703
        %v3996 = vunpack.c.l.b16 %v3704
        %v3997 = vunpack.c.l.b16 %v3705
        %v3998 = vunpack.c.l.b16 %v3706
        %v3999 = vunpack.c.l.b16 %v3707
        %v4000 = vunpack.c.l.b16 %v3708
        %v4001 = vunpack.c.l.b16 %v3709
        %v4002 = vunpack.c.l.b16 %v3710
        %v4003 = vunpack.c.l.b16 %v3711
        %v4004 = vunpack.c.l.b16 %v3712
        %v4005 = vunpack.c.l.b16 %v3713
        %v4006 = vunpack.c.l.b16 %v3714
        %v4007 = vunpack.c.l.b16 %v3715
        %v4008 = vunpack.c.l.b16 %v3716
        %v4009 = vunpack.c.l.b16 %v3717
        %v4010 = vunpack.c.l.b16 %v3718
        %v4011 = vunpack.c.l.b16 %v3719
        %v4012 = vunpack.c.l.b16 %v3720
        %v4013 = vunpack.c.l.b16 %v3721
        %v4014 = vunpack.c.l.b16 %v3722
        %v4015 = vunpack.c.l.b16 %v3723
        %v4016 = vunpack.c.l.b16 %v3724
        %v4017 = vunpack.c.l.b16 %v3725
        %v4018 = vunpack.c.l.b16 %v3726
        %v4019 = vunpack.c.l.b16 %v3727
        %v4020 = vunpack.c.l.b16 %v3728
        %v4021 = vunpack.c.l.b16 %v3729
        %v4022 = vunpack.c.l.b16 %v3730
        %v4023 = vunpack.c.l.b16 %v3731
        %v4024 = vunpack.c.l.b16 %v3732
        %v4025 = vunpack.c.l.b16 %v3733
        %v4026 = vunpack.c.l.b16 %v3734
        %v4027 = vunpack.c.l.b16 %v3735
        %v4028 = vunpack.c.l.b16 %v3736
        %v4029 = vunpack.c.l.b16 %v3737
        %v4030 = vunpack.c.l.b16 %v3738
        %v4031 = vunpack.c.l.b16 %v3739
        %v4032 = vunpack.c.l.b16 %v3740
        %v4033 = vunpack.c.l.b16 %v3741
        %v4034 = vunpack.c.l.b16 %v3742
        %v4035 = vunpack.c.l.b16 %v3743
        %v4036 = vunpack.c.l.b16 %v3744
        %v4037 = vunpack.c.l.b16 %v3745
        %v4038 = vunpack.c.l.b16 %v3746
        %v4039 = vunpack.c.l.b16 %v3747
        %v4040 = vunpack.c.l.b16 %v3748
        %v4041 = vunpack.c.l.b16 %v3749
        %v4042 = vunpack.c.l.b16 %v3750
        %v4043 = vunpack.c.l.b16 %v3751
        %v4044 = vunpack.c.l.b16 %v3752
        %v4045 = vunpack.c.l.b16 %v3753
        %v4046 = vunpack.c.l.b16 %v3754
        %v4047 = vunpack.c.l.b16 %v3755
        %v4048 = vunpack.c.l.b16 %v3756
        %v4049 = vunpack.c.l.b16 %v3757
        %v4050 = vunpack.c.l.b16 %v3758
        %v4051 = vunpack.c.l.b16 %v3759
        %v4052 = vunpack.c.l.b16 %v3760
        %v4053 = vunpack.c.l.b16 %v3761
        %v4054 = vunpack.c.l.b16 %v3762
        %v4055 = vunpack.c.l.b16 %v3763
        %v4056 = vunpack.c.l.b16 %v3764
        %v4057 = vunpack.c.l.b16 %v3765
        %v4058 = vunpack.c.l.b16 %v3766
        %v4059 = vunpack.c.l.b16 %v3767
        %v4060 = vunpack.c.l.b16 %v3768
        %v4061 = vunpack.c.l.b16 %v3769
        %v4062 = vunpack.c.l.b16 %v3770
        %v4063 = vunpack.c.l.b16 %v3771
        %v4064 = vunpack.c.l.b16 %v3772
        %v4065 = vunpack.c.l.b16 %v3773
        %v4066 = vunpack.c.l.b16 %v3774
        %v4067 = vunpack.c.l.b16 %v3775
        %v4068 = vunpack.c.l.b16 %v3776
        %v4069 = vunpack.c.l.b16 %v3777
        %v4070 = vunpack.c.l.b16 %v3778
        %v4071 = vunpack.c.l.b16 %v3779
        %v4072 = vunpack.c.l.b16 %v3780
        %v4073 = vunpack.c.l.b16 %v3781
        %v4074 = vunpack.c.l.b16 %v3782
        %v4075 = vunpack.c.l.b16 %v3783
        %v4076 = vunpack.c.l.b16 %v3784
        %v4077 = vunpack.c.l.b16 %v3785
        %v4078 = vunpack.c.l.b16 %v3786
        %v4079 = vunpack.c.l.b16 %v3787
        %v4080 = vunpack.c.l.b16 %v3788
        %v4081 = vunpack.c.l.b16 %v3789
        %v4082 = vunpack.c.l.b16 %v3790
        %v4083 = vunpack.c.l.b16 %v3791
        %v4084 = vunpack.c.l.b16 %v3792
        %v4085 = vunpack.c.l.b16 %v3793
        %v4086 = vunpack.c.l.b16 %v3794
        %v4087 = vunpack.c.l.b16 %v3795
        %v4088 = vunpack.c.l.b16 %v3796
        %v4089 = vunpack.c.l.b16 %v3797
        %v4090 = vunpack.c.l.b16 %v3798
        %v4091 = vunpack.c.l.b16 %v3799
        %v4092 = vunpack.c.l.b16 %v3800
        %v4093 = vunpack.c.l.b16 %v3801
        %v4094 = vunpack.c.l.b16 %v3802
        %v4095 = vunpack.c.l.b16 %v3803
        %v4096 = vunpack.c.l.b16 %v3804
        %v4097 = vunpack.c.l.b16 %v3805
        %v4098 = vunpack.c.l.b16 %v3806
        %v4099 = vunpack.c.l.b16 %v3807
        %v4100 = vunpack.c.l.b16 %v3808
        %v4101 = vunpack.c.l.b16 %v3809
        %v4102 = vunpack.c.l.b16 %v3810
        %v4103 = vunpack.c.l.b16 %v3811
        %v4104 = vunpack.c.l.b16 %v3812
        %v4105 = vunpack.c.l.b16 %v3813
        %v4106 = vunpack.c.l.b16 %v3814
        %v4107 = vunpack.c.l.b16 %v3815
        %v4108 = vunpack.c.l.b16 %v3816
        %v4109 = vunpack.c.l.b16 %v3817
        %v4110 = vunpack.c.l.b16 %v3818
        %v4111 = vunpack.c.l.b16 %v3819
        %v4112 = vunpack.c.l.b16 %v3820
        %v4113 = vunpack.c.l.b16 %v3821
        %v4114 = vunpack.c.l.b16 %v3822
        %v4115 = vunpack.c.l.b16 %v3823
        %v4116 = vunpack.c.l.b16 %v3824
        %v4117 = vunpack.c.l.b16 %v3825
        %v4118 = vunpack.c.l.b16 %v3826
        %v4119 = vunpack.c.l.b16 %v3827
        %v4120 = vunpack.c.l.b16 %v3828
        %v4121 = vunpack.c.l.b16 %v3829
        %v4122 = vunpack.c.l.b16 %v3830
        %v4123 = vunpack.c.l.b16 %v3831
        %v4124 = vunpack.c.l.b16 %v3832
        %v4125 = vunpack.c.l.b16 %v3833
        %v4126 = vunpack.c.l.b16 %v3834
        %v4127 = vunpack.c.l.b16 %v3835
        %v4128 = vpack.c.b16 %v3985, %v3984
        %v4129 = vpack.c.b16 %v3987, %v3986
        %v4130 = vpack.c.b16 %v3989, %v3988
        %v4131 = vpack.c.b16 %v3991, %v3990
        %v4132 = vpack.c.b16 %v3993, %v3992
        %v4133 = vpack.c.b16 %v3995, %v3994
        %v4134 = vpack.c.b16 %v3997, %v3996
        %v4135 = vpack.c.b16 %v3999, %v3998
        %v4136 = vpack.c.b16 %v4001, %v4000
        %v4137 = vpack.c.b16 %v4003, %v4002
        %v4138 = vpack.c.b16 %v4005, %v4004
        %v4139 = vpack.c.b16 %v4007, %v4006
        %v4140 = vpack.c.b16 %v4009, %v4008
        %v4141 = vpack.c.b16 %v4011, %v4010
        %v4142 = vpack.c.b16 %v4013, %v4012
        %v4143 = vpack.c.b16 %v4015, %v4014
        %v4144 = vpack.c.b16 %v4017, %v4016
        %v4145 = vpack.c.b16 %v4019, %v4018
        %v4146 = vpack.c.b16 %v4021, %v4020
        %v4147 = vpack.c.b16 %v4023, %v4022
        %v4148 = vpack.c.b16 %v4025, %v4024
        %v4149 = vpack.c.b16 %v4027, %v4026
        %v4150 = vpack.c.b16 %v4029, %v4028
        %v4151 = vpack.c.b16 %v4031, %v4030
        %v4152 = vpack.c.b16 %v4033, %v4032
        %v4153 = vpack.c.b16 %v4035, %v4034
        %v4154 = vpack.c.b16 %v4037, %v4036
        %v4155 = vpack.c.b16 %v4039, %v4038
        %v4156 = vpack.c.b16 %v4041, %v4040
        %v4157 = vpack.c.b16 %v4043, %v4042
        %v4158 = vpack.c.b16 %v4045, %v4044
        %v4159 = vpack.c.b16 %v4047, %v4046
        %v4160 = vpack.c.b16 %v4049, %v4048
        %v4161 = vpack.c.b16 %v4051, %v4050
        %v4162 = vpack.c.b16 %v4053, %v4052
        %v4163 = vpack.c.b16 %v4055, %v4054
        %v4164 = vpack.c.b16 %v4057, %v4056
        %v4165 = vpack.c.b16 %v4059, %v4058
        %v4166 = vpack.c.b16 %v4061, %v4060
        %v4167 = vpack.c.b16 %v4063, %v4062
        %v4168 = vpack.c.b16 %v4065, %v4064
        %v4169 = vpack.c.b16 %v4067, %v4066
        %v4170 = vpack.c.b16 %v4069, %v4068
        %v4171 = vpack.c.b16 %v4071, %v4070
        %v4172 = vpack.c.b16 %v4073, %v4072
        %v4173 = vpack.c.b16 %v4075, %v4074
        %v4174 = vpack.c.b16 %v4077, %v4076
        %v4175 = vpack.c.b16 %v4079, %v4078
        %v4176 = vpack.c.b16 %v4081, %v4080
        %v4177 = vpack.c.b16 %v4083, %v4082
        %v4178 = vpack.c.b16 %v4085, %v4084
        %v4179 = vpack.c.b16 %v4087, %v4086
        %v4180 = vpack.c.b16 %v4089, %v4088
        %v4181 = vpack.c.b16 %v4091, %v4090
        %v4182 = vpack.c.b16 %v4093, %v4092
        %v4183 = vpack.c.b16 %v4095, %v4094
        %v4184 = vpack.c.b16 %v4097, %v4096
        %v4185 = vpack.c.b16 %v4099, %v4098
        %v4186 = vpack.c.b16 %v4101, %v4100
        %v4187 = vpack.c.b16 %v4103, %v4102
        %v4188 = vpack.c.b16 %v4105, %v4104
        %v4189 = vpack.c.b16 %v4107, %v4106
        %v4190 = vpack.c.b16 %v4109, %v4108
        %v4191 = vpack.c.b16 %v4111, %v4110
        %v4192 = vpack.c.b16 %v4113, %v4112
        %v4193 = vpack.c.b16 %v4115, %v4114
        %v4194 = vpack.c.b16 %v4117, %v4116
        %v4195 = vpack.c.b16 %v4119, %v4118
        %v4196 = vpack.c.b16 %v4121, %v4120
        %v4197 = vpack.c.b16 %v4123, %v4122
        %v4198 = vpack.c.b16 %v4125, %v4124
        %v4199 = vpack.c.b16 %v4127, %v4126
        %4272 = vmatprep.subr.bf16.mxu0 0
        %4273 = vmatpush1.bf16.msra.mxu0 %v4128
        %4274 = vmatprep.subr.bf16.mxu0 0
        %4275 = vmatpush1.bf16.msra.mxu0 %v4129
        %4276 = vmatprep.subr.bf16.mxu0 0
        %4277 = vmatpush1.bf16.msra.mxu0 %v4130
        %4278 = vmatprep.subr.bf16.mxu0 0
        %4279 = vmatpush1.bf16.msra.mxu0 %v4131
        %4280 = vmatprep.subr.bf16.mxu0 0
        %4281 = vmatpush1.bf16.msra.mxu0 %v4132
        %4282 = vmatprep.subr.bf16.mxu0 0
        %4283 = vmatpush1.bf16.msra.mxu0 %v4133
        %4284 = vmatprep.subr.bf16.mxu0 0
        %4285 = vmatpush1.bf16.msra.mxu0 %v4134
        %4286 = vmatprep.subr.bf16.mxu0 0
        %4287 = vmatpush1.bf16.msra.mxu0 %v4135
        %4288 = vmatprep.subr.bf16.mxu0 0
        %4289 = vmatpush1.bf16.msra.mxu0 %v4136
        %4290 = vmatprep.subr.bf16.mxu0 0
        %4291 = vmatpush1.bf16.msra.mxu0 %v4137
        %4292 = vmatprep.subr.bf16.mxu0 0
        %4293 = vmatpush1.bf16.msra.mxu0 %v4138
        %4294 = vmatprep.subr.bf16.mxu0 0
        %4295 = vmatpush1.bf16.msra.mxu0 %v4139
        %4296 = vmatprep.subr.bf16.mxu0 0
        %4297 = vmatpush1.bf16.msra.mxu0 %v4140
        %4298 = vmatprep.subr.bf16.mxu0 0
        %4299 = vmatpush1.bf16.msra.mxu0 %v4141
        %4300 = vmatprep.subr.bf16.mxu0 0
        %4301 = vmatpush1.bf16.msra.mxu0 %v4142
        %4302 = vmatprep.subr.bf16.mxu0 0
        %4303 = vmatpush1.bf16.msra.mxu0 %v4143
        %4304 = vmatprep.mubr.bf16.mxu0 %v3665
        %4305 = vmatmul.mubr.bf16.gmra.mrb[0].mxu0 %v3664
        %v4306 = vpop.f32.mrb[0].mxu0
        %v4307 = vadd.f32 %v3839, %v4306
        %v4308 = vpop.f32.mrb[0].mxu0
        %v4309 = vpop.f32.mrb[0].mxu0
        %v4310 = vadd.f32 %v3839, %v4309
        %v4311 = vpop.f32.mrb[0].mxu0
        %4312 = vmatprep.mubr.bf16.mxu0 %v3671
        %4313 = vmatmul.mubr.bf16.gmra.mrb[0].mxu0 %v3670
        %v4314 = vpop.f32.mrb[0].mxu0
        %v4315 = vadd.f32 %v3839, %v4314
        %v4316 = vpop.f32.mrb[0].mxu0
        %v4317 = vpop.f32.mrb[0].mxu0
        %v4318 = vadd.f32 %v3839, %v4317
        %v4319 = vpop.f32.mrb[0].mxu0
        %4320 = vmatprep.mubr.bf16.mxu0 %v3677
        %4321 = vmatmul.mubr.bf16.gmra.mrb[0].mxu0 %v3676
        %v4322 = vpop.f32.mrb[0].mxu0
        %v4323 = vadd.f32 %v3839, %v4322
        %v4324 = vpop.f32.mrb[0].mxu0
        %v4325 = vpop.f32.mrb[0].mxu0
        %v4326 = vadd.f32 %v3839, %v4325
        %v4327 = vpop.f32.mrb[0].mxu0
        %4328 = vmatprep.mubr.bf16.mxu0 %v3683
        %4329 = vmatmul.mubr.bf16.gmra.mrb[0].mxu0 %v3682
        %v4330 = vpop.f32.mrb[0].mxu0
        %v4331 = vadd.f32 %v3839, %v4330
        %v4332 = vpop.f32.mrb[0].mxu0
        %v4333 = vpop.f32.mrb[0].mxu0
        %v4334 = vadd.f32 %v3839, %v4333
        %v4335 = vpop.f32.mrb[0].mxu0
        %4336 = vdwg.mxu0
        %4337 = vmatprep.subr.bf16.mxu0 0
        %4338 = vmatpush1.bf16.msra.mxu0 %v4144
        %4339 = vmatprep.subr.bf16.mxu0 0
        %4340 = vmatpush1.bf16.msra.mxu0 %v4145
        %4341 = vmatprep.subr.bf16.mxu0 0
        %4342 = vmatpush1.bf16.msra.mxu0 %v4146
        %4343 = vmatprep.subr.bf16.mxu0 0
        %4344 = vmatpush1.bf16.msra.mxu0 %v4147
        %4345 = vmatprep.subr.bf16.mxu0 0
        %4346 = vmatpush1.bf16.msra.mxu0 %v4148
        %4347 = vmatprep.subr.bf16.mxu0 0
        %4348 = vmatpush1.bf16.msra.mxu0 %v4149
        %4349 = vmatprep.subr.bf16.mxu0 0
        %4350 = vmatpush1.bf16.msra.mxu0 %v4150
        %4351 = vmatprep.subr.bf16.mxu0 0
        %4352 = vmatpush1.bf16.msra.mxu0 %v4151
        %4353 = vmatprep.subr.bf16.mxu0 0
        %4354 = vmatpush1.bf16.msra.mxu0 %v4152
        %4355 = vmatprep.subr.bf16.mxu0 0
        %4356 = vmatpush1.bf16.msra.mxu0 %v4153
        %4357 = vmatprep.subr.bf16.mxu0 0
        %4358 = vmatpush1.bf16.msra.mxu0 %v4154
        %4359 = vmatprep.subr.bf16.mxu0 0
        %4360 = vmatpush1.bf16.msra.mxu0 %v4155
        %4361 = vmatprep.subr.bf16.mxu0 0
        %4362 = vmatpush1.bf16.msra.mxu0 %v4156
        %4363 = vmatprep.subr.bf16.mxu0 0
        %4364 = vmatpush1.bf16.msra.mxu0 %v4157
        %4365 = vmatprep.subr.bf16.mxu0 0
        %4366 = vmatpush1.bf16.msra.mxu0 %v4158
        %4367 = vmatprep.subr.bf16.mxu0 0
        %4368 = vmatpush1.bf16.msra.mxu0 %v4159
        %4369 = vmatprep.mubr.bf16.mxu0 %v3667
        %4370 = vmatmul.mubr.bf16.gmra.mrb[0].mxu0 %v3666
        %v4371 = vpop.f32.mrb[0].mxu0
        %v4372 = vadd.f32 %v4307, %v4371
        %v4373 = vpop.f32.mrb[0].mxu0
        %v4374 = vpop.f32.mrb[0].mxu0
        %v4375 = vadd.f32 %v4310, %v4374
        %v4376 = vpop.f32.mrb[0].mxu0
        %4377 = vmatprep.mubr.bf16.mxu0 %v3673
        %4378 = vmatmul.mubr.bf16.gmra.mrb[0].mxu0 %v3672
        %v4379 = vpop.f32.mrb[0].mxu0
        %v4380 = vadd.f32 %v4315, %v4379
        %v4381 = vpop.f32.mrb[0].mxu0
        %v4382 = vpop.f32.mrb[0].mxu0
        %v4383 = vadd.f32 %v4318, %v4382
        %v4384 = vpop.f32.mrb[0].mxu0
        %4385 = vmatprep.mubr.bf16.mxu0 %v3679
        %4386 = vmatmul.mubr.bf16.gmra.mrb[0].mxu0 %v3678
        %v4387 = vpop.f32.mrb[0].mxu0
        %v4388 = vadd.f32 %v4323, %v4387
        %v4389 = vpop.f32.mrb[0].mxu0
        %v4390 = vpop.f32.mrb[0].mxu0
        %v4391 = vadd.f32 %v4326, %v4390
        %v4392 = vpop.f32.mrb[0].mxu0
        %4393 = vmatprep.mubr.bf16.mxu0 %v3685
        %4394 = vmatmul.mubr.bf16.gmra.mrb[0].mxu0 %v3684
        %v4395 = vpop.f32.mrb[0].mxu0
        %v4396 = vadd.f32 %v4331, %v4395
        %v4397 = vpop.f32.mrb[0].mxu0
        %v4398 = vpop.f32.mrb[0].mxu0
        %v4399 = vadd.f32 %v4334, %v4398
        %v4400 = vpop.f32.mrb[0].mxu0
        %4401 = vdwg.mxu0
        %4402 = vmatprep.subr.bf16.mxu0 0
        %4403 = vmatpush1.bf16.msra.mxu0 %v4160
        %4404 = vmatprep.subr.bf16.mxu0 0
        %4405 = vmatpush1.bf16.msra.mxu0 %v4161
        %4406 = vmatprep.subr.bf16.mxu0 0
        %4407 = vmatpush1.bf16.msra.mxu0 %v4162
        %4408 = vmatprep.subr.bf16.mxu0 0
        %4409 = vmatpush1.bf16.msra.mxu0 %v4163
        %4410 = vmatprep.subr.bf16.mxu0 0
        %4411 = vmatpush1.bf16.msra.mxu0 %v4164
        %4412 = vmatprep.subr.bf16.mxu0 0
        %4413 = vmatpush1.bf16.msra.mxu0 %v4165
        %4414 = vmatprep.subr.bf16.mxu0 0
        %4415 = vmatpush1.bf16.msra.mxu0 %v4166
        %4416 = vmatprep.subr.bf16.mxu0 0
        %4417 = vmatpush1.bf16.msra.mxu0 %v4167
        %4418 = vmatprep.subr.bf16.mxu0 0
        %4419 = vmatpush1.bf16.msra.mxu0 %v4168
        %4420 = vmatprep.subr.bf16.mxu0 0
        %4421 = vmatpush1.bf16.msra.mxu0 %v4169
        %4422 = vmatprep.subr.bf16.mxu0 0
        %4423 = vmatpush1.bf16.msra.mxu0 %v4170
        %4424 = vmatprep.subr.bf16.mxu0 0
        %4425 = vmatpush1.bf16.msra.mxu0 %v4171
        %4426 = vmatprep.subr.bf16.mxu0 0
        %4427 = vmatpush1.bf16.msra.mxu0 %v4172
        %4428 = vmatprep.subr.bf16.mxu0 0
        %4429 = vmatpush1.bf16.msra.mxu0 %v4173
        %4430 = vmatprep.subr.bf16.mxu0 0
        %4431 = vmatpush1.bf16.msra.mxu0 %v4174
        %4432 = vmatprep.subr.bf16.mxu0 0
        %4433 = vmatpush1.bf16.msra.mxu0 %v4175
        %4434 = vmatprep.mubr.bf16.mxu0 %v3669
        %4435 = vmatmul.mubr.bf16.gmra.mrb[0].mxu0 %v3668
        %v4436 = vpop.f32.mrb[0].mxu0
        %v4437 = vadd.f32 %v4372, %v4436
        %v4438 = vpop.f32.mrb[0].mxu0
        %v4439 = vpop.f32.mrb[0].mxu0
        %v4440 = vadd.f32 %v4375, %v4439
        %v4441 = vpop.f32.mrb[0].mxu0
        %4442 = vmatprep.mubr.bf16.mxu0 %v3675
        %4443 = vmatmul.mubr.bf16.gmra.mrb[0].mxu0 %v3674
        %v4444 = vpop.f32.mrb[0].mxu0
        %v4445 = vadd.f32 %v4380, %v4444
        %v4446 = vpop.f32.mrb[0].mxu0
        %v4447 = vpop.f32.mrb[0].mxu0
        %v4448 = vadd.f32 %v4383, %v4447
        %v4449 = vpop.f32.mrb[0].mxu0
        %4450 = vmatprep.mubr.bf16.mxu0 %v3681
        %4451 = vmatmul.mubr.bf16.gmra.mrb[0].mxu0 %v3680
        %v4452 = vpop.f32.mrb[0].mxu0
        %v4453 = vadd.f32 %v4388, %v4452
        %v4454 = vpop.f32.mrb[0].mxu0
        %v4455 = vpop.f32.mrb[0].mxu0
        %v4456 = vadd.f32 %v4391, %v4455
        %v4457 = vpop.f32.mrb[0].mxu0
        %4458 = vmatprep.mubr.bf16.mxu0 %v3687
        %4459 = vmatmul.mubr.bf16.gmra.mrb[0].mxu0 %v3686
        %v4460 = vpop.f32.mrb[0].mxu0
        %v4461 = vadd.f32 %v4396, %v4460
        %v4462 = vpop.f32.mrb[0].mxu0
        %v4463 = vpop.f32.mrb[0].mxu0
        %v4464 = vadd.f32 %v4399, %v4463
        %v4465 = vpop.f32.mrb[0].mxu0
        %4466 = vdwg.mxu0
        %4467 = vmatprep.subr.bf16.mxu0 0
        %4468 = vmatpush1.bf16.msra.mxu0 %v4176
        %4469 = vmatprep.subr.bf16.mxu0 0
        %4470 = vmatpush1.bf16.msra.mxu0 %v4177
        %4471 = vmatprep.subr.bf16.mxu0 0
        %4472 = vmatpush1.bf16.msra.mxu0 %v4178
        %4473 = vmatprep.subr.bf16.mxu0 0
        %4474 = vmatpush1.bf16.msra.mxu0 %v4179
        %4475 = vmatprep.subr.bf16.mxu0 0
        %4476 = vmatpush1.bf16.msra.mxu0 %v4180
        %4477 = vmatprep.subr.bf16.mxu0 0
        %4478 = vmatpush1.bf16.msra.mxu0 %v4181
        %4479 = vmatprep.subr.bf16.mxu0 0
        %4480 = vmatpush1.bf16.msra.mxu0 %v4182
        %4481 = vmatprep.subr.bf16.mxu0 0
        %4482 = vmatpush1.bf16.msra.mxu0 %v4183
        %4483 = vmatprep.subr.bf16.mxu0 0
        %4484 = vmatpush1.bf16.msra.mxu0 %v4184
        %4485 = vmatprep.subr.bf16.mxu0 0
        %4486 = vmatpush1.bf16.msra.mxu0 %v4185
        %4487 = vmatprep.subr.bf16.mxu0 0
        %4488 = vmatpush1.bf16.msra.mxu0 %v4186
        %4489 = vmatprep.subr.bf16.mxu0 0
        %4490 = vmatpush1.bf16.msra.mxu0 %v4187
        %4491 = vmatprep.subr.bf16.mxu0 0
        %4492 = vmatpush1.bf16.msra.mxu0 %v4188
        %4493 = vmatprep.subr.bf16.mxu0 0
        %4494 = vmatpush1.bf16.msra.mxu0 %v4189
        %4495 = vmatprep.subr.bf16.mxu0 0
        %4496 = vmatpush1.bf16.msra.mxu0 %v4190
        %4497 = vmatprep.subr.bf16.mxu0 0
        %4498 = vmatpush1.bf16.msra.mxu0 %v4191
        %4499 = vmatprep.mubr.bf16.mxu0 %v3671
        %4500 = vmatmul.mubr.bf16.gmra.mrb[0].mxu0 %v3670
        %v4501 = vpop.f32.mrb[0].mxu0
        %v4502 = vadd.f32 %v4437, %v4501
        %v4503 = vpop.f32.mrb[0].mxu0
        %v4504 = vpop.f32.mrb[0].mxu0
        %v4505 = vadd.f32 %v4440, %v4504
        %v4506 = vpop.f32.mrb[0].mxu0
        %4507 = vmatprep.mubr.bf16.mxu0 %v3677
        %4508 = vmatmul.mubr.bf16.gmra.mrb[0].mxu0 %v3676
        %v4509 = vpop.f32.mrb[0].mxu0
        %v4510 = vadd.f32 %v4445, %v4509
        %v4511 = vpop.f32.mrb[0].mxu0
        %v4512 = vpop.f32.mrb[0].mxu0
        %v4513 = vadd.f32 %v4448, %v4512
        %v4514 = vpop.f32.mrb[0].mxu0
        %4515 = vmatprep.mubr.bf16.mxu0 %v3683
        %4516 = vmatmul.mubr.bf16.gmra.mrb[0].mxu0 %v3682
        %v4517 = vpop.f32.mrb[0].mxu0
        %v4518 = vadd.f32 %v4453, %v4517
        %v4519 = vpop.f32.mrb[0].mxu0
        %v4520 = vpop.f32.mrb[0].mxu0
        %v4521 = vadd.f32 %v4456, %v4520
        %v4522 = vpop.f32.mrb[0].mxu0
        %4523 = vmatprep.mubr.bf16.mxu0 %v3689
        %4524 = vmatmul.mubr.bf16.gmra.mrb[0].mxu0 %v3688
        %v4525 = vpop.f32.mrb[0].mxu0
        %v4526 = vadd.f32 %v4461, %v4525
        %v4527 = vpop.f32.mrb[0].mxu0
        %v4528 = vpop.f32.mrb[0].mxu0
        %v4529 = vadd.f32 %v4464, %v4528
        %v4530 = vpop.f32.mrb[0].mxu0
        %4531 = vdwg.mxu0
        %4532 = vmatprep.subr.bf16.mxu0 0
        %4533 = vmatpush1.bf16.msra.mxu0 %v4192
        %4534 = vmatprep.subr.bf16.mxu0 0
        %4535 = vmatpush1.bf16.msra.mxu0 %v4193
        %4536 = vmatprep.subr.bf16.mxu0 0
        %4537 = vmatpush1.bf16.msra.mxu0 %v4194
        %4538 = vmatprep.subr.bf16.mxu0 0
        %4539 = vmatpush1.bf16.msra.mxu0 %v4195
        %4540 = vmatprep.subr.bf16.mxu0 0
        %4541 = vmatpush1.bf16.msra.mxu0 %v4196
        %4542 = vmatprep.subr.bf16.mxu0 0
        %4543 = vmatpush1.bf16.msra.mxu0 %v4197
        %4544 = vmatprep.subr.bf16.mxu0 0
        %4545 = vmatpush1.bf16.msra.mxu0 %v4198
        %4546 = vmatprep.subr.bf16.mxu0 0
        %4547 = vmatpush1.bf16.msra.mxu0 %v4199
        %4548 = vmatprep.subr.bf16.mxu0 0
        %4549 = vmatpush1.bf16.msra.mxu0 0
        %4550 = vmatprep.subr.bf16.mxu0 0
        %4551 = vmatpush1.bf16.msra.mxu0 0
        %4552 = vmatprep.subr.bf16.mxu0 0
        %4553 = vmatpush1.bf16.msra.mxu0 0
        %4554 = vmatprep.subr.bf16.mxu0 0
        %4555 = vmatpush1.bf16.msra.mxu0 0
        %4556 = vmatprep.subr.bf16.mxu0 0
        %4557 = vmatpush1.bf16.msra.mxu0 0
        %4558 = vmatprep.subr.bf16.mxu0 0
        %4559 = vmatpush1.bf16.msra.mxu0 0
        %4560 = vmatprep.subr.bf16.mxu0 0
        %4561 = vmatpush1.bf16.msra.mxu0 0
        %4562 = vmatprep.subr.bf16.mxu0 0
        %4563 = vmatpush1.bf16.msra.mxu0 0
        %4564 = vmatprep.mubr.bf16.mxu0 0
        %4565 = vmatmul.mubr.bf16.gmra.mrb[0].mxu0 %v3672
        %v4566 = vpop.f32.mrb[0].mxu0
        %v4567 = vadd.f32 %v4502, %v4566
        %v4568 = vpop.f32.mrb[0].mxu0
        %v4569 = vpop.f32.mrb[0].mxu0
        %v4570 = vadd.f32 %v4505, %v4569
        %v4571 = vpop.f32.mrb[0].mxu0
        %4572 = vmatprep.mubr.bf16.mxu0 0
        %4573 = vmatmul.mubr.bf16.gmra.mrb[0].mxu0 %v3678
        %v4574 = vpop.f32.mrb[0].mxu0
        %v4575 = vadd.f32 %v4510, %v4574
        %v4576 = vpop.f32.mrb[0].mxu0
        %v4577 = vpop.f32.mrb[0].mxu0
        %v4578 = vadd.f32 %v4513, %v4577
        %v4579 = vpop.f32.mrb[0].mxu0
        %4580 = vmatprep.mubr.bf16.mxu0 0
        %4581 = vmatmul.mubr.bf16.gmra.mrb[0].mxu0 %v3684
        %v4582 = vpop.f32.mrb[0].mxu0
        %v4583 = vadd.f32 %v4518, %v4582
        %v4584 = vpop.f32.mrb[0].mxu0
        %v4585 = vpop.f32.mrb[0].mxu0
        %v4586 = vadd.f32 %v4521, %v4585
        %v4587 = vpop.f32.mrb[0].mxu0
        %4588 = vmatprep.mubr.bf16.mxu0 0
        %4589 = vmatmul.mubr.bf16.gmra.mrb[0].mxu0 %v3690
        %v4590 = vpop.f32.mrb[0].mxu0
        %v4591 = vadd.f32 %v4526, %v4590
        %v4592 = vpop.f32.mrb[0].mxu0
        %v4593 = vpop.f32.mrb[0].mxu0
        %v4594 = vadd.f32 %v4529, %v4593
        %v4595 = vpop.f32.mrb[0].mxu0
        %4596 = vdwg.mxu0
        %v4597 = vadd.f32 %v4567, %v2467
        %v4598 = vadd.f32 %v4570, %v2468
        %v4599 = vadd.f32 %v4575, %v2469
        %v4600 = vadd.f32 %v4578, %v2470
        %v4601 = vadd.f32 %v4583, %v2471
        %v4602 = vadd.f32 %v4586, %v2472
        %v4603 = vadd.f32 %v4591, %v2473
        %v4604 = vadd.f32 %v4594, %v2474
        %v4605 = vld [vmem:[%s4] sm:$0xff]
        %v4606 = vld [vmem:[%s4 + $0x8] sm:$0xff]
        %v4607 = vld [vmem:[%s4 + $0x10] sm:$0xff]
        %v4608 = vld [vmem:[%s4 + $0x18] sm:$0xff]
        %v4609 = vld [vmem:[%s4 + $0x20] sm:$0xff]
        %v4610 = vld [vmem:[%s4 + $0x28] sm:$0xff]
        %v4611 = vld [vmem:[%s4 + $0x30] sm:$0xff]
        %v4612 = vld [vmem:[%s4 + $0x38] sm:$0xff]
        %v4613 = vld [vmem:[%s4 + $0x40] sm:$0xff]
        %v4614 = vld [vmem:[%s4 + $0x48] sm:$0xff]
        %v4615 = vld [vmem:[%s4 + $0x50] sm:$0xff]
        %v4616 = vld [vmem:[%s4 + $0x58] sm:$0xff]
        %v4617 = vld [vmem:[%s4 + $0x60] sm:$0xff]
        %v4618 = vld [vmem:[%s4 + $0x68] sm:$0xff]
        %v4619 = vld [vmem:[%s4 + $0x70] sm:$0xff]
        %v4620 = vld [vmem:[%s4 + $0x78] sm:$0xff]
        %v4621 = vld [vmem:[%s4 + $0x80] sm:$0xff]
        %v4622 = vld [vmem:[%s4 + $0x88] sm:$0xff]
        %v4623 = vld [vmem:[%s4 + $0x90] sm:$0xff]
        %v4624 = vld [vmem:[%s4 + $0x98] sm:$0xff]
        %v4625 = vld [vmem:[%s4 + $0xa0] sm:$0xff]
        %v4626 = vld [vmem:[%s4 + $0xa8] sm:$0xff]
        %v4627 = vld [vmem:[%s4 + $0xb0] sm:$0xff]
        %v4628 = vld [vmem:[%s4 + $0xb8] sm:$0xff]
        %v4629 = vld [vmem:[%s4 + $0xc0] sm:$0xff]
        %v4630 = vld [vmem:[%s4 + $0xc8] sm:$0xff]
        %v4631 = vld [vmem:[%s4 + $0xd0] sm:$0xff]
        %v4632 = vld [vmem:[%s4 + $0xd8] sm:$0xff]
        %v4633 = vld [vmem:[%s4 + $0xe0] sm:$0xff]
        %v4634 = vld [vmem:[%s4 + $0xe8] sm:$0xff]
        %v4635 = vld [vmem:[%s4 + $0xf0] sm:$0xff]
        %v4636 = vld [vmem:[%s4 + $0xf8] sm:$0xff]
        %vm4637 = vcmask 523264
        %v4639 = vsel %vm4637, %v4605, 0
        %v4642 = vsel %vm4637, %v4606, 0
        %v4645 = vsel %vm4637, %v4607, 0
        %v4648 = vsel %vm4637, %v4608, 0
        %v4651 = vsel %vm4637, %v4609, 0
        %v4654 = vsel %vm4637, %v4610, 0
        %v4657 = vsel %vm4637, %v4611, 0
        %v4660 = vsel %vm4637, %v4612, 0
        %v4663 = vsel %vm4637, %v4613, 0
        %v4666 = vsel %vm4637, %v4614, 0
        %v4669 = vsel %vm4637, %v4615, 0
        %v4672 = vsel %vm4637, %v4616, 0
        %v4675 = vsel %vm4637, %v4617, 0
        %v4678 = vsel %vm4637, %v4618, 0
        %v4681 = vsel %vm4637, %v4619, 0
        %v4684 = vsel %vm4637, %v4620, 0
        %v4687 = vsel %vm4637, %v4621, 0
        %v4690 = vsel %vm4637, %v4622, 0
        %v4693 = vsel %vm4637, %v4623, 0
        %v4696 = vsel %vm4637, %v4624, 0
        %v4699 = vsel %vm4637, %v4625, 0
        %v4702 = vsel %vm4637, %v4626, 0
        %v4705 = vsel %vm4637, %v4627, 0
        %v4708 = vsel %vm4637, %v4628, 0
        %v4711 = vsel %vm4637, %v4629, 0
        %v4714 = vsel %vm4637, %v4630, 0
        %v4717 = vsel %vm4637, %v4631, 0
        %v4720 = vsel %vm4637, %v4632, 0
        %v4723 = vsel %vm4637, %v4633, 0
        %v4726 = vsel %vm4637, %v4634, 0
        %v4729 = vsel %vm4637, %v4635, 0
        %v4732 = vsel %vm4637, %v4636, 0
        %4734 = vmatprep.subr.mxu0 0.0
        %4735 = vmatpush1.msra.mxu0 %v4597
        %4736 = vmatprep.subr.mxu0 0.0
        %4737 = vmatpush1.msra.mxu0 %v4598
        %4738 = vmatprep.subr.mxu0 0.0
        %4739 = vmatpush1.msra.mxu0 %v4599
        %4740 = vmatprep.subr.mxu0 0.0
        %4741 = vmatpush1.msra.mxu0 %v4600
        %4742 = vmatprep.subr.mxu0 0.0
        %4743 = vmatpush1.msra.mxu0 %v4601
        %4744 = vmatprep.subr.mxu0 0.0
        %4745 = vmatpush1.msra.mxu0 %v4602
        %4746 = vmatprep.subr.mxu0 0.0
        %4747 = vmatpush1.msra.mxu0 %v4603
        %4748 = vmatprep.subr.mxu0 0.0
        %4749 = vmatpush1.msra.mxu0 %v4604
        %4750 = vmatprep.subr.mxu0 0.0
        %4751 = vmatpush1.msra.mxu0 0.0
        %4752 = vmatprep.subr.mxu0 0.0
        %4753 = vmatpush1.msra.mxu0 0.0
        %4754 = vmatprep.subr.mxu0 0.0
        %4755 = vmatpush1.msra.mxu0 0.0
        %4756 = vmatprep.subr.mxu0 0.0
        %4757 = vmatpush1.msra.mxu0 0.0
        %4758 = vmatprep.subr.mxu0 0.0
        %4759 = vmatpush1.msra.mxu0 0.0
        %4760 = vmatprep.subr.mxu0 0.0
        %4761 = vmatpush1.msra.mxu0 0.0
        %4762 = vmatprep.subr.mxu0 0.0
        %4763 = vmatpush1.msra.mxu0 0.0
        %4764 = vmatprep.subr.mxu0 0.0
        %4765 = vmatpush1.msra.mxu0 0.0
        %4766 = vmatprep.subr.mxu0 0.0
        %4767 = vmatpush1.msra.mxu0 0.0
        %4768 = vmatprep.subr.mxu0 0.0
        %4769 = vmatpush1.msra.mxu0 0.0
        %4770 = vmatprep.subr.mxu0 0.0
        %4771 = vmatpush1.msra.mxu0 0.0
        %4772 = vmatprep.subr.mxu0 0.0
        %4773 = vmatpush1.msra.mxu0 0.0
        %4774 = vmatprep.subr.mxu0 0.0
        %4775 = vmatpush1.msra.mxu0 0.0
        %4776 = vmatprep.subr.mxu0 0.0
        %4777 = vmatpush1.msra.mxu0 0.0
        %4778 = vmatprep.subr.mxu0 0.0
        %4779 = vmatpush1.msra.mxu0 0.0
        %4780 = vmatprep.subr.mxu0 0.0
        %4781 = vmatpush1.msra.mxu0 0.0
        %4782 = vmatprep.subr.mxu0 0.0
        %4783 = vmatpush1.msra.mxu0 0.0
        %4784 = vmatprep.subr.mxu0 0.0
        %4785 = vmatpush1.msra.mxu0 0.0
        %4786 = vmatprep.subr.mxu0 0.0
        %4787 = vmatpush1.msra.mxu0 0.0
        %4788 = vmatprep.subr.mxu0 0.0
        %4789 = vmatpush1.msra.mxu0 0.0
        %4790 = vmatprep.subr.mxu0 0.0
        %4791 = vmatpush1.msra.mxu0 0.0
        %4792 = vmatprep.subr.mxu0 0.0
        %4793 = vmatpush1.msra.mxu0 0.0
        %4794 = vmatprep.subr.mxu0 0.0
        %4795 = vmatpush1.msra.mxu0 0.0
        %4796 = vmatprep.subr.mxu0 0.0
        %4797 = vmatpush1.msra.mxu0 0.0
        %4798 = vmatprep.mubr.f32.mxu0 0.0
        %4799 = vmatmul.mubr.f32.gmra.mrb[0].mxu0 %v4639
        %v4800 = vpop.f32.mrb[0].mxu0
        %v4801 = vadd.f32 0.0, %v4800
        %v4802 = vpop.f32.mrb[0].mxu0
        %4803 = vmatprep.mubr.f32.mxu0 0.0
        %4804 = vmatmul.mubr.f32.gmra.mrb[0].mxu0 %v4642
        %v4805 = vpop.f32.mrb[0].mxu0
        %v4806 = vadd.f32 0.0, %v4805
        %v4807 = vpop.f32.mrb[0].mxu0
        %4808 = vmatprep.mubr.f32.mxu0 0.0
        %4809 = vmatmul.mubr.f32.gmra.mrb[0].mxu0 %v4645
        %v4810 = vpop.f32.mrb[0].mxu0
        %v4811 = vadd.f32 0.0, %v4810
        %v4812 = vpop.f32.mrb[0].mxu0
        %4813 = vmatprep.mubr.f32.mxu0 0.0
        %4814 = vmatmul.mubr.f32.gmra.mrb[0].mxu0 %v4648
        %v4815 = vpop.f32.mrb[0].mxu0
        %v4816 = vadd.f32 0.0, %v4815
        %v4817 = vpop.f32.mrb[0].mxu0
        %4818 = vmatprep.mubr.f32.mxu0 0.0
        %4819 = vmatmul.mubr.f32.gmra.mrb[0].mxu0 %v4651
        %v4820 = vpop.f32.mrb[0].mxu0
        %v4821 = vadd.f32 0.0, %v4820
        %v4822 = vpop.f32.mrb[0].mxu0
        %4823 = vmatprep.mubr.f32.mxu0 0.0
        %4824 = vmatmul.mubr.f32.gmra.mrb[0].mxu0 %v4654
        %v4825 = vpop.f32.mrb[0].mxu0
        %v4826 = vadd.f32 0.0, %v4825
        %v4827 = vpop.f32.mrb[0].mxu0
        %4828 = vmatprep.mubr.f32.mxu0 0.0
        %4829 = vmatmul.mubr.f32.gmra.mrb[0].mxu0 %v4657
        %v4830 = vpop.f32.mrb[0].mxu0
        %v4831 = vadd.f32 0.0, %v4830
        %v4832 = vpop.f32.mrb[0].mxu0
        %4833 = vmatprep.mubr.f32.mxu0 0.0
        %4834 = vmatmul.mubr.f32.gmra.mrb[0].mxu0 %v4660
        %v4835 = vpop.f32.mrb[0].mxu0
        %v4836 = vadd.f32 0.0, %v4835
        %v4837 = vpop.f32.mrb[0].mxu0
        %4838 = vmatprep.mubr.f32.mxu0 0.0
        %4839 = vmatmul.mubr.f32.gmra.mrb[0].mxu0 %v4663
        %v4840 = vpop.f32.mrb[0].mxu0
        %v4841 = vadd.f32 0.0, %v4840
        %v4842 = vpop.f32.mrb[0].mxu0
        %4843 = vmatprep.mubr.f32.mxu0 0.0
        %4844 = vmatmul.mubr.f32.gmra.mrb[0].mxu0 %v4666
        %v4845 = vpop.f32.mrb[0].mxu0
        %v4846 = vadd.f32 0.0, %v4845
        %v4847 = vpop.f32.mrb[0].mxu0
        %4848 = vmatprep.mubr.f32.mxu0 0.0
        %4849 = vmatmul.mubr.f32.gmra.mrb[0].mxu0 %v4669
        %v4850 = vpop.f32.mrb[0].mxu0
        %v4851 = vadd.f32 0.0, %v4850
        %v4852 = vpop.f32.mrb[0].mxu0
        %4853 = vmatprep.mubr.f32.mxu0 0.0
        %4854 = vmatmul.mubr.f32.gmra.mrb[0].mxu0 %v4672
        %v4855 = vpop.f32.mrb[0].mxu0
        %v4856 = vadd.f32 0.0, %v4855
        %v4857 = vpop.f32.mrb[0].mxu0
        %4858 = vmatprep.mubr.f32.mxu0 0.0
        %4859 = vmatmul.mubr.f32.gmra.mrb[0].mxu0 %v4675
        %v4860 = vpop.f32.mrb[0].mxu0
        %v4861 = vadd.f32 0.0, %v4860
        %v4862 = vpop.f32.mrb[0].mxu0
        %4863 = vmatprep.mubr.f32.mxu0 0.0
        %4864 = vmatmul.mubr.f32.gmra.mrb[0].mxu0 %v4678
        %v4865 = vpop.f32.mrb[0].mxu0
        %v4866 = vadd.f32 0.0, %v4865
        %v4867 = vpop.f32.mrb[0].mxu0
        %4868 = vmatprep.mubr.f32.mxu0 0.0
        %4869 = vmatmul.mubr.f32.gmra.mrb[0].mxu0 %v4681
        %v4870 = vpop.f32.mrb[0].mxu0
        %v4871 = vadd.f32 0.0, %v4870
        %v4872 = vpop.f32.mrb[0].mxu0
        %4873 = vmatprep.mubr.f32.mxu0 0.0
        %4874 = vmatmul.mubr.f32.gmra.mrb[0].mxu0 %v4684
        %v4875 = vpop.f32.mrb[0].mxu0
        %v4876 = vadd.f32 0.0, %v4875
        %v4877 = vpop.f32.mrb[0].mxu0
        %4878 = vmatprep.mubr.f32.mxu0 0.0
        %4879 = vmatmul.mubr.f32.gmra.mrb[0].mxu0 %v4687
        %v4880 = vpop.f32.mrb[0].mxu0
        %v4881 = vadd.f32 0.0, %v4880
        %v4882 = vpop.f32.mrb[0].mxu0
        %4883 = vmatprep.mubr.f32.mxu0 0.0
        %4884 = vmatmul.mubr.f32.gmra.mrb[0].mxu0 %v4690
        %v4885 = vpop.f32.mrb[0].mxu0
        %v4886 = vadd.f32 0.0, %v4885
        %v4887 = vpop.f32.mrb[0].mxu0
        %4888 = vmatprep.mubr.f32.mxu0 0.0
        %4889 = vmatmul.mubr.f32.gmra.mrb[0].mxu0 %v4693
        %v4890 = vpop.f32.mrb[0].mxu0
        %v4891 = vadd.f32 0.0, %v4890
        %v4892 = vpop.f32.mrb[0].mxu0
        %4893 = vmatprep.mubr.f32.mxu0 0.0
        %4894 = vmatmul.mubr.f32.gmra.mrb[0].mxu0 %v4696
        %v4895 = vpop.f32.mrb[0].mxu0
        %v4896 = vadd.f32 0.0, %v4895
        %v4897 = vpop.f32.mrb[0].mxu0
        %4898 = vmatprep.mubr.f32.mxu0 0.0
        %4899 = vmatmul.mubr.f32.gmra.mrb[0].mxu0 %v4699
        %v4900 = vpop.f32.mrb[0].mxu0
        %v4901 = vadd.f32 0.0, %v4900
        %v4902 = vpop.f32.mrb[0].mxu0
        %4903 = vmatprep.mubr.f32.mxu0 0.0
        %4904 = vmatmul.mubr.f32.gmra.mrb[0].mxu0 %v4702
        %v4905 = vpop.f32.mrb[0].mxu0
        %v4906 = vadd.f32 0.0, %v4905
        %v4907 = vpop.f32.mrb[0].mxu0
        %4908 = vmatprep.mubr.f32.mxu0 0.0
        %4909 = vmatmul.mubr.f32.gmra.mrb[0].mxu0 %v4705
        %v4910 = vpop.f32.mrb[0].mxu0
        %v4911 = vadd.f32 0.0, %v4910
        %v4912 = vpop.f32.mrb[0].mxu0
        %4913 = vmatprep.mubr.f32.mxu0 0.0
        %4914 = vmatmul.mubr.f32.gmra.mrb[0].mxu0 %v4708
        %v4915 = vpop.f32.mrb[0].mxu0
        %v4916 = vadd.f32 0.0, %v4915
        %v4917 = vpop.f32.mrb[0].mxu0
        %4918 = vmatprep.mubr.f32.mxu0 0.0
        %4919 = vmatmul.mubr.f32.gmra.mrb[0].mxu0 %v4711
        %v4920 = vpop.f32.mrb[0].mxu0
        %v4921 = vadd.f32 0.0, %v4920
        %v4922 = vpop.f32.mrb[0].mxu0
        %4923 = vmatprep.mubr.f32.mxu0 0.0
        %4924 = vmatmul.mubr.f32.gmra.mrb[0].mxu0 %v4714
        %v4925 = vpop.f32.mrb[0].mxu0
        %v4926 = vadd.f32 0.0, %v4925
        %v4927 = vpop.f32.mrb[0].mxu0
        %4928 = vmatprep.mubr.f32.mxu0 0.0
        %4929 = vmatmul.mubr.f32.gmra.mrb[0].mxu0 %v4717
        %v4930 = vpop.f32.mrb[0].mxu0
        %v4931 = vadd.f32 0.0, %v4930
        %v4932 = vpop.f32.mrb[0].mxu0
        %4933 = vmatprep.mubr.f32.mxu0 0.0
        %4934 = vmatmul.mubr.f32.gmra.mrb[0].mxu0 %v4720
        %v4935 = vpop.f32.mrb[0].mxu0
        %v4936 = vadd.f32 0.0, %v4935
        %v4937 = vpop.f32.mrb[0].mxu0
        %4938 = vmatprep.mubr.f32.mxu0 0.0
        %4939 = vmatmul.mubr.f32.gmra.mrb[0].mxu0 %v4723
        %v4940 = vpop.f32.mrb[0].mxu0
        %v4941 = vadd.f32 0.0, %v4940
        %v4942 = vpop.f32.mrb[0].mxu0
        %4943 = vmatprep.mubr.f32.mxu0 0.0
        %4944 = vmatmul.mubr.f32.gmra.mrb[0].mxu0 %v4726
        %v4945 = vpop.f32.mrb[0].mxu0
        %v4946 = vadd.f32 0.0, %v4945
        %v4947 = vpop.f32.mrb[0].mxu0
        %4948 = vmatprep.mubr.f32.mxu0 0.0
        %4949 = vmatmul.mubr.f32.gmra.mrb[0].mxu0 %v4729
        %v4950 = vpop.f32.mrb[0].mxu0
        %v4951 = vadd.f32 0.0, %v4950
        %v4952 = vpop.f32.mrb[0].mxu0
        %4953 = vmatprep.mubr.f32.mxu0 0.0
        %4954 = vmatmul.mubr.f32.gmra.mrb[0].mxu0 %v4732
        %v4955 = vpop.f32.mrb[0].mxu0
        %v4956 = vadd.f32 0.0, %v4955
        %v4957 = vpop.f32.mrb[0].mxu0
        %4958 = vdwg.mxu0
        %4959 = vst [vmem:[%s309] sm:$0xff] %v4801
        %4960 = vst [vmem:[%s309 + $0x8] sm:$0xff] %v4806
        %4961 = vst [vmem:[%s309 + $0x10] sm:$0xff] %v4811
        %4962 = vst [vmem:[%s309 + $0x18] sm:$0xff] %v4816
        %4963 = vst [vmem:[%s309 + $0x20] sm:$0xff] %v4821
        %4964 = vst [vmem:[%s309 + $0x28] sm:$0xff] %v4826
        %4965 = vst [vmem:[%s309 + $0x30] sm:$0xff] %v4831
        %4966 = vst [vmem:[%s309 + $0x38] sm:$0xff] %v4836
        %4967 = vst [vmem:[%s309 + $0x40] sm:$0xff] %v4841
        %4968 = vst [vmem:[%s309 + $0x48] sm:$0xff] %v4846
        %4969 = vst [vmem:[%s309 + $0x50] sm:$0xff] %v4851
        %4970 = vst [vmem:[%s309 + $0x58] sm:$0xff] %v4856
        %4971 = vst [vmem:[%s309 + $0x60] sm:$0xff] %v4861
        %4972 = vst [vmem:[%s309 + $0x68] sm:$0xff] %v4866
        %4973 = vst [vmem:[%s309 + $0x70] sm:$0xff] %v4871
        %4974 = vst [vmem:[%s309 + $0x78] sm:$0xff] %v4876
        %4975 = vst [vmem:[%s309 + $0x80] sm:$0xff] %v4881
        %4976 = vst [vmem:[%s309 + $0x88] sm:$0xff] %v4886
        %4977 = vst [vmem:[%s309 + $0x90] sm:$0xff] %v4891
        %4978 = vst [vmem:[%s309 + $0x98] sm:$0xff] %v4896
        %4979 = vst [vmem:[%s309 + $0xa0] sm:$0xff] %v4901
        %4980 = vst [vmem:[%s309 + $0xa8] sm:$0xff] %v4906
        %4981 = vst [vmem:[%s309 + $0xb0] sm:$0xff] %v4911
        %4982 = vst [vmem:[%s309 + $0xb8] sm:$0xff] %v4916
        %4983 = vst [vmem:[%s309 + $0xc0] sm:$0xff] %v4921
        %4984 = vst [vmem:[%s309 + $0xc8] sm:$0xff] %v4926
        %4985 = vst [vmem:[%s309 + $0xd0] sm:$0xff] %v4931
        %4986 = vst [vmem:[%s309 + $0xd8] sm:$0xff] %v4936
        %4987 = vst [vmem:[%s309 + $0xe0] sm:$0xff] %v4941
        %4988 = vst [vmem:[%s309 + $0xe8] sm:$0xff] %v4946
        %4989 = vst [vmem:[%s309 + $0xf0] sm:$0xff] %v4951
        %4990 = vst [vmem:[%s309 + $0xf8] sm:$0xff] %v4956
        %s4991 = sand.u32 %s149, 1
        %s4992 = scalar_lea.sflag [#allocation4], %s4991
        %s4993 = sand.u32 %s149, 1
        %s4994 = smul.addr %s4993, 256
        %s4995 = scalar_lea.vmem [#allocation10], %s4994
        // Predicated region
        $region57: #{tpu_custom_call.1} parent=39 // pred_check
          %p4996 = pneg %p159
        $region58: #{tpu_custom_call.1} parent=39 // pred_check_branch
          %4998 = sbr.rel (%p4996) target = $region60
        $region59: #{tpu_custom_call.1} parent=39 // pred_region
          %s5000 = ssub.s32 4096, 4096
          %5001 = vsyncadd %s4992, %s5000
          %s5002 = smul.addr %s26, 32
          %s5003 = smul.addr %s5002, 128
          %s5004 = scalar_lea.hbm %s5, %s5003
          %s5005 = sshll.u32 %s4995, 4
          %s5006 = int_to_ptr.vmem [resolvable:$true] %s5005
          %5011 = dma.vmem_to_hbm [thread:$0]  %s5006, 4096, %s5004, %s4992, 128, 128, 8
        $region60: #{tpu_custom_call.1} parent=39 // pred_fallthru
          _
      $region40: #{tpu_custom_call.1} parent=5 // pred_fallthru
        _
      %p5012 = scmp.le.s32.totalorder 2, %s21
      // Predicated region
      $region61: #{tpu_custom_call.1} parent=5 // pred_check
        %p5013 = pneg %p5012
      $region62: #{tpu_custom_call.1} parent=5 // pred_check_branch
        %5015 = sbr.rel (%p5013) target = $region64
      $region63: #{tpu_custom_call.1} parent=5 // pred_region
        %s5016 = ssub.s32 %s21, 2
        // Predicated region
        $region65: #{tpu_custom_call.1} parent=63 // pred_check
          %p5017 = pneg %p165
        $region66: #{tpu_custom_call.1} parent=63 // pred_check_branch
          %5019 = sbr.rel (%p5017) target = $region68
        $region67: #{tpu_custom_call.1} parent=63 // pred_region
          %s5020 = sand.u32 %s150, 1
          %s5021 = scalar_lea.sflag [#allocation4], %s5020
          %s5022 = sand.u32 %s150, 1
          %s5023 = smul.addr %s5022, 256
          %s5024 = scalar_lea.vmem [#allocation10], %s5023
          %5025 = dma.done %s5021, 4096
        $region68: #{tpu_custom_call.1} parent=63 // pred_fallthru
          _
      $region64: #{tpu_custom_call.1} parent=5 // pred_fallthru
        _
    $region6: #{tpu_custom_call.1} parent=1 // loop_footer
      %s25 = sadd.s32 1, %s21
    $region7: #{tpu_custom_call.1} parent=1 // loop_footer_branch
      %20 = sbr.rel target = $region3
    $region8: #{tpu_custom_call.1} parent=1 // loop_exit
      _
    %5026 = vsyncpa [#allocation3], 1
    %s5027 = scalar_lea.sflag [#allocation3], 1
    %5028 = vsyncpa %s5027, 1
    %5029 = vsyncpa [#allocation6], 1
    %s5030 = scalar_lea.sflag [#allocation6], 1
    %5031 = vsyncpa %s5030, 1
    %5032 = vsyncpa [#allocation9], 1
    %5033 = vsyncpa [#allocation4], 1
    %s5034 = scalar_lea.sflag [#allocation4], 1
    %5035 = vsyncpa %s5034, 1

</llo_original>
